<compile_context>
chip_gen: v6e
topology: v6e:2x2x1
jax: 0.10.0
libtpu: 0.0.40
codegen_flags: <defaults>
</compile_context>

<pallas_src>
import jax
import jax.numpy as jnp
from jax.experimental import pallas as pl
from jax.experimental.pallas import tpu as pltpu

IN_DIM = 128
HID_DIM = 1024
OUT_DIM = 1433           # logical output width (nn.Linear(1024, 1433))
OUT_PAD = 1536           # padded to a multiple of 128 for lane-dense stores/DMA
BN_EPS = 0.99            # nn.BatchNorm1d(n, 0.99) -> eps = 0.99


def _pick_tile():
    # v7x has 2 TensorCores -> 2 even tiles (one per core, 'parallel' axis).
    # v5e / v6e have a single TensorCore -> one grid step (no layer-1
    # recompute, no per-step overhead).
    try:
        kind = jax.devices()[0].device_kind.lower()
    except Exception:
        kind = ""
    return 768 if "v7" in kind else 1536


TN = _pick_tile()
assert OUT_PAD % TN == 0


def _batchnorm_train(x, eps):
    # training-mode BatchNorm1d, affine weight=1 / bias=0 (default init)
    mean = jnp.mean(x, axis=0, keepdims=True)
    var = jnp.mean((x - mean) * (x - mean), axis=0, keepdims=True)  # biased var
    return (x - mean) * jax.lax.rsqrt(var + eps)


def generator_kernel(z_ref, w1_ref, w2_ref, u_ref, out_ref):
    # ---- Layer 1: Linear(128,1024) + BN(eps=0.99) + ReLU --------------------
    # Recomputed per feature tile (~2 MFLOPs) so grid steps are independent and
    # the axis can be sharded across TensorCores on v7x.  The Linear bias is
    # omitted: it cancels exactly through training-mode BN (default affine).
    z = z_ref[...].astype(jnp.bfloat16)                                 # (B,128)
    h = jnp.dot(z, w1_ref[...], preferred_element_type=jnp.float32)     # bf16 MXU
    h = _batchnorm_train(h, BN_EPS)
    h = jnp.maximum(h, 0.0)

    # ---- Layer 2 (this feature tile): Linear + BN + Sigmoid -----------------
    # BN2 stats are per-feature over the batch, so feature tiling is exact.
    # Bias omitted (same BN cancellation).
    y = jnp.dot(h.astype(jnp.bfloat16), w2_ref[...],
                preferred_element_type=jnp.float32)                      # (B,TN)
    y = _batchnorm_train(y, BN_EPS)
    p = jax.nn.sigmoid(y)

    # ---- Bernoulli_sample: ceil(p - u) == 1 if p > u else 0 (no -0.0) -------
    out_ref[...] = jnp.where(p > u_ref[...], 1.0, 0.0).astype(out_ref.dtype)


@jax.jit
def generator_forward(z, w1, w2p, key):
    B = z.shape[0]

    # Uniform [0,1) draws for the Bernoulli sampler (per padded output elem).
    u = jax.random.uniform(key, (B, OUT_PAD), jnp.float32)

    out = pl.pallas_call(
        generator_kernel,
        out_shape=jax.ShapeDtypeStruct((B, OUT_PAD), jnp.float32),
        grid=(OUT_PAD // TN,),
        in_specs=[
            pl.BlockSpec((B, IN_DIM), lambda j: (0, 0)),       # z   (resident)
            pl.BlockSpec((IN_DIM, HID_DIM), lambda j: (0, 0)),  # w1  (resident, bf16)
            pl.BlockSpec((HID_DIM, TN), lambda j: (0, j)),      # w2 tile (streamed, bf16)
            pl.BlockSpec((B, TN), lambda j: (0, j)),            # u tile
        ],
        out_specs=pl.BlockSpec((B, TN), lambda j: (0, j)),
        compiler_params=pltpu.CompilerParams(
            dimension_semantics=("parallel",),   # v7x: tiles split across 2 TCs
            vmem_limit_bytes=32 << 20,           # working set < 7 MB everywhere
        ),
    )(z, w1, w2p, u)

    return out[:, :OUT_DIM]


def init_params(key):
    k1, k2 = jax.random.split(key, 2)
    # nn.init.trunc_normal_(weight, std=0.02); stored bf16 (HBM traffic on w2
    # dominates runtime at this batch size).
    w1 = (0.02 * jax.random.truncated_normal(
        k1, -2.0, 2.0, (IN_DIM, HID_DIM), jnp.float32)).astype(jnp.bfloat16)
    w2 = (0.02 * jax.random.truncated_normal(
        k2, -2.0, 2.0, (HID_DIM, OUT_DIM), jnp.float32)).astype(jnp.bfloat16)
    # Pre-pad ONCE at init (padded cols are zeros -> sliced off after the
    # kernel), so the hot forward path never re-pads / re-copies w2 in HBM.
    w2p = jnp.pad(w2, ((0, 0), (0, OUT_PAD - OUT_DIM)))
    # Linear biases intentionally not created: they cancel exactly through
    # training-mode BatchNorm with default affine (see kernel comments).
    return w1, w2p


# TODO(synk): for large batches (B > ~256), add a batch tile and switch BN to
# a two-pass sum/sumsq accumulation so (B, 1536) f32 activations need not stay
# resident; optionally quantize w2 to int8/fp8 with per-feature scales.


if __name__ == "__main__":
    key = jax.random.PRNGKey(0)
    kz, kp, ku = jax.random.split(key, 3)

    B = 8
    z = jax.random.normal(kz, (B, IN_DIM), jnp.float32)
    w1, w2p = init_params(kp)

    out = generator_forward(z, w1, w2p, ku)
    out = jax.block_until_ready(out)

    assert out.shape == (B, OUT_DIM)
    assert out.dtype == jnp.float32
    # Bernoulli output must be exactly 0 or 1
    assert bool(jnp.all((out == 0.0) | (out == 1.0)))
    print("KERNEL_OK")
</pallas_src>

<mosaic_0001>
module attributes {stable_mosaic.version = 11 : i64} {
  func.func @generator_kernel(%arg0: i32, %arg1: memref<8x128xf32, #tpu.memory_space<vmem>>, %arg2: memref<128x1024xbf16, #tpu.memory_space<vmem>>, %arg3: memref<1024x1536xbf16, #tpu.memory_space<vmem>>, %arg4: memref<8x1536xf32, #tpu.memory_space<vmem>>, %arg5: memref<8x1536xf32, #tpu.memory_space<vmem>>) attributes {dimension_semantics = [#tpu.dimension_semantics<parallel>], iteration_bounds = array<i64: 1>, scalar_prefetch = 0 : i64, scratch_operands = 0 : i64, tpu.core_type = #tpu.core_type<tc>, window_params = [{pipeline_mode = #tpu.pipeline_mode<synchronous>, transform_indices = @transform_0, window_bounds = array<i64: 8, 128>}, {pipeline_mode = #tpu.pipeline_mode<synchronous>, transform_indices = @transform_1, window_bounds = array<i64: 128, 1024>}, {transform_indices = @transform_2, window_bounds = array<i64: 1024, 1536>}, {transform_indices = @transform_3, window_bounds = array<i64: 8, 1536>}, {transform_indices = @transform_4, window_bounds = array<i64: 8, 1536>}]} {
    %c0 = arith.constant 0 : index
    %c0_0 = arith.constant 0 : index
    %0 = vector.load %arg1[%c0, %c0_0] : memref<8x128xf32, #tpu.memory_space<vmem>>, vector<8x128xf32>
    %1 = arith.truncf %0 : vector<8x128xf32> to vector<8x128xbf16>
    %c0_1 = arith.constant 0 : index
    %c0_2 = arith.constant 0 : index
    %2 = vector.load %arg2[%c0_1, %c0_2] : memref<128x1024xbf16, #tpu.memory_space<vmem>>, vector<128x1024xbf16>
    %cst = arith.constant dense<0.000000e+00> : vector<8x1024xf32>
    %3 = tpu.matmul %1, %2, %cst {dimension_numbers = #tpu.dot_dimension_numbers<[1], [0], [0], [1], [0, 0, 1, 1], [], []>} : vector<8x128xbf16>, vector<128x1024xbf16>, vector<8x1024xf32> -> vector<8x1024xf32>
    %cst_3 = arith.constant dense<0.000000e+00> : vector<1024xf32>
    %4 = vector.multi_reduction <add>, %3, %cst_3 [0] : vector<8x1024xf32> to vector<1024xf32>
    %5 = vector.shape_cast %4 : vector<1024xf32> to vector<1x1024xf32>
    %cst_4 = arith.constant 8.000000e+00 : f32
    %6 = vector.broadcast %cst_4 : f32 to vector<1x1024xf32>
    %7 = arith.divf %5, %6 : vector<1x1024xf32>
    %8 = vector.broadcast %7 : vector<1x1024xf32> to vector<8x1024xf32>
    %9 = arith.subf %3, %8 : vector<8x1024xf32>
    %10 = vector.broadcast %7 : vector<1x1024xf32> to vector<8x1024xf32>
    %11 = arith.subf %3, %10 : vector<8x1024xf32>
    %12 = arith.mulf %9, %11 : vector<8x1024xf32>
    %cst_5 = arith.constant dense<0.000000e+00> : vector<1024xf32>
    %13 = vector.multi_reduction <add>, %12, %cst_5 [0] : vector<8x1024xf32> to vector<1024xf32>
    %14 = vector.shape_cast %13 : vector<1024xf32> to vector<1x1024xf32>
    %cst_6 = arith.constant 8.000000e+00 : f32
    %15 = vector.broadcast %cst_6 : f32 to vector<1x1024xf32>
    %16 = arith.divf %14, %15 : vector<1x1024xf32>
    %17 = vector.broadcast %7 : vector<1x1024xf32> to vector<8x1024xf32>
    %18 = arith.subf %3, %17 : vector<8x1024xf32>
    %cst_7 = arith.constant 9.900000e-01 : f32
    %19 = vector.broadcast %cst_7 : f32 to vector<1x1024xf32>
    %20 = arith.addf %16, %19 : vector<1x1024xf32>
    %21 = math.rsqrt %20 : vector<1x1024xf32>
    %22 = vector.broadcast %21 : vector<1x1024xf32> to vector<8x1024xf32>
    %23 = arith.mulf %18, %22 : vector<8x1024xf32>
    %cst_8 = arith.constant 0.000000e+00 : f32
    %24 = vector.broadcast %cst_8 : f32 to vector<8x1024xf32>
    %25 = arith.maximumf %23, %24 : vector<8x1024xf32>
    %26 = arith.truncf %25 : vector<8x1024xf32> to vector<8x1024xbf16>
    %c0_9 = arith.constant 0 : index
    %c0_10 = arith.constant 0 : index
    %27 = vector.load %arg3[%c0_9, %c0_10] : memref<1024x1536xbf16, #tpu.memory_space<vmem>>, vector<1024x1536xbf16>
    %cst_11 = arith.constant dense<0.000000e+00> : vector<8x1536xf32>
    %28 = tpu.matmul %26, %27, %cst_11 {dimension_numbers = #tpu.dot_dimension_numbers<[1], [0], [0], [1], [0, 0, 1, 1], [], []>} : vector<8x1024xbf16>, vector<1024x1536xbf16>, vector<8x1536xf32> -> vector<8x1536xf32>
    %cst_12 = arith.constant dense<0.000000e+00> : vector<1536xf32>
    %29 = vector.multi_reduction <add>, %28, %cst_12 [0] : vector<8x1536xf32> to vector<1536xf32>
    %30 = vector.shape_cast %29 : vector<1536xf32> to vector<1x1536xf32>
    %cst_13 = arith.constant 8.000000e+00 : f32
    %31 = vector.broadcast %cst_13 : f32 to vector<1x1536xf32>
    %32 = arith.divf %30, %31 : vector<1x1536xf32>
    %33 = vector.broadcast %32 : vector<1x1536xf32> to vector<8x1536xf32>
    %34 = arith.subf %28, %33 : vector<8x1536xf32>
    %35 = vector.broadcast %32 : vector<1x1536xf32> to vector<8x1536xf32>
    %36 = arith.subf %28, %35 : vector<8x1536xf32>
    %37 = arith.mulf %34, %36 : vector<8x1536xf32>
    %cst_14 = arith.constant dense<0.000000e+00> : vector<1536xf32>
    %38 = vector.multi_reduction <add>, %37, %cst_14 [0] : vector<8x1536xf32> to vector<1536xf32>
    %39 = vector.shape_cast %38 : vector<1536xf32> to vector<1x1536xf32>
    %cst_15 = arith.constant 8.000000e+00 : f32
    %40 = vector.broadcast %cst_15 : f32 to vector<1x1536xf32>
    %41 = arith.divf %39, %40 : vector<1x1536xf32>
    %42 = vector.broadcast %32 : vector<1x1536xf32> to vector<8x1536xf32>
    %43 = arith.subf %28, %42 : vector<8x1536xf32>
    %cst_16 = arith.constant 9.900000e-01 : f32
    %44 = vector.broadcast %cst_16 : f32 to vector<1x1536xf32>
    %45 = arith.addf %41, %44 : vector<1x1536xf32>
    %46 = math.rsqrt %45 : vector<1x1536xf32>
    %47 = vector.broadcast %46 : vector<1x1536xf32> to vector<8x1536xf32>
    %48 = arith.mulf %43, %47 : vector<8x1536xf32>
    %49 = arith.negf %48 : vector<8x1536xf32>
    %50 = math.exp %49 : vector<8x1536xf32>
    %cst_17 = arith.constant 1.000000e+00 : f32
    %51 = vector.broadcast %cst_17 : f32 to vector<8x1536xf32>
    %52 = arith.addf %51, %50 : vector<8x1536xf32>
    %53 = arith.divf %51, %52 : vector<8x1536xf32>
    %c0_18 = arith.constant 0 : index
    %c0_19 = arith.constant 0 : index
    %54 = vector.load %arg4[%c0_18, %c0_19] : memref<8x1536xf32, #tpu.memory_space<vmem>>, vector<8x1536xf32>
    %55 = arith.cmpf ogt, %53, %54 : vector<8x1536xf32>
    %cst_20 = arith.constant 1.000000e+00 : f32
    %cst_21 = arith.constant 0.000000e+00 : f32
    %56 = vector.broadcast %cst_20 : f32 to vector<8x1536xf32>
    %57 = vector.broadcast %cst_21 : f32 to vector<8x1536xf32>
    %58 = arith.select %55, %56, %57 : vector<8x1536xi1>, vector<8x1536xf32>
    %c0_22 = arith.constant 0 : index
    %c0_23 = arith.constant 0 : index
    %59 = vector.load %arg5[%c0_22, %c0_23] : memref<8x1536xf32, #tpu.memory_space<vmem>>, vector<8x1536xf32>
    tpu.vector_store %arg5[%c0_22, %c0_23], %58 {strides = array<i32>} : memref<8x1536xf32, #tpu.memory_space<vmem>>, vector<8x1536xf32>,
    return
  }
  func.func @transform_0(%arg0: i32) -> (i32, i32) {
    %c0_i32 = arith.constant 0 : i32
    %c0_i32_0 = arith.constant 0 : i32
    %c0_i32_1 = arith.constant 0 : i32
    return %c0_i32, %c0_i32_0 : i32, i32
  }
  func.func @transform_1(%arg0: i32) -> (i32, i32) {
    %c0_i32 = arith.constant 0 : i32
    %c0_i32_0 = arith.constant 0 : i32
    %c0_i32_1 = arith.constant 0 : i32
    return %c0_i32, %c0_i32_0 : i32, i32
  }
  func.func @transform_2(%arg0: i32) -> (i32, i32) {
    %c0_i32 = arith.constant 0 : i32
    %c0_i32_0 = arith.constant 0 : i32
    return %c0_i32, %arg0 : i32, i32
  }
  func.func @transform_3(%arg0: i32) -> (i32, i32) {
    %c0_i32 = arith.constant 0 : i32
    %c0_i32_0 = arith.constant 0 : i32
    return %c0_i32, %arg0 : i32, i32
  }
  func.func @transform_4(%arg0: i32) -> (i32, i32) {
    %c0_i32 = arith.constant 0 : i32
    %c0_i32_0 = arith.constant 0 : i32
    return %c0_i32, %arg0 : i32, i32
  }
}

</mosaic_0001>

<llo_original>
// kernel: generator_forward.1
$region0: #{generator_forward.1}
  #allocation0 [shape = 'u32[]', space=smem, size = 0x4, offset = 0x4, fixed_abs, tag = 'smem constant byte address 0x4 - core index']
  #allocation1 [shape = 'u32[144,128]{1,0:T(1,128)}', space=vmem, size = 0x12000, scoped, tag = 'internal scratch']
  %s0 = inlined_call_operand.hbm [shape: f32[8,128], index: 0, kind: input, shape index: {}]
  %s1 = inlined_call_operand.hbm [shape: bf16[128,1024], index: 1, kind: input, shape index: {}]
  %s2 = inlined_call_operand.hbm [shape: bf16[1024,1536], index: 2, kind: input, shape index: {}]
  %s3 = inlined_call_operand.vmem [shape: f32[8,1536], index: 3, kind: input, shape index: {}]
  %s4 = inlined_call_operand.hbm [shape: f32[8,1536], index: 4, kind: output, shape index: {}]
  %s5 = sld [smem:[#allocation0]]
  $region38: #{generator_forward.1} parent=0
    _
  %s7 = ssub.s32 1, %s5
  %s8 = scalar_select 0, %s7, %s5
  $region1: #{generator_forward.1} parent=0
    #allocation2 [shape = 'u8[4096]{0}', space=vmem, size = 0x1000, scoped, tag = 'input window, operand 0, single buffered']
    #allocation3 [shape = 's32[1]{0}', space=sflag, size = 0x4, scoped, tag = 'scoped memory for generator_forward.1']
    #allocation4 [shape = 's32[1]{0}', space=sflag, size = 0x4, scoped, tag = 'scoped memory for generator_forward.1']
    #allocation5 [shape = 'u8[262144]{0}', space=vmem, size = 0x40000, scoped, tag = 'input window, operand 1, single buffered']
    #allocation6 [shape = 's32[1]{0}', space=sflag, size = 0x4, scoped, tag = 'scoped memory for generator_forward.1']
    #allocation7 [shape = 'u8[3145728]{0}', space=vmem, size = 0x300000, scoped, tag = 'input window, operand 2, single buffered']
    #allocation8 [shape = 'u8[49152]{0}', space=vmem, size = 0xc000, scoped, tag = 'output window, operand 0, single buffered']
    %9 = vsyncpa [#allocation3], 0
    %10 = vsyncpa [#allocation6], 0
    %11 = vsyncpa [#allocation4], 0
    // Predicated region
    $region2: #{generator_forward.1} parent=1 // pred_check
      _
    $region3: #{generator_forward.1} parent=1 // pred_check_branch
      %13 = sbr.rel (0) target = $region5
    $region4: #{generator_forward.1} parent=1 // pred_region
      %s15 = ssub.s32 128, 128
      %16 = vsyncadd [#allocation3], %s15
      %s18 = sshll.u32 [#allocation2], 4
      %s19 = int_to_ptr.vmem [resolvable:$true] %s18
      %21 = dma.hbm_to_vmem [thread:$0]  %s0, 128, %s19, [#allocation3]
    $region5: #{generator_forward.1} parent=1 // pred_fallthru
      _
    // Predicated region
    $region6: #{generator_forward.1} parent=1 // pred_check
      _
    $region7: #{generator_forward.1} parent=1 // pred_check_branch
      %23 = sbr.rel (0) target = $region9
    $region8: #{generator_forward.1} parent=1 // pred_region
      %s25 = ssub.s32 8192, 8192
      %26 = vsyncadd [#allocation6], %s25
      %s27 = sshll.u32 [#allocation5], 4
      %s28 = int_to_ptr.vmem [resolvable:$true] %s27
      %33 = dma.hbm_to_vmem [thread:$0]  %s1, 8192, %s28, [#allocation6], 512, 512, 32
    $region9: #{generator_forward.1} parent=1 // pred_fallthru
      _
    // Predicated region
    $region10: #{generator_forward.1} parent=1 // pred_check
      _
    $region11: #{generator_forward.1} parent=1 // pred_check_branch
      %35 = sbr.rel (0) target = $region13
    $region12: #{generator_forward.1} parent=1 // pred_region
      %s37 = ssub.s32 98304, 98304
      %38 = vsyncadd [#allocation6], %s37
      %s39 = sshll.u32 [#allocation7], 4
      %s40 = int_to_ptr.vmem [resolvable:$true] %s39
      %45 = dma.hbm_to_vmem [thread:$0]  %s2, 98304, %s40, [#allocation6], 768, 768, 48
    $region13: #{generator_forward.1} parent=1 // pred_fallthru
      _
    // Predicated region
    $region14: #{generator_forward.1} parent=1 // pred_check
      _
    $region15: #{generator_forward.1} parent=1 // pred_check_branch
      %47 = sbr.rel (0) target = $region17
    $region16: #{generator_forward.1} parent=1 // pred_region
      _
    $region17: #{generator_forward.1} parent=1 // pred_fallthru
      _
    // Predicated region
    $region18: #{generator_forward.1} parent=1 // pred_check
      _
    $region19: #{generator_forward.1} parent=1 // pred_check_branch
      %49 = sbr.rel (0) target = $region21
    $region20: #{generator_forward.1} parent=1 // pred_region
      %50 = dma.done [#allocation3], 128
    $region21: #{generator_forward.1} parent=1 // pred_fallthru
      _
    // Predicated region
    $region22: #{generator_forward.1} parent=1 // pred_check
      _
    $region23: #{generator_forward.1} parent=1 // pred_check_branch
      %52 = sbr.rel (0) target = $region25
    $region24: #{generator_forward.1} parent=1 // pred_region
      %53 = dma.done [#allocation6], 8192
    $region25: #{generator_forward.1} parent=1 // pred_fallthru
      _
    // Predicated region
    $region26: #{generator_forward.1} parent=1 // pred_check
      _
    $region27: #{generator_forward.1} parent=1 // pred_check_branch
      %55 = sbr.rel (0) target = $region29
    $region28: #{generator_forward.1} parent=1 // pred_region
      %56 = dma.done [#allocation6], 98304
    $region29: #{generator_forward.1} parent=1 // pred_fallthru
      _
    %v58 = vld [vmem:[#allocation2] sm:$0xff]
    %v59 = vpack.c.bf16 %v58, %v58
    %v60 = vld [vmem:[#allocation5] sm:$0xff]
    %v61 = vld [vmem:[#allocation5 + $0x8] sm:$0xff]
    %v62 = vld [vmem:[#allocation5 + $0x10] sm:$0xff]
    %v63 = vld [vmem:[#allocation5 + $0x18] sm:$0xff]
    %v64 = vld [vmem:[#allocation5 + $0x20] sm:$0xff]
    %v65 = vld [vmem:[#allocation5 + $0x28] sm:$0xff]
    %v66 = vld [vmem:[#allocation5 + $0x30] sm:$0xff]
    %v67 = vld [vmem:[#allocation5 + $0x38] sm:$0xff]
    %v68 = vld [vmem:[#allocation5 + $0x40] sm:$0xff]
    %v69 = vld [vmem:[#allocation5 + $0x48] sm:$0xff]
    %v70 = vld [vmem:[#allocation5 + $0x50] sm:$0xff]
    %v71 = vld [vmem:[#allocation5 + $0x58] sm:$0xff]
    %v72 = vld [vmem:[#allocation5 + $0x60] sm:$0xff]
    %v73 = vld [vmem:[#allocation5 + $0x68] sm:$0xff]
    %v74 = vld [vmem:[#allocation5 + $0x70] sm:$0xff]
    %v75 = vld [vmem:[#allocation5 + $0x78] sm:$0xff]
    %v76 = vld [vmem:[#allocation5 + $0x80] sm:$0xff]
    %v77 = vld [vmem:[#allocation5 + $0x88] sm:$0xff]
    %v78 = vld [vmem:[#allocation5 + $0x90] sm:$0xff]
    %v79 = vld [vmem:[#allocation5 + $0x98] sm:$0xff]
    %v80 = vld [vmem:[#allocation5 + $0xa0] sm:$0xff]
    %v81 = vld [vmem:[#allocation5 + $0xa8] sm:$0xff]
    %v82 = vld [vmem:[#allocation5 + $0xb0] sm:$0xff]
    %v83 = vld [vmem:[#allocation5 + $0xb8] sm:$0xff]
    %v84 = vld [vmem:[#allocation5 + $0xc0] sm:$0xff]
    %v85 = vld [vmem:[#allocation5 + $0xc8] sm:$0xff]
    %v86 = vld [vmem:[#allocation5 + $0xd0] sm:$0xff]
    %v87 = vld [vmem:[#allocation5 + $0xd8] sm:$0xff]
    %v88 = vld [vmem:[#allocation5 + $0xe0] sm:$0xff]
    %v89 = vld [vmem:[#allocation5 + $0xe8] sm:$0xff]
    %v90 = vld [vmem:[#allocation5 + $0xf0] sm:$0xff]
    %v91 = vld [vmem:[#allocation5 + $0xf8] sm:$0xff]
    %v92 = vld [vmem:[#allocation5 + $0x100] sm:$0xff]
    %v93 = vld [vmem:[#allocation5 + $0x108] sm:$0xff]
    %v94 = vld [vmem:[#allocation5 + $0x110] sm:$0xff]
    %v95 = vld [vmem:[#allocation5 + $0x118] sm:$0xff]
    %v96 = vld [vmem:[#allocation5 + $0x120] sm:$0xff]
    %v97 = vld [vmem:[#allocation5 + $0x128] sm:$0xff]
    %v98 = vld [vmem:[#allocation5 + $0x130] sm:$0xff]
    %v99 = vld [vmem:[#allocation5 + $0x138] sm:$0xff]
    %v100 = vld [vmem:[#allocation5 + $0x140] sm:$0xff]
    %v101 = vld [vmem:[#allocation5 + $0x148] sm:$0xff]
    %v102 = vld [vmem:[#allocation5 + $0x150] sm:$0xff]
    %v103 = vld [vmem:[#allocation5 + $0x158] sm:$0xff]
    %v104 = vld [vmem:[#allocation5 + $0x160] sm:$0xff]
    %v105 = vld [vmem:[#allocation5 + $0x168] sm:$0xff]
    %v106 = vld [vmem:[#allocation5 + $0x170] sm:$0xff]
    %v107 = vld [vmem:[#allocation5 + $0x178] sm:$0xff]
    %v108 = vld [vmem:[#allocation5 + $0x180] sm:$0xff]
    %v109 = vld [vmem:[#allocation5 + $0x188] sm:$0xff]
    %v110 = vld [vmem:[#allocation5 + $0x190] sm:$0xff]
    %v111 = vld [vmem:[#allocation5 + $0x198] sm:$0xff]
    %v112 = vld [vmem:[#allocation5 + $0x1a0] sm:$0xff]
    %v113 = vld [vmem:[#allocation5 + $0x1a8] sm:$0xff]
    %v114 = vld [vmem:[#allocation5 + $0x1b0] sm:$0xff]
    %v115 = vld [vmem:[#allocation5 + $0x1b8] sm:$0xff]
    %v116 = vld [vmem:[#allocation5 + $0x1c0] sm:$0xff]
    %v117 = vld [vmem:[#allocation5 + $0x1c8] sm:$0xff]
    %v118 = vld [vmem:[#allocation5 + $0x1d0] sm:$0xff]
    %v119 = vld [vmem:[#allocation5 + $0x1d8] sm:$0xff]
    %v120 = vld [vmem:[#allocation5 + $0x1e0] sm:$0xff]
    %v121 = vld [vmem:[#allocation5 + $0x1e8] sm:$0xff]
    %v122 = vld [vmem:[#allocation5 + $0x1f0] sm:$0xff]
    %v123 = vld [vmem:[#allocation5 + $0x1f8] sm:$0xff]
    %v188 = vunpack.c.l.b16 %v60
    %v189 = vunpack.c.h.b16 %v60
    %v190 = vunpack.c.l.b16 %v61
    %v191 = vunpack.c.h.b16 %v61
    %v192 = vunpack.c.l.b16 %v62
    %v193 = vunpack.c.h.b16 %v62
    %v194 = vunpack.c.l.b16 %v63
    %v195 = vunpack.c.h.b16 %v63
    %v196 = vunpack.c.l.b16 %v64
    %v197 = vunpack.c.h.b16 %v64
    %v198 = vunpack.c.l.b16 %v65
    %v199 = vunpack.c.h.b16 %v65
    %v200 = vunpack.c.l.b16 %v66
    %v201 = vunpack.c.h.b16 %v66
    %v202 = vunpack.c.l.b16 %v67
    %v203 = vunpack.c.h.b16 %v67
    %v204 = vunpack.c.l.b16 %v68
    %v205 = vunpack.c.h.b16 %v68
    %v206 = vunpack.c.l.b16 %v69
    %v207 = vunpack.c.h.b16 %v69
    %v208 = vunpack.c.l.b16 %v70
    %v209 = vunpack.c.h.b16 %v70
    %v210 = vunpack.c.l.b16 %v71
    %v211 = vunpack.c.h.b16 %v71
    %v212 = vunpack.c.l.b16 %v72
    %v213 = vunpack.c.h.b16 %v72
    %v214 = vunpack.c.l.b16 %v73
    %v215 = vunpack.c.h.b16 %v73
    %v216 = vunpack.c.l.b16 %v74
    %v217 = vunpack.c.h.b16 %v74
    %v218 = vunpack.c.l.b16 %v75
    %v219 = vunpack.c.h.b16 %v75
    %v220 = vunpack.c.l.b16 %v76
    %v221 = vunpack.c.h.b16 %v76
    %v222 = vunpack.c.l.b16 %v77
    %v223 = vunpack.c.h.b16 %v77
    %v224 = vunpack.c.l.b16 %v78
    %v225 = vunpack.c.h.b16 %v78
    %v226 = vunpack.c.l.b16 %v79
    %v227 = vunpack.c.h.b16 %v79
    %v228 = vunpack.c.l.b16 %v80
    %v229 = vunpack.c.h.b16 %v80
    %v230 = vunpack.c.l.b16 %v81
    %v231 = vunpack.c.h.b16 %v81
    %v232 = vunpack.c.l.b16 %v82
    %v233 = vunpack.c.h.b16 %v82
    %v234 = vunpack.c.l.b16 %v83
    %v235 = vunpack.c.h.b16 %v83
    %v236 = vunpack.c.l.b16 %v84
    %v237 = vunpack.c.h.b16 %v84
    %v238 = vunpack.c.l.b16 %v85
    %v239 = vunpack.c.h.b16 %v85
    %v240 = vunpack.c.l.b16 %v86
    %v241 = vunpack.c.h.b16 %v86
    %v242 = vunpack.c.l.b16 %v87
    %v243 = vunpack.c.h.b16 %v87
    %v244 = vunpack.c.l.b16 %v88
    %v245 = vunpack.c.h.b16 %v88
    %v246 = vunpack.c.l.b16 %v89
    %v247 = vunpack.c.h.b16 %v89
    %v248 = vunpack.c.l.b16 %v90
    %v249 = vunpack.c.h.b16 %v90
    %v250 = vunpack.c.l.b16 %v91
    %v251 = vunpack.c.h.b16 %v91
    %v252 = vunpack.c.l.b16 %v92
    %v253 = vunpack.c.h.b16 %v92
    %v254 = vunpack.c.l.b16 %v93
    %v255 = vunpack.c.h.b16 %v93
    %v256 = vunpack.c.l.b16 %v94
    %v257 = vunpack.c.h.b16 %v94
    %v258 = vunpack.c.l.b16 %v95
    %v259 = vunpack.c.h.b16 %v95
    %v260 = vunpack.c.l.b16 %v96
    %v261 = vunpack.c.h.b16 %v96
    %v262 = vunpack.c.l.b16 %v97
    %v263 = vunpack.c.h.b16 %v97
    %v264 = vunpack.c.l.b16 %v98
    %v265 = vunpack.c.h.b16 %v98
    %v266 = vunpack.c.l.b16 %v99
    %v267 = vunpack.c.h.b16 %v99
    %v268 = vunpack.c.l.b16 %v100
    %v269 = vunpack.c.h.b16 %v100
    %v270 = vunpack.c.l.b16 %v101
    %v271 = vunpack.c.h.b16 %v101
    %v272 = vunpack.c.l.b16 %v102
    %v273 = vunpack.c.h.b16 %v102
    %v274 = vunpack.c.l.b16 %v103
    %v275 = vunpack.c.h.b16 %v103
    %v276 = vunpack.c.l.b16 %v104
    %v277 = vunpack.c.h.b16 %v104
    %v278 = vunpack.c.l.b16 %v105
    %v279 = vunpack.c.h.b16 %v105
    %v280 = vunpack.c.l.b16 %v106
    %v281 = vunpack.c.h.b16 %v106
    %v282 = vunpack.c.l.b16 %v107
    %v283 = vunpack.c.h.b16 %v107
    %v284 = vunpack.c.l.b16 %v108
    %v285 = vunpack.c.h.b16 %v108
    %v286 = vunpack.c.l.b16 %v109
    %v287 = vunpack.c.h.b16 %v109
    %v288 = vunpack.c.l.b16 %v110
    %v289 = vunpack.c.h.b16 %v110
    %v290 = vunpack.c.l.b16 %v111
    %v291 = vunpack.c.h.b16 %v111
    %v292 = vunpack.c.l.b16 %v112
    %v293 = vunpack.c.h.b16 %v112
    %v294 = vunpack.c.l.b16 %v113
    %v295 = vunpack.c.h.b16 %v113
    %v296 = vunpack.c.l.b16 %v114
    %v297 = vunpack.c.h.b16 %v114
    %v298 = vunpack.c.l.b16 %v115
    %v299 = vunpack.c.h.b16 %v115
    %v300 = vunpack.c.l.b16 %v116
    %v301 = vunpack.c.h.b16 %v116
    %v302 = vunpack.c.l.b16 %v117
    %v303 = vunpack.c.h.b16 %v117
    %v304 = vunpack.c.l.b16 %v118
    %v305 = vunpack.c.h.b16 %v118
    %v306 = vunpack.c.l.b16 %v119
    %v307 = vunpack.c.h.b16 %v119
    %v308 = vunpack.c.l.b16 %v120
    %v309 = vunpack.c.h.b16 %v120
    %v310 = vunpack.c.l.b16 %v121
    %v311 = vunpack.c.h.b16 %v121
    %v312 = vunpack.c.l.b16 %v122
    %v313 = vunpack.c.h.b16 %v122
    %v314 = vunpack.c.l.b16 %v123
    %v315 = vunpack.c.h.b16 %v123
    %v316 = vpack.c.b16 %v196, %v188
    %v317 = vpack.c.b16 %v197, %v189
    %v318 = vpack.c.b16 %v198, %v190
    %v319 = vpack.c.b16 %v199, %v191
    %v320 = vpack.c.b16 %v200, %v192
    %v321 = vpack.c.b16 %v201, %v193
    %v322 = vpack.c.b16 %v202, %v194
    %v323 = vpack.c.b16 %v203, %v195
    %v324 = vpack.c.b16 %v212, %v204
    %v325 = vpack.c.b16 %v213, %v205
    %v326 = vpack.c.b16 %v214, %v206
    %v327 = vpack.c.b16 %v215, %v207
    %v328 = vpack.c.b16 %v216, %v208
    %v329 = vpack.c.b16 %v217, %v209
    %v330 = vpack.c.b16 %v218, %v210
    %v331 = vpack.c.b16 %v219, %v211
    %v332 = vpack.c.b16 %v228, %v220
    %v333 = vpack.c.b16 %v229, %v221
    %v334 = vpack.c.b16 %v230, %v222
    %v335 = vpack.c.b16 %v231, %v223
    %v336 = vpack.c.b16 %v232, %v224
    %v337 = vpack.c.b16 %v233, %v225
    %v338 = vpack.c.b16 %v234, %v226
    %v339 = vpack.c.b16 %v235, %v227
    %v340 = vpack.c.b16 %v244, %v236
    %v341 = vpack.c.b16 %v245, %v237
    %v342 = vpack.c.b16 %v246, %v238
    %v343 = vpack.c.b16 %v247, %v239
    %v344 = vpack.c.b16 %v248, %v240
    %v345 = vpack.c.b16 %v249, %v241
    %v346 = vpack.c.b16 %v250, %v242
    %v347 = vpack.c.b16 %v251, %v243
    %v348 = vpack.c.b16 %v260, %v252
    %v349 = vpack.c.b16 %v261, %v253
    %v350 = vpack.c.b16 %v262, %v254
    %v351 = vpack.c.b16 %v263, %v255
    %v352 = vpack.c.b16 %v264, %v256
    %v353 = vpack.c.b16 %v265, %v257
    %v354 = vpack.c.b16 %v266, %v258
    %v355 = vpack.c.b16 %v267, %v259
    %v356 = vpack.c.b16 %v276, %v268
    %v357 = vpack.c.b16 %v277, %v269
    %v358 = vpack.c.b16 %v278, %v270
    %v359 = vpack.c.b16 %v279, %v271
    %v360 = vpack.c.b16 %v280, %v272
    %v361 = vpack.c.b16 %v281, %v273
    %v362 = vpack.c.b16 %v282, %v274
    %v363 = vpack.c.b16 %v283, %v275
    %v364 = vpack.c.b16 %v292, %v284
    %v365 = vpack.c.b16 %v293, %v285
    %v366 = vpack.c.b16 %v294, %v286
    %v367 = vpack.c.b16 %v295, %v287
    %v368 = vpack.c.b16 %v296, %v288
    %v369 = vpack.c.b16 %v297, %v289
    %v370 = vpack.c.b16 %v298, %v290
    %v371 = vpack.c.b16 %v299, %v291
    %v372 = vpack.c.b16 %v308, %v300
    %v373 = vpack.c.b16 %v309, %v301
    %v374 = vpack.c.b16 %v310, %v302
    %v375 = vpack.c.b16 %v311, %v303
    %v376 = vpack.c.b16 %v312, %v304
    %v377 = vpack.c.b16 %v313, %v305
    %v378 = vpack.c.b16 %v314, %v306
    %v379 = vpack.c.b16 %v315, %v307
    %444 = vmatprep.subr.bf16.mxu0 %v373
    %445 = vmatpush1.bf16.msra.mxu0 %v372
    %446 = vmatprep.subr.bf16.mxu0 %v365
    %447 = vmatpush1.bf16.msra.mxu0 %v364
    %448 = vmatprep.subr.bf16.mxu0 %v357
    %449 = vmatpush1.bf16.msra.mxu0 %v356
    %450 = vmatprep.subr.bf16.mxu0 %v349
    %451 = vmatpush1.bf16.msra.mxu0 %v348
    %452 = vmatprep.subr.bf16.mxu0 %v341
    %453 = vmatpush1.bf16.msra.mxu0 %v340
    %454 = vmatprep.subr.bf16.mxu0 %v333
    %455 = vmatpush1.bf16.msra.mxu0 %v332
    %456 = vmatprep.subr.bf16.mxu0 %v325
    %457 = vmatpush1.bf16.msra.mxu0 %v324
    %458 = vmatprep.subr.bf16.mxu0 %v317
    %459 = vmatpush1.bf16.msra.mxu0 %v316
    %460 = vmatprep.subr.bf16.mxu0 0
    %461 = vmatpush2.bf16.msra.mxu0 0
    %462 = vmatprep.subr.bf16.mxu0 0
    %463 = vmatpush2.bf16.msra.mxu0 0
    %464 = vmatprep.subr.bf16.mxu0 0
    %465 = vmatpush2.bf16.msra.mxu0 0
    %466 = vmatprep.subr.bf16.mxu0 0
    %467 = vmatpush2.bf16.msra.mxu0 0
    %468 = vmatprep.subr.bf16.mxu0 0
    %469 = vmatpush2.bf16.msra.mxu0 0
    %470 = vmatprep.subr.bf16.mxu0 0
    %471 = vmatpush2.bf16.msra.mxu0 0
    %472 = vmatprep.subr.bf16.mxu0 0
    %473 = vmatpush2.bf16.msra.mxu0 0
    %474 = vmatprep.subr.bf16.mxu0 0
    %475 = vmatpush2.bf16.msra.mxu0 0
    %476 = vmatprep.mubr.bf16.mxu0 0
    %477 = vmatmul.mubr.bf16.gmra.mxu0 %v59
    %v478 = vpop.f32.mrf.mxu0
    %v479 = vadd.f32 0.0, %v478
    %v480 = vpop.f32.mrf.mxu0
    %v481 = vadd.f32 0.0, %v480
    %v482 = vpop.f32.mrf.mxu0
    %v483 = vpop.f32.mrf.mxu0
    %484 = vdwg.mxu0
    %485 = vmatprep.subr.bf16.mxu0 %v375
    %486 = vmatpush1.bf16.msra.mxu0 %v374
    %487 = vmatprep.subr.bf16.mxu0 %v367
    %488 = vmatpush1.bf16.msra.mxu0 %v366
    %489 = vmatprep.subr.bf16.mxu0 %v359
    %490 = vmatpush1.bf16.msra.mxu0 %v358
    %491 = vmatprep.subr.bf16.mxu0 %v351
    %492 = vmatpush1.bf16.msra.mxu0 %v350
    %493 = vmatprep.subr.bf16.mxu0 %v343
    %494 = vmatpush1.bf16.msra.mxu0 %v342
    %495 = vmatprep.subr.bf16.mxu0 %v335
    %496 = vmatpush1.bf16.msra.mxu0 %v334
    %497 = vmatprep.subr.bf16.mxu0 %v327
    %498 = vmatpush1.bf16.msra.mxu0 %v326
    %499 = vmatprep.subr.bf16.mxu0 %v319
    %500 = vmatpush1.bf16.msra.mxu0 %v318
    %501 = vmatprep.subr.bf16.mxu0 0
    %502 = vmatpush2.bf16.msra.mxu0 0
    %503 = vmatprep.subr.bf16.mxu0 0
    %504 = vmatpush2.bf16.msra.mxu0 0
    %505 = vmatprep.subr.bf16.mxu0 0
    %506 = vmatpush2.bf16.msra.mxu0 0
    %507 = vmatprep.subr.bf16.mxu0 0
    %508 = vmatpush2.bf16.msra.mxu0 0
    %509 = vmatprep.subr.bf16.mxu0 0
    %510 = vmatpush2.bf16.msra.mxu0 0
    %511 = vmatprep.subr.bf16.mxu0 0
    %512 = vmatpush2.bf16.msra.mxu0 0
    %513 = vmatprep.subr.bf16.mxu0 0
    %514 = vmatpush2.bf16.msra.mxu0 0
    %515 = vmatprep.subr.bf16.mxu0 0
    %516 = vmatpush2.bf16.msra.mxu0 0
    %517 = vmatprep.mubr.bf16.mxu0 0
    %518 = vmatmul.mubr.bf16.gmra.mxu0 %v59
    %v519 = vpop.f32.mrf.mxu0
    %v520 = vadd.f32 0.0, %v519
    %v521 = vpop.f32.mrf.mxu0
    %v522 = vadd.f32 0.0, %v521
    %v523 = vpop.f32.mrf.mxu0
    %v524 = vpop.f32.mrf.mxu0
    %525 = vdwg.mxu0
    %526 = vmatprep.subr.bf16.mxu0 %v377
    %527 = vmatpush1.bf16.msra.mxu0 %v376
    %528 = vmatprep.subr.bf16.mxu0 %v369
    %529 = vmatpush1.bf16.msra.mxu0 %v368
    %530 = vmatprep.subr.bf16.mxu0 %v361
    %531 = vmatpush1.bf16.msra.mxu0 %v360
    %532 = vmatprep.subr.bf16.mxu0 %v353
    %533 = vmatpush1.bf16.msra.mxu0 %v352
    %534 = vmatprep.subr.bf16.mxu0 %v345
    %535 = vmatpush1.bf16.msra.mxu0 %v344
    %536 = vmatprep.subr.bf16.mxu0 %v337
    %537 = vmatpush1.bf16.msra.mxu0 %v336
    %538 = vmatprep.subr.bf16.mxu0 %v329
    %539 = vmatpush1.bf16.msra.mxu0 %v328
    %540 = vmatprep.subr.bf16.mxu0 %v321
    %541 = vmatpush1.bf16.msra.mxu0 %v320
    %542 = vmatprep.subr.bf16.mxu0 0
    %543 = vmatpush2.bf16.msra.mxu0 0
    %544 = vmatprep.subr.bf16.mxu0 0
    %545 = vmatpush2.bf16.msra.mxu0 0
    %546 = vmatprep.subr.bf16.mxu0 0
    %547 = vmatpush2.bf16.msra.mxu0 0
    %548 = vmatprep.subr.bf16.mxu0 0
    %549 = vmatpush2.bf16.msra.mxu0 0
    %550 = vmatprep.subr.bf16.mxu0 0
    %551 = vmatpush2.bf16.msra.mxu0 0
    %552 = vmatprep.subr.bf16.mxu0 0
    %553 = vmatpush2.bf16.msra.mxu0 0
    %554 = vmatprep.subr.bf16.mxu0 0
    %555 = vmatpush2.bf16.msra.mxu0 0
    %556 = vmatprep.subr.bf16.mxu0 0
    %557 = vmatpush2.bf16.msra.mxu0 0
    %558 = vmatprep.mubr.bf16.mxu0 0
    %559 = vmatmul.mubr.bf16.gmra.mxu0 %v59
    %v560 = vpop.f32.mrf.mxu0
    %v561 = vadd.f32 0.0, %v560
    %v562 = vpop.f32.mrf.mxu0
    %v563 = vadd.f32 0.0, %v562
    %v564 = vpop.f32.mrf.mxu0
    %v565 = vpop.f32.mrf.mxu0
    %566 = vdwg.mxu0
    %567 = vmatprep.subr.bf16.mxu0 %v379
    %568 = vmatpush1.bf16.msra.mxu0 %v378
    %569 = vmatprep.subr.bf16.mxu0 %v371
    %570 = vmatpush1.bf16.msra.mxu0 %v370
    %571 = vmatprep.subr.bf16.mxu0 %v363
    %572 = vmatpush1.bf16.msra.mxu0 %v362
    %573 = vmatprep.subr.bf16.mxu0 %v355
    %574 = vmatpush1.bf16.msra.mxu0 %v354
    %575 = vmatprep.subr.bf16.mxu0 %v347
    %576 = vmatpush1.bf16.msra.mxu0 %v346
    %577 = vmatprep.subr.bf16.mxu0 %v339
    %578 = vmatpush1.bf16.msra.mxu0 %v338
    %579 = vmatprep.subr.bf16.mxu0 %v331
    %580 = vmatpush1.bf16.msra.mxu0 %v330
    %581 = vmatprep.subr.bf16.mxu0 %v323
    %582 = vmatpush1.bf16.msra.mxu0 %v322
    %583 = vmatprep.subr.bf16.mxu0 0
    %584 = vmatpush2.bf16.msra.mxu0 0
    %585 = vmatprep.subr.bf16.mxu0 0
    %586 = vmatpush2.bf16.msra.mxu0 0
    %587 = vmatprep.subr.bf16.mxu0 0
    %588 = vmatpush2.bf16.msra.mxu0 0
    %589 = vmatprep.subr.bf16.mxu0 0
    %590 = vmatpush2.bf16.msra.mxu0 0
    %591 = vmatprep.subr.bf16.mxu0 0
    %592 = vmatpush2.bf16.msra.mxu0 0
    %593 = vmatprep.subr.bf16.mxu0 0
    %594 = vmatpush2.bf16.msra.mxu0 0
    %595 = vmatprep.subr.bf16.mxu0 0
    %596 = vmatpush2.bf16.msra.mxu0 0
    %597 = vmatprep.subr.bf16.mxu0 0
    %598 = vmatpush2.bf16.msra.mxu0 0
    %599 = vmatprep.mubr.bf16.mxu0 0
    %600 = vmatmul.mubr.bf16.gmra.mxu0 %v59
    %v601 = vpop.f32.mrf.mxu0
    %v602 = vadd.f32 0.0, %v601
    %v603 = vpop.f32.mrf.mxu0
    %v604 = vadd.f32 0.0, %v603
    %v605 = vpop.f32.mrf.mxu0
    %v606 = vpop.f32.mrf.mxu0
    %607 = vdwg.mxu0
    %v608 = vrot.slane %v479, 4
    %v609 = vadd.f32 %v479, %v608
    %v610 = vrot.slane %v609, 2
    %v611 = vadd.f32 %v609, %v610
    %v612 = vrot.slane %v611, 1
    %v613 = vadd.f32 %v611, %v612
    %v614 = vrot.slane %v481, 4
    %v615 = vadd.f32 %v481, %v614
    %v616 = vrot.slane %v615, 2
    %v617 = vadd.f32 %v615, %v616
    %v618 = vrot.slane %v617, 1
    %v619 = vadd.f32 %v617, %v618
    %v620 = vrot.slane %v520, 4
    %v621 = vadd.f32 %v520, %v620
    %v622 = vrot.slane %v621, 2
    %v623 = vadd.f32 %v621, %v622
    %v624 = vrot.slane %v623, 1
    %v625 = vadd.f32 %v623, %v624
    %v626 = vrot.slane %v522, 4
    %v627 = vadd.f32 %v522, %v626
    %v628 = vrot.slane %v627, 2
    %v629 = vadd.f32 %v627, %v628
    %v630 = vrot.slane %v629, 1
    %v631 = vadd.f32 %v629, %v630
    %v632 = vrot.slane %v561, 4
    %v633 = vadd.f32 %v561, %v632
    %v634 = vrot.slane %v633, 2
    %v635 = vadd.f32 %v633, %v634
    %v636 = vrot.slane %v635, 1
    %v637 = vadd.f32 %v635, %v636
    %v638 = vrot.slane %v563, 4
    %v639 = vadd.f32 %v563, %v638
    %v640 = vrot.slane %v639, 2
    %v641 = vadd.f32 %v639, %v640
    %v642 = vrot.slane %v641, 1
    %v643 = vadd.f32 %v641, %v642
    %v644 = vrot.slane %v602, 4
    %v645 = vadd.f32 %v602, %v644
    %v646 = vrot.slane %v645, 2
    %v647 = vadd.f32 %v645, %v646
    %v648 = vrot.slane %v647, 1
    %v649 = vadd.f32 %v647, %v648
    %v650 = vrot.slane %v604, 4
    %v651 = vadd.f32 %v604, %v650
    %v652 = vrot.slane %v651, 2
    %v653 = vadd.f32 %v651, %v652
    %v654 = vrot.slane %v653, 1
    %v655 = vadd.f32 %v653, %v654
    %v656 = vrcp.pop 8.0
    %v657 = vmul.f32 %v613, %v656
    %v658 = vmul.f32 %v619, %v656
    %v659 = vmul.f32 %v625, %v656
    %v660 = vmul.f32 %v631, %v656
    %v661 = vmul.f32 %v637, %v656
    %v662 = vmul.f32 %v643, %v656
    %v663 = vmul.f32 %v649, %v656
    %v664 = vmul.f32 %v655, %v656
    %v665 = vsub.f32 %v479, %v657
    %v666 = vsub.f32 %v481, %v658
    %v667 = vsub.f32 %v520, %v659
    %v668 = vsub.f32 %v522, %v660
    %v669 = vsub.f32 %v561, %v661
    %v670 = vsub.f32 %v563, %v662
    %v671 = vsub.f32 %v602, %v663
    %v672 = vsub.f32 %v604, %v664
    %v673 = vmul.f32 %v665, %v665
    %v674 = vmul.f32 %v666, %v666
    %v675 = vmul.f32 %v667, %v667
    %v676 = vmul.f32 %v668, %v668
    %v677 = vmul.f32 %v669, %v669
    %v678 = vmul.f32 %v670, %v670
    %v679 = vmul.f32 %v671, %v671
    %v680 = vmul.f32 %v672, %v672
    %v681 = vrot.slane %v673, 4
    %v682 = vadd.f32 %v673, %v681
    %v683 = vrot.slane %v682, 2
    %v684 = vadd.f32 %v682, %v683
    %v685 = vrot.slane %v684, 1
    %v686 = vadd.f32 %v684, %v685
    %v687 = vrot.slane %v674, 4
    %v688 = vadd.f32 %v674, %v687
    %v689 = vrot.slane %v688, 2
    %v690 = vadd.f32 %v688, %v689
    %v691 = vrot.slane %v690, 1
    %v692 = vadd.f32 %v690, %v691
    %v693 = vrot.slane %v675, 4
    %v694 = vadd.f32 %v675, %v693
    %v695 = vrot.slane %v694, 2
    %v696 = vadd.f32 %v694, %v695
    %v697 = vrot.slane %v696, 1
    %v698 = vadd.f32 %v696, %v697
    %v699 = vrot.slane %v676, 4
    %v700 = vadd.f32 %v676, %v699
    %v701 = vrot.slane %v700, 2
    %v702 = vadd.f32 %v700, %v701
    %v703 = vrot.slane %v702, 1
    %v704 = vadd.f32 %v702, %v703
    %v705 = vrot.slane %v677, 4
    %v706 = vadd.f32 %v677, %v705
    %v707 = vrot.slane %v706, 2
    %v708 = vadd.f32 %v706, %v707
    %v709 = vrot.slane %v708, 1
    %v710 = vadd.f32 %v708, %v709
    %v711 = vrot.slane %v678, 4
    %v712 = vadd.f32 %v678, %v711
    %v713 = vrot.slane %v712, 2
    %v714 = vadd.f32 %v712, %v713
    %v715 = vrot.slane %v714, 1
    %v716 = vadd.f32 %v714, %v715
    %v717 = vrot.slane %v679, 4
    %v718 = vadd.f32 %v679, %v717
    %v719 = vrot.slane %v718, 2
    %v720 = vadd.f32 %v718, %v719
    %v721 = vrot.slane %v720, 1
    %v722 = vadd.f32 %v720, %v721
    %v723 = vrot.slane %v680, 4
    %v724 = vadd.f32 %v680, %v723
    %v725 = vrot.slane %v724, 2
    %v726 = vadd.f32 %v724, %v725
    %v727 = vrot.slane %v726, 1
    %v728 = vadd.f32 %v726, %v727
    %v729 = vmul.f32 %v686, %v656
    %v730 = vmul.f32 %v692, %v656
    %v731 = vmul.f32 %v698, %v656
    %v732 = vmul.f32 %v704, %v656
    %v733 = vmul.f32 %v710, %v656
    %v734 = vmul.f32 %v716, %v656
    %v735 = vmul.f32 %v722, %v656
    %v736 = vmul.f32 %v728, %v656
    %v737 = vadd.f32 %v729, 0.99
    %v738 = vadd.f32 %v730, 0.99
    %v739 = vadd.f32 %v731, 0.99
    %v740 = vadd.f32 %v732, 0.99
    %v741 = vadd.f32 %v733, 0.99
    %v742 = vadd.f32 %v734, 0.99
    %v743 = vadd.f32 %v735, 0.99
    %v744 = vadd.f32 %v736, 0.99
    %v745 = vrsqrt.pop %v737
    %v746 = vrsqrt.pop %v738
    %v747 = vrsqrt.pop %v739
    %v748 = vrsqrt.pop %v740
    %v749 = vrsqrt.pop %v741
    %v750 = vrsqrt.pop %v742
    %v751 = vrsqrt.pop %v743
    %v752 = vrsqrt.pop %v744
    %v753 = vmul.f32 %v665, %v745
    %v754 = vmul.f32 %v666, %v746
    %v755 = vmul.f32 %v667, %v747
    %v756 = vmul.f32 %v668, %v748
    %v757 = vmul.f32 %v669, %v749
    %v758 = vmul.f32 %v670, %v750
    %v759 = vmul.f32 %v671, %v751
    %v760 = vmul.f32 %v672, %v752
    %v761 = vmax.f32 %v753, 0.0
    %v762 = vmax.f32 %v754, 0.0
    %v763 = vmax.f32 %v755, 0.0
    %v764 = vmax.f32 %v756, 0.0
    %v765 = vmax.f32 %v757, 0.0
    %v766 = vmax.f32 %v758, 0.0
    %v767 = vmax.f32 %v759, 0.0
    %v768 = vmax.f32 %v760, 0.0
    %v769 = vpack.c.bf16 %v761, %v761
    %v770 = vpack.c.bf16 %v762, %v762
    %v771 = vpack.c.bf16 %v763, %v763
    %v772 = vpack.c.bf16 %v764, %v764
    %v773 = vpack.c.bf16 %v765, %v765
    %v774 = vpack.c.bf16 %v766, %v766
    %v775 = vpack.c.bf16 %v767, %v767
    %v776 = vpack.c.bf16 %v768, %v768
    %v777 = vld [vmem:[#allocation7] sm:$0xff]
    %v778 = vld [vmem:[#allocation7 + $0x8] sm:$0xff]
    %v779 = vld [vmem:[#allocation7 + $0x10] sm:$0xff]
    %v780 = vld [vmem:[#allocation7 + $0x18] sm:$0xff]
    %v781 = vld [vmem:[#allocation7 + $0x20] sm:$0xff]
    %v782 = vld [vmem:[#allocation7 + $0x28] sm:$0xff]
    %v783 = vld [vmem:[#allocation7 + $0x30] sm:$0xff]
    %v784 = vld [vmem:[#allocation7 + $0x38] sm:$0xff]
    %v785 = vld [vmem:[#allocation7 + $0x40] sm:$0xff]
    %v786 = vld [vmem:[#allocation7 + $0x48] sm:$0xff]
    %v787 = vld [vmem:[#allocation7 + $0x50] sm:$0xff]
    %v788 = vld [vmem:[#allocation7 + $0x58] sm:$0xff]
    %v789 = vld [vmem:[#allocation7 + $0x60] sm:$0xff]
    %v790 = vld [vmem:[#allocation7 + $0x68] sm:$0xff]
    %v791 = vld [vmem:[#allocation7 + $0x70] sm:$0xff]
    %v792 = vld [vmem:[#allocation7 + $0x78] sm:$0xff]
    %v793 = vld [vmem:[#allocation7 + $0x80] sm:$0xff]
    %v794 = vld [vmem:[#allocation7 + $0x88] sm:$0xff]
    %v795 = vld [vmem:[#allocation7 + $0x90] sm:$0xff]
    %v796 = vld [vmem:[#allocation7 + $0x98] sm:$0xff]
    %v797 = vld [vmem:[#allocation7 + $0xa0] sm:$0xff]
    %v798 = vld [vmem:[#allocation7 + $0xa8] sm:$0xff]
    %v799 = vld [vmem:[#allocation7 + $0xb0] sm:$0xff]
    %v800 = vld [vmem:[#allocation7 + $0xb8] sm:$0xff]
    %v801 = vld [vmem:[#allocation7 + $0xc0] sm:$0xff]
    %v802 = vld [vmem:[#allocation7 + $0xc8] sm:$0xff]
    %v803 = vld [vmem:[#allocation7 + $0xd0] sm:$0xff]
    %v804 = vld [vmem:[#allocation7 + $0xd8] sm:$0xff]
    %v805 = vld [vmem:[#allocation7 + $0xe0] sm:$0xff]
    %v806 = vld [vmem:[#allocation7 + $0xe8] sm:$0xff]
    %v807 = vld [vmem:[#allocation7 + $0xf0] sm:$0xff]
    %v808 = vld [vmem:[#allocation7 + $0xf8] sm:$0xff]
    %v809 = vld [vmem:[#allocation7 + $0x100] sm:$0xff]
    %v810 = vld [vmem:[#allocation7 + $0x108] sm:$0xff]
    %v811 = vld [vmem:[#allocation7 + $0x110] sm:$0xff]
    %v812 = vld [vmem:[#allocation7 + $0x118] sm:$0xff]
    %v813 = vld [vmem:[#allocation7 + $0x120] sm:$0xff]
    %v814 = vld [vmem:[#allocation7 + $0x128] sm:$0xff]
    %v815 = vld [vmem:[#allocation7 + $0x130] sm:$0xff]
    %v816 = vld [vmem:[#allocation7 + $0x138] sm:$0xff]
    %v817 = vld [vmem:[#allocation7 + $0x140] sm:$0xff]
    %v818 = vld [vmem:[#allocation7 + $0x148] sm:$0xff]
    %v819 = vld [vmem:[#allocation7 + $0x150] sm:$0xff]
    %v820 = vld [vmem:[#allocation7 + $0x158] sm:$0xff]
    %v821 = vld [vmem:[#allocation7 + $0x160] sm:$0xff]
    %v822 = vld [vmem:[#allocation7 + $0x168] sm:$0xff]
    %v823 = vld [vmem:[#allocation7 + $0x170] sm:$0xff]
    %v824 = vld [vmem:[#allocation7 + $0x178] sm:$0xff]
    %v825 = vld [vmem:[#allocation7 + $0x180] sm:$0xff]
    %v826 = vld [vmem:[#allocation7 + $0x188] sm:$0xff]
    %v827 = vld [vmem:[#allocation7 + $0x190] sm:$0xff]
    %v828 = vld [vmem:[#allocation7 + $0x198] sm:$0xff]
    %v829 = vld [vmem:[#allocation7 + $0x1a0] sm:$0xff]
    %v830 = vld [vmem:[#allocation7 + $0x1a8] sm:$0xff]
    %v831 = vld [vmem:[#allocation7 + $0x1b0] sm:$0xff]
    %v832 = vld [vmem:[#allocation7 + $0x1b8] sm:$0xff]
    %v833 = vld [vmem:[#allocation7 + $0x1c0] sm:$0xff]
    %v834 = vld [vmem:[#allocation7 + $0x1c8] sm:$0xff]
    %v835 = vld [vmem:[#allocation7 + $0x1d0] sm:$0xff]
    %v836 = vld [vmem:[#allocation7 + $0x1d8] sm:$0xff]
    %v837 = vld [vmem:[#allocation7 + $0x1e0] sm:$0xff]
    %v838 = vld [vmem:[#allocation7 + $0x1e8] sm:$0xff]
    %v839 = vld [vmem:[#allocation7 + $0x1f0] sm:$0xff]
    %v840 = vld [vmem:[#allocation7 + $0x1f8] sm:$0xff]
    %v841 = vld [vmem:[#allocation7 + $0x200] sm:$0xff]
    %v842 = vld [vmem:[#allocation7 + $0x208] sm:$0xff]
    %v843 = vld [vmem:[#allocation7 + $0x210] sm:$0xff]
    %v844 = vld [vmem:[#allocation7 + $0x218] sm:$0xff]
    %v845 = vld [vmem:[#allocation7 + $0x220] sm:$0xff]
    %v846 = vld [vmem:[#allocation7 + $0x228] sm:$0xff]
    %v847 = vld [vmem:[#allocation7 + $0x230] sm:$0xff]
    %v848 = vld [vmem:[#allocation7 + $0x238] sm:$0xff]
    %v849 = vld [vmem:[#allocation7 + $0x240] sm:$0xff]
    %v850 = vld [vmem:[#allocation7 + $0x248] sm:$0xff]
    %v851 = vld [vmem:[#allocation7 + $0x250] sm:$0xff]
    %v852 = vld [vmem:[#allocation7 + $0x258] sm:$0xff]
    %v853 = vld [vmem:[#allocation7 + $0x260] sm:$0xff]
    %v854 = vld [vmem:[#allocation7 + $0x268] sm:$0xff]
    %v855 = vld [vmem:[#allocation7 + $0x270] sm:$0xff]
    %v856 = vld [vmem:[#allocation7 + $0x278] sm:$0xff]
    %v857 = vld [vmem:[#allocation7 + $0x280] sm:$0xff]
    %v858 = vld [vmem:[#allocation7 + $0x288] sm:$0xff]
    %v859 = vld [vmem:[#allocation7 + $0x290] sm:$0xff]
    %v860 = vld [vmem:[#allocation7 + $0x298] sm:$0xff]
    %v861 = vld [vmem:[#allocation7 + $0x2a0] sm:$0xff]
    %v862 = vld [vmem:[#allocation7 + $0x2a8] sm:$0xff]
    %v863 = vld [vmem:[#allocation7 + $0x2b0] sm:$0xff]
    %v864 = vld [vmem:[#allocation7 + $0x2b8] sm:$0xff]
    %v865 = vld [vmem:[#allocation7 + $0x2c0] sm:$0xff]
    %v866 = vld [vmem:[#allocation7 + $0x2c8] sm:$0xff]
    %v867 = vld [vmem:[#allocation7 + $0x2d0] sm:$0xff]
    %v868 = vld [vmem:[#allocation7 + $0x2d8] sm:$0xff]
    %v869 = vld [vmem:[#allocation7 + $0x2e0] sm:$0xff]
    %v870 = vld [vmem:[#allocation7 + $0x2e8] sm:$0xff]
    %v871 = vld [vmem:[#allocation7 + $0x2f0] sm:$0xff]
    %v872 = vld [vmem:[#allocation7 + $0x2f8] sm:$0xff]
    %v873 = vld [vmem:[#allocation7 + $0x300] sm:$0xff]
    %v874 = vld [vmem:[#allocation7 + $0x308] sm:$0xff]
    %v875 = vld [vmem:[#allocation7 + $0x310] sm:$0xff]
    %v876 = vld [vmem:[#allocation7 + $0x318] sm:$0xff]
    %v877 = vld [vmem:[#allocation7 + $0x320] sm:$0xff]
    %v878 = vld [vmem:[#allocation7 + $0x328] sm:$0xff]
    %v879 = vld [vmem:[#allocation7 + $0x330] sm:$0xff]
    %v880 = vld [vmem:[#allocation7 + $0x338] sm:$0xff]
    %v881 = vld [vmem:[#allocation7 + $0x340] sm:$0xff]
    %v882 = vld [vmem:[#allocation7 + $0x348] sm:$0xff]
    %v883 = vld [vmem:[#allocation7 + $0x350] sm:$0xff]
    %v884 = vld [vmem:[#allocation7 + $0x358] sm:$0xff]
    %v885 = vld [vmem:[#allocation7 + $0x360] sm:$0xff]
    %v886 = vld [vmem:[#allocation7 + $0x368] sm:$0xff]
    %v887 = vld [vmem:[#allocation7 + $0x370] sm:$0xff]
    %v888 = vld [vmem:[#allocation7 + $0x378] sm:$0xff]
    %v889 = vld [vmem:[#allocation7 + $0x380] sm:$0xff]
    %v890 = vld [vmem:[#allocation7 + $0x388] sm:$0xff]
    %v891 = vld [vmem:[#allocation7 + $0x390] sm:$0xff]
    %v892 = vld [vmem:[#allocation7 + $0x398] sm:$0xff]
    %v893 = vld [vmem:[#allocation7 + $0x3a0] sm:$0xff]
    %v894 = vld [vmem:[#allocation7 + $0x3a8] sm:$0xff]
    %v895 = vld [vmem:[#allocation7 + $0x3b0] sm:$0xff]
    %v896 = vld [vmem:[#allocation7 + $0x3b8] sm:$0xff]
    %v897 = vld [vmem:[#allocation7 + $0x3c0] sm:$0xff]
    %v898 = vld [vmem:[#allocation7 + $0x3c8] sm:$0xff]
    %v899 = vld [vmem:[#allocation7 + $0x3d0] sm:$0xff]
    %v900 = vld [vmem:[#allocation7 + $0x3d8] sm:$0xff]
    %v901 = vld [vmem:[#allocation7 + $0x3e0] sm:$0xff]
    %v902 = vld [vmem:[#allocation7 + $0x3e8] sm:$0xff]
    %v903 = vld [vmem:[#allocation7 + $0x3f0] sm:$0xff]
    %v904 = vld [vmem:[#allocation7 + $0x3f8] sm:$0xff]
    %v905 = vld [vmem:[#allocation7 + $0x400] sm:$0xff]
    %v906 = vld [vmem:[#allocation7 + $0x408] sm:$0xff]
    %v907 = vld [vmem:[#allocation7 + $0x410] sm:$0xff]
    %v908 = vld [vmem:[#allocation7 + $0x418] sm:$0xff]
    %v909 = vld [vmem:[#allocation7 + $0x420] sm:$0xff]
    %v910 = vld [vmem:[#allocation7 + $0x428] sm:$0xff]
    %v911 = vld [vmem:[#allocation7 + $0x430] sm:$0xff]
    %v912 = vld [vmem:[#allocation7 + $0x438] sm:$0xff]
    %v913 = vld [vmem:[#allocation7 + $0x440] sm:$0xff]
    %v914 = vld [vmem:[#allocation7 + $0x448] sm:$0xff]
    %v915 = vld [vmem:[#allocation7 + $0x450] sm:$0xff]
    %v916 = vld [vmem:[#allocation7 + $0x458] sm:$0xff]
    %v917 = vld [vmem:[#allocation7 + $0x460] sm:$0xff]
    %v918 = vld [vmem:[#allocation7 + $0x468] sm:$0xff]
    %v919 = vld [vmem:[#allocation7 + $0x470] sm:$0xff]
    %v920 = vld [vmem:[#allocation7 + $0x478] sm:$0xff]
    %v921 = vld [vmem:[#allocation7 + $0x480] sm:$0xff]
    %v922 = vld [vmem:[#allocation7 + $0x488] sm:$0xff]
    %v923 = vld [vmem:[#allocation7 + $0x490] sm:$0xff]
    %v924 = vld [vmem:[#allocation7 + $0x498] sm:$0xff]
    %v925 = vld [vmem:[#allocation7 + $0x4a0] sm:$0xff]
    %v926 = vld [vmem:[#allocation7 + $0x4a8] sm:$0xff]
    %v927 = vld [vmem:[#allocation7 + $0x4b0] sm:$0xff]
    %v928 = vld [vmem:[#allocation7 + $0x4b8] sm:$0xff]
    %v929 = vld [vmem:[#allocation7 + $0x4c0] sm:$0xff]
    %v930 = vld [vmem:[#allocation7 + $0x4c8] sm:$0xff]
    %v931 = vld [vmem:[#allocation7 + $0x4d0] sm:$0xff]
    %v932 = vld [vmem:[#allocation7 + $0x4d8] sm:$0xff]
    %v933 = vld [vmem:[#allocation7 + $0x4e0] sm:$0xff]
    %v934 = vld [vmem:[#allocation7 + $0x4e8] sm:$0xff]
    %v935 = vld [vmem:[#allocation7 + $0x4f0] sm:$0xff]
    %v936 = vld [vmem:[#allocation7 + $0x4f8] sm:$0xff]
    %v937 = vld [vmem:[#allocation7 + $0x500] sm:$0xff]
    %v938 = vld [vmem:[#allocation7 + $0x508] sm:$0xff]
    %v939 = vld [vmem:[#allocation7 + $0x510] sm:$0xff]
    %v940 = vld [vmem:[#allocation7 + $0x518] sm:$0xff]
    %v941 = vld [vmem:[#allocation7 + $0x520] sm:$0xff]
    %v942 = vld [vmem:[#allocation7 + $0x528] sm:$0xff]
    %v943 = vld [vmem:[#allocation7 + $0x530] sm:$0xff]
    %v944 = vld [vmem:[#allocation7 + $0x538] sm:$0xff]
    %v945 = vld [vmem:[#allocation7 + $0x540] sm:$0xff]
    %v946 = vld [vmem:[#allocation7 + $0x548] sm:$0xff]
    %v947 = vld [vmem:[#allocation7 + $0x550] sm:$0xff]
    %v948 = vld [vmem:[#allocation7 + $0x558] sm:$0xff]
    %v949 = vld [vmem:[#allocation7 + $0x560] sm:$0xff]
    %v950 = vld [vmem:[#allocation7 + $0x568] sm:$0xff]
    %v951 = vld [vmem:[#allocation7 + $0x570] sm:$0xff]
    %v952 = vld [vmem:[#allocation7 + $0x578] sm:$0xff]
    %v953 = vld [vmem:[#allocation7 + $0x580] sm:$0xff]
    %v954 = vld [vmem:[#allocation7 + $0x588] sm:$0xff]
    %v955 = vld [vmem:[#allocation7 + $0x590] sm:$0xff]
    %v956 = vld [vmem:[#allocation7 + $0x598] sm:$0xff]
    %v957 = vld [vmem:[#allocation7 + $0x5a0] sm:$0xff]
    %v958 = vld [vmem:[#allocation7 + $0x5a8] sm:$0xff]
    %v959 = vld [vmem:[#allocation7 + $0x5b0] sm:$0xff]
    %v960 = vld [vmem:[#allocation7 + $0x5b8] sm:$0xff]
    %v961 = vld [vmem:[#allocation7 + $0x5c0] sm:$0xff]
    %v962 = vld [vmem:[#allocation7 + $0x5c8] sm:$0xff]
    %v963 = vld [vmem:[#allocation7 + $0x5d0] sm:$0xff]
    %v964 = vld [vmem:[#allocation7 + $0x5d8] sm:$0xff]
    %v965 = vld [vmem:[#allocation7 + $0x5e0] sm:$0xff]
    %v966 = vld [vmem:[#allocation7 + $0x5e8] sm:$0xff]
    %v967 = vld [vmem:[#allocation7 + $0x5f0] sm:$0xff]
    %v968 = vld [vmem:[#allocation7 + $0x5f8] sm:$0xff]
    %v969 = vld [vmem:[#allocation7 + $0x600] sm:$0xff]
    %v970 = vld [vmem:[#allocation7 + $0x608] sm:$0xff]
    %v971 = vld [vmem:[#allocation7 + $0x610] sm:$0xff]
    %v972 = vld [vmem:[#allocation7 + $0x618] sm:$0xff]
    %v973 = vld [vmem:[#allocation7 + $0x620] sm:$0xff]
    %v974 = vld [vmem:[#allocation7 + $0x628] sm:$0xff]
    %v975 = vld [vmem:[#allocation7 + $0x630] sm:$0xff]
    %v976 = vld [vmem:[#allocation7 + $0x638] sm:$0xff]
    %v977 = vld [vmem:[#allocation7 + $0x640] sm:$0xff]
    %v978 = vld [vmem:[#allocation7 + $0x648] sm:$0xff]
    %v979 = vld [vmem:[#allocation7 + $0x650] sm:$0xff]
    %v980 = vld [vmem:[#allocation7 + $0x658] sm:$0xff]
    %v981 = vld [vmem:[#allocation7 + $0x660] sm:$0xff]
    %v982 = vld [vmem:[#allocation7 + $0x668] sm:$0xff]
    %v983 = vld [vmem:[#allocation7 + $0x670] sm:$0xff]
    %v984 = vld [vmem:[#allocation7 + $0x678] sm:$0xff]
    %v985 = vld [vmem:[#allocation7 + $0x680] sm:$0xff]
    %v986 = vld [vmem:[#allocation7 + $0x688] sm:$0xff]
    %v987 = vld [vmem:[#allocation7 + $0x690] sm:$0xff]
    %v988 = vld [vmem:[#allocation7 + $0x698] sm:$0xff]
    %v989 = vld [vmem:[#allocation7 + $0x6a0] sm:$0xff]
    %v990 = vld [vmem:[#allocation7 + $0x6a8] sm:$0xff]
    %v991 = vld [vmem:[#allocation7 + $0x6b0] sm:$0xff]
    %v992 = vld [vmem:[#allocation7 + $0x6b8] sm:$0xff]
    %v993 = vld [vmem:[#allocation7 + $0x6c0] sm:$0xff]
    %v994 = vld [vmem:[#allocation7 + $0x6c8] sm:$0xff]
    %v995 = vld [vmem:[#allocation7 + $0x6d0] sm:$0xff]
    %v996 = vld [vmem:[#allocation7 + $0x6d8] sm:$0xff]
    %v997 = vld [vmem:[#allocation7 + $0x6e0] sm:$0xff]
    %v998 = vld [vmem:[#allocation7 + $0x6e8] sm:$0xff]
    %v999 = vld [vmem:[#allocation7 + $0x6f0] sm:$0xff]
    %v1000 = vld [vmem:[#allocation7 + $0x6f8] sm:$0xff]
    %v1001 = vld [vmem:[#allocation7 + $0x700] sm:$0xff]
    %v1002 = vld [vmem:[#allocation7 + $0x708] sm:$0xff]
    %v1003 = vld [vmem:[#allocation7 + $0x710] sm:$0xff]
    %v1004 = vld [vmem:[#allocation7 + $0x718] sm:$0xff]
    %v1005 = vld [vmem:[#allocation7 + $0x720] sm:$0xff]
    %v1006 = vld [vmem:[#allocation7 + $0x728] sm:$0xff]
    %v1007 = vld [vmem:[#allocation7 + $0x730] sm:$0xff]
    %v1008 = vld [vmem:[#allocation7 + $0x738] sm:$0xff]
    %v1009 = vld [vmem:[#allocation7 + $0x740] sm:$0xff]
    %v1010 = vld [vmem:[#allocation7 + $0x748] sm:$0xff]
    %v1011 = vld [vmem:[#allocation7 + $0x750] sm:$0xff]
    %v1012 = vld [vmem:[#allocation7 + $0x758] sm:$0xff]
    %v1013 = vld [vmem:[#allocation7 + $0x760] sm:$0xff]
    %v1014 = vld [vmem:[#allocation7 + $0x768] sm:$0xff]
    %v1015 = vld [vmem:[#allocation7 + $0x770] sm:$0xff]
    %v1016 = vld [vmem:[#allocation7 + $0x778] sm:$0xff]
    %v1017 = vld [vmem:[#allocation7 + $0x780] sm:$0xff]
    %v1018 = vld [vmem:[#allocation7 + $0x788] sm:$0xff]
    %v1019 = vld [vmem:[#allocation7 + $0x790] sm:$0xff]
    %v1020 = vld [vmem:[#allocation7 + $0x798] sm:$0xff]
    %v1021 = vld [vmem:[#allocation7 + $0x7a0] sm:$0xff]
    %v1022 = vld [vmem:[#allocation7 + $0x7a8] sm:$0xff]
    %v1023 = vld [vmem:[#allocation7 + $0x7b0] sm:$0xff]
    %v1024 = vld [vmem:[#allocation7 + $0x7b8] sm:$0xff]
    %v1025 = vld [vmem:[#allocation7 + $0x7c0] sm:$0xff]
    %v1026 = vld [vmem:[#allocation7 + $0x7c8] sm:$0xff]
    %v1027 = vld [vmem:[#allocation7 + $0x7d0] sm:$0xff]
    %v1028 = vld [vmem:[#allocation7 + $0x7d8] sm:$0xff]
    %v1029 = vld [vmem:[#allocation7 + $0x7e0] sm:$0xff]
    %v1030 = vld [vmem:[#allocation7 + $0x7e8] sm:$0xff]
    %v1031 = vld [vmem:[#allocation7 + $0x7f0] sm:$0xff]
    %v1032 = vld [vmem:[#allocation7 + $0x7f8] sm:$0xff]
    %v1033 = vld [vmem:[#allocation7 + $0x800] sm:$0xff]
    %v1034 = vld [vmem:[#allocation7 + $0x808] sm:$0xff]
    %v1035 = vld [vmem:[#allocation7 + $0x810] sm:$0xff]
    %v1036 = vld [vmem:[#allocation7 + $0x818] sm:$0xff]
    %v1037 = vld [vmem:[#allocation7 + $0x820] sm:$0xff]
    %v1038 = vld [vmem:[#allocation7 + $0x828] sm:$0xff]
    %v1039 = vld [vmem:[#allocation7 + $0x830] sm:$0xff]
    %v1040 = vld [vmem:[#allocation7 + $0x838] sm:$0xff]
    %v1041 = vld [vmem:[#allocation7 + $0x840] sm:$0xff]
    %v1042 = vld [vmem:[#allocation7 + $0x848] sm:$0xff]
    %v1043 = vld [vmem:[#allocation7 + $0x850] sm:$0xff]
    %v1044 = vld [vmem:[#allocation7 + $0x858] sm:$0xff]
    %v1045 = vld [vmem:[#allocation7 + $0x860] sm:$0xff]
    %v1046 = vld [vmem:[#allocation7 + $0x868] sm:$0xff]
    %v1047 = vld [vmem:[#allocation7 + $0x870] sm:$0xff]
    %v1048 = vld [vmem:[#allocation7 + $0x878] sm:$0xff]
    %v1049 = vld [vmem:[#allocation7 + $0x880] sm:$0xff]
    %v1050 = vld [vmem:[#allocation7 + $0x888] sm:$0xff]
    %v1051 = vld [vmem:[#allocation7 + $0x890] sm:$0xff]
    %v1052 = vld [vmem:[#allocation7 + $0x898] sm:$0xff]
    %v1053 = vld [vmem:[#allocation7 + $0x8a0] sm:$0xff]
    %v1054 = vld [vmem:[#allocation7 + $0x8a8] sm:$0xff]
    %v1055 = vld [vmem:[#allocation7 + $0x8b0] sm:$0xff]
    %v1056 = vld [vmem:[#allocation7 + $0x8b8] sm:$0xff]
    %v1057 = vld [vmem:[#allocation7 + $0x8c0] sm:$0xff]
    %v1058 = vld [vmem:[#allocation7 + $0x8c8] sm:$0xff]
    %v1059 = vld [vmem:[#allocation7 + $0x8d0] sm:$0xff]
    %v1060 = vld [vmem:[#allocation7 + $0x8d8] sm:$0xff]
    %v1061 = vld [vmem:[#allocation7 + $0x8e0] sm:$0xff]
    %v1062 = vld [vmem:[#allocation7 + $0x8e8] sm:$0xff]
    %v1063 = vld [vmem:[#allocation7 + $0x8f0] sm:$0xff]
    %v1064 = vld [vmem:[#allocation7 + $0x8f8] sm:$0xff]
    %v1065 = vld [vmem:[#allocation7 + $0x900] sm:$0xff]
    %v1066 = vld [vmem:[#allocation7 + $0x908] sm:$0xff]
    %v1067 = vld [vmem:[#allocation7 + $0x910] sm:$0xff]
    %v1068 = vld [vmem:[#allocation7 + $0x918] sm:$0xff]
    %v1069 = vld [vmem:[#allocation7 + $0x920] sm:$0xff]
    %v1070 = vld [vmem:[#allocation7 + $0x928] sm:$0xff]
    %v1071 = vld [vmem:[#allocation7 + $0x930] sm:$0xff]
    %v1072 = vld [vmem:[#allocation7 + $0x938] sm:$0xff]
    %v1073 = vld [vmem:[#allocation7 + $0x940] sm:$0xff]
    %v1074 = vld [vmem:[#allocation7 + $0x948] sm:$0xff]
    %v1075 = vld [vmem:[#allocation7 + $0x950] sm:$0xff]
    %v1076 = vld [vmem:[#allocation7 + $0x958] sm:$0xff]
    %v1077 = vld [vmem:[#allocation7 + $0x960] sm:$0xff]
    %v1078 = vld [vmem:[#allocation7 + $0x968] sm:$0xff]
    %v1079 = vld [vmem:[#allocation7 + $0x970] sm:$0xff]
    %v1080 = vld [vmem:[#allocation7 + $0x978] sm:$0xff]
    %v1081 = vld [vmem:[#allocation7 + $0x980] sm:$0xff]
    %v1082 = vld [vmem:[#allocation7 + $0x988] sm:$0xff]
    %v1083 = vld [vmem:[#allocation7 + $0x990] sm:$0xff]
    %v1084 = vld [vmem:[#allocation7 + $0x998] sm:$0xff]
    %v1085 = vld [vmem:[#allocation7 + $0x9a0] sm:$0xff]
    %v1086 = vld [vmem:[#allocation7 + $0x9a8] sm:$0xff]
    %v1087 = vld [vmem:[#allocation7 + $0x9b0] sm:$0xff]
    %v1088 = vld [vmem:[#allocation7 + $0x9b8] sm:$0xff]
    %v1089 = vld [vmem:[#allocation7 + $0x9c0] sm:$0xff]
    %v1090 = vld [vmem:[#allocation7 + $0x9c8] sm:$0xff]
    %v1091 = vld [vmem:[#allocation7 + $0x9d0] sm:$0xff]
    %v1092 = vld [vmem:[#allocation7 + $0x9d8] sm:$0xff]
    %v1093 = vld [vmem:[#allocation7 + $0x9e0] sm:$0xff]
    %v1094 = vld [vmem:[#allocation7 + $0x9e8] sm:$0xff]
    %v1095 = vld [vmem:[#allocation7 + $0x9f0] sm:$0xff]
    %v1096 = vld [vmem:[#allocation7 + $0x9f8] sm:$0xff]
    %v1097 = vld [vmem:[#allocation7 + $0xa00] sm:$0xff]
    %v1098 = vld [vmem:[#allocation7 + $0xa08] sm:$0xff]
    %v1099 = vld [vmem:[#allocation7 + $0xa10] sm:$0xff]
    %v1100 = vld [vmem:[#allocation7 + $0xa18] sm:$0xff]
    %v1101 = vld [vmem:[#allocation7 + $0xa20] sm:$0xff]
    %v1102 = vld [vmem:[#allocation7 + $0xa28] sm:$0xff]
    %v1103 = vld [vmem:[#allocation7 + $0xa30] sm:$0xff]
    %v1104 = vld [vmem:[#allocation7 + $0xa38] sm:$0xff]
    %v1105 = vld [vmem:[#allocation7 + $0xa40] sm:$0xff]
    %v1106 = vld [vmem:[#allocation7 + $0xa48] sm:$0xff]
    %v1107 = vld [vmem:[#allocation7 + $0xa50] sm:$0xff]
    %v1108 = vld [vmem:[#allocation7 + $0xa58] sm:$0xff]
    %v1109 = vld [vmem:[#allocation7 + $0xa60] sm:$0xff]
    %v1110 = vld [vmem:[#allocation7 + $0xa68] sm:$0xff]
    %v1111 = vld [vmem:[#allocation7 + $0xa70] sm:$0xff]
    %v1112 = vld [vmem:[#allocation7 + $0xa78] sm:$0xff]
    %v1113 = vld [vmem:[#allocation7 + $0xa80] sm:$0xff]
    %v1114 = vld [vmem:[#allocation7 + $0xa88] sm:$0xff]
    %v1115 = vld [vmem:[#allocation7 + $0xa90] sm:$0xff]
    %v1116 = vld [vmem:[#allocation7 + $0xa98] sm:$0xff]
    %v1117 = vld [vmem:[#allocation7 + $0xaa0] sm:$0xff]
    %v1118 = vld [vmem:[#allocation7 + $0xaa8] sm:$0xff]
    %v1119 = vld [vmem:[#allocation7 + $0xab0] sm:$0xff]
    %v1120 = vld [vmem:[#allocation7 + $0xab8] sm:$0xff]
    %v1121 = vld [vmem:[#allocation7 + $0xac0] sm:$0xff]
    %v1122 = vld [vmem:[#allocation7 + $0xac8] sm:$0xff]
    %v1123 = vld [vmem:[#allocation7 + $0xad0] sm:$0xff]
    %v1124 = vld [vmem:[#allocation7 + $0xad8] sm:$0xff]
    %v1125 = vld [vmem:[#allocation7 + $0xae0] sm:$0xff]
    %v1126 = vld [vmem:[#allocation7 + $0xae8] sm:$0xff]
    %v1127 = vld [vmem:[#allocation7 + $0xaf0] sm:$0xff]
    %v1128 = vld [vmem:[#allocation7 + $0xaf8] sm:$0xff]
    %v1129 = vld [vmem:[#allocation7 + $0xb00] sm:$0xff]
    %v1130 = vld [vmem:[#allocation7 + $0xb08] sm:$0xff]
    %v1131 = vld [vmem:[#allocation7 + $0xb10] sm:$0xff]
    %v1132 = vld [vmem:[#allocation7 + $0xb18] sm:$0xff]
    %v1133 = vld [vmem:[#allocation7 + $0xb20] sm:$0xff]
    %v1134 = vld [vmem:[#allocation7 + $0xb28] sm:$0xff]
    %v1135 = vld [vmem:[#allocation7 + $0xb30] sm:$0xff]
    %v1136 = vld [vmem:[#allocation7 + $0xb38] sm:$0xff]
    %v1137 = vld [vmem:[#allocation7 + $0xb40] sm:$0xff]
    %v1138 = vld [vmem:[#allocation7 + $0xb48] sm:$0xff]
    %v1139 = vld [vmem:[#allocation7 + $0xb50] sm:$0xff]
    %v1140 = vld [vmem:[#allocation7 + $0xb58] sm:$0xff]
    %v1141 = vld [vmem:[#allocation7 + $0xb60] sm:$0xff]
    %v1142 = vld [vmem:[#allocation7 + $0xb68] sm:$0xff]
    %v1143 = vld [vmem:[#allocation7 + $0xb70] sm:$0xff]
    %v1144 = vld [vmem:[#allocation7 + $0xb78] sm:$0xff]
    %v1145 = vld [vmem:[#allocation7 + $0xb80] sm:$0xff]
    %v1146 = vld [vmem:[#allocation7 + $0xb88] sm:$0xff]
    %v1147 = vld [vmem:[#allocation7 + $0xb90] sm:$0xff]
    %v1148 = vld [vmem:[#allocation7 + $0xb98] sm:$0xff]
    %v1149 = vld [vmem:[#allocation7 + $0xba0] sm:$0xff]
    %v1150 = vld [vmem:[#allocation7 + $0xba8] sm:$0xff]
    %v1151 = vld [vmem:[#allocation7 + $0xbb0] sm:$0xff]
    %v1152 = vld [vmem:[#allocation7 + $0xbb8] sm:$0xff]
    %v1153 = vld [vmem:[#allocation7 + $0xbc0] sm:$0xff]
    %v1154 = vld [vmem:[#allocation7 + $0xbc8] sm:$0xff]
    %v1155 = vld [vmem:[#allocation7 + $0xbd0] sm:$0xff]
    %v1156 = vld [vmem:[#allocation7 + $0xbd8] sm:$0xff]
    %v1157 = vld [vmem:[#allocation7 + $0xbe0] sm:$0xff]
    %v1158 = vld [vmem:[#allocation7 + $0xbe8] sm:$0xff]
    %v1159 = vld [vmem:[#allocation7 + $0xbf0] sm:$0xff]
    %v1160 = vld [vmem:[#allocation7 + $0xbf8] sm:$0xff]
    %v1161 = vld [vmem:[#allocation7 + $0xc00] sm:$0xff]
    %v1162 = vld [vmem:[#allocation7 + $0xc08] sm:$0xff]
    %v1163 = vld [vmem:[#allocation7 + $0xc10] sm:$0xff]
    %v1164 = vld [vmem:[#allocation7 + $0xc18] sm:$0xff]
    %v1165 = vld [vmem:[#allocation7 + $0xc20] sm:$0xff]
    %v1166 = vld [vmem:[#allocation7 + $0xc28] sm:$0xff]
    %v1167 = vld [vmem:[#allocation7 + $0xc30] sm:$0xff]
    %v1168 = vld [vmem:[#allocation7 + $0xc38] sm:$0xff]
    %v1169 = vld [vmem:[#allocation7 + $0xc40] sm:$0xff]
    %v1170 = vld [vmem:[#allocation7 + $0xc48] sm:$0xff]
    %v1171 = vld [vmem:[#allocation7 + $0xc50] sm:$0xff]
    %v1172 = vld [vmem:[#allocation7 + $0xc58] sm:$0xff]
    %v1173 = vld [vmem:[#allocation7 + $0xc60] sm:$0xff]
    %v1174 = vld [vmem:[#allocation7 + $0xc68] sm:$0xff]
    %v1175 = vld [vmem:[#allocation7 + $0xc70] sm:$0xff]
    %v1176 = vld [vmem:[#allocation7 + $0xc78] sm:$0xff]
    %v1177 = vld [vmem:[#allocation7 + $0xc80] sm:$0xff]
    %v1178 = vld [vmem:[#allocation7 + $0xc88] sm:$0xff]
    %v1179 = vld [vmem:[#allocation7 + $0xc90] sm:$0xff]
    %v1180 = vld [vmem:[#allocation7 + $0xc98] sm:$0xff]
    %v1181 = vld [vmem:[#allocation7 + $0xca0] sm:$0xff]
    %v1182 = vld [vmem:[#allocation7 + $0xca8] sm:$0xff]
    %v1183 = vld [vmem:[#allocation7 + $0xcb0] sm:$0xff]
    %v1184 = vld [vmem:[#allocation7 + $0xcb8] sm:$0xff]
    %v1185 = vld [vmem:[#allocation7 + $0xcc0] sm:$0xff]
    %v1186 = vld [vmem:[#allocation7 + $0xcc8] sm:$0xff]
    %v1187 = vld [vmem:[#allocation7 + $0xcd0] sm:$0xff]
    %v1188 = vld [vmem:[#allocation7 + $0xcd8] sm:$0xff]
    %v1189 = vld [vmem:[#allocation7 + $0xce0] sm:$0xff]
    %v1190 = vld [vmem:[#allocation7 + $0xce8] sm:$0xff]
    %v1191 = vld [vmem:[#allocation7 + $0xcf0] sm:$0xff]
    %v1192 = vld [vmem:[#allocation7 + $0xcf8] sm:$0xff]
    %v1193 = vld [vmem:[#allocation7 + $0xd00] sm:$0xff]
    %v1194 = vld [vmem:[#allocation7 + $0xd08] sm:$0xff]
    %v1195 = vld [vmem:[#allocation7 + $0xd10] sm:$0xff]
    %v1196 = vld [vmem:[#allocation7 + $0xd18] sm:$0xff]
    %v1197 = vld [vmem:[#allocation7 + $0xd20] sm:$0xff]
    %v1198 = vld [vmem:[#allocation7 + $0xd28] sm:$0xff]
    %v1199 = vld [vmem:[#allocation7 + $0xd30] sm:$0xff]
    %v1200 = vld [vmem:[#allocation7 + $0xd38] sm:$0xff]
    %v1201 = vld [vmem:[#allocation7 + $0xd40] sm:$0xff]
    %v1202 = vld [vmem:[#allocation7 + $0xd48] sm:$0xff]
    %v1203 = vld [vmem:[#allocation7 + $0xd50] sm:$0xff]
    %v1204 = vld [vmem:[#allocation7 + $0xd58] sm:$0xff]
    %v1205 = vld [vmem:[#allocation7 + $0xd60] sm:$0xff]
    %v1206 = vld [vmem:[#allocation7 + $0xd68] sm:$0xff]
    %v1207 = vld [vmem:[#allocation7 + $0xd70] sm:$0xff]
    %v1208 = vld [vmem:[#allocation7 + $0xd78] sm:$0xff]
    %v1209 = vld [vmem:[#allocation7 + $0xd80] sm:$0xff]
    %v1210 = vld [vmem:[#allocation7 + $0xd88] sm:$0xff]
    %v1211 = vld [vmem:[#allocation7 + $0xd90] sm:$0xff]
    %v1212 = vld [vmem:[#allocation7 + $0xd98] sm:$0xff]
    %v1213 = vld [vmem:[#allocation7 + $0xda0] sm:$0xff]
    %v1214 = vld [vmem:[#allocation7 + $0xda8] sm:$0xff]
    %v1215 = vld [vmem:[#allocation7 + $0xdb0] sm:$0xff]
    %v1216 = vld [vmem:[#allocation7 + $0xdb8] sm:$0xff]
    %v1217 = vld [vmem:[#allocation7 + $0xdc0] sm:$0xff]
    %v1218 = vld [vmem:[#allocation7 + $0xdc8] sm:$0xff]
    %v1219 = vld [vmem:[#allocation7 + $0xdd0] sm:$0xff]
    %v1220 = vld [vmem:[#allocation7 + $0xdd8] sm:$0xff]
    %v1221 = vld [vmem:[#allocation7 + $0xde0] sm:$0xff]
    %v1222 = vld [vmem:[#allocation7 + $0xde8] sm:$0xff]
    %v1223 = vld [vmem:[#allocation7 + $0xdf0] sm:$0xff]
    %v1224 = vld [vmem:[#allocation7 + $0xdf8] sm:$0xff]
    %v1225 = vld [vmem:[#allocation7 + $0xe00] sm:$0xff]
    %v1226 = vld [vmem:[#allocation7 + $0xe08] sm:$0xff]
    %v1227 = vld [vmem:[#allocation7 + $0xe10] sm:$0xff]
    %v1228 = vld [vmem:[#allocation7 + $0xe18] sm:$0xff]
    %v1229 = vld [vmem:[#allocation7 + $0xe20] sm:$0xff]
    %v1230 = vld [vmem:[#allocation7 + $0xe28] sm:$0xff]
    %v1231 = vld [vmem:[#allocation7 + $0xe30] sm:$0xff]
    %v1232 = vld [vmem:[#allocation7 + $0xe38] sm:$0xff]
    %v1233 = vld [vmem:[#allocation7 + $0xe40] sm:$0xff]
    %v1234 = vld [vmem:[#allocation7 + $0xe48] sm:$0xff]
    %v1235 = vld [vmem:[#allocation7 + $0xe50] sm:$0xff]
    %v1236 = vld [vmem:[#allocation7 + $0xe58] sm:$0xff]
    %v1237 = vld [vmem:[#allocation7 + $0xe60] sm:$0xff]
    %v1238 = vld [vmem:[#allocation7 + $0xe68] sm:$0xff]
    %v1239 = vld [vmem:[#allocation7 + $0xe70] sm:$0xff]
    %v1240 = vld [vmem:[#allocation7 + $0xe78] sm:$0xff]
    %v1241 = vld [vmem:[#allocation7 + $0xe80] sm:$0xff]
    %v1242 = vld [vmem:[#allocation7 + $0xe88] sm:$0xff]
    %v1243 = vld [vmem:[#allocation7 + $0xe90] sm:$0xff]
    %v1244 = vld [vmem:[#allocation7 + $0xe98] sm:$0xff]
    %v1245 = vld [vmem:[#allocation7 + $0xea0] sm:$0xff]
    %v1246 = vld [vmem:[#allocation7 + $0xea8] sm:$0xff]
    %v1247 = vld [vmem:[#allocation7 + $0xeb0] sm:$0xff]
    %v1248 = vld [vmem:[#allocation7 + $0xeb8] sm:$0xff]
    %v1249 = vld [vmem:[#allocation7 + $0xec0] sm:$0xff]
    %v1250 = vld [vmem:[#allocation7 + $0xec8] sm:$0xff]
    %v1251 = vld [vmem:[#allocation7 + $0xed0] sm:$0xff]
    %v1252 = vld [vmem:[#allocation7 + $0xed8] sm:$0xff]
    %v1253 = vld [vmem:[#allocation7 + $0xee0] sm:$0xff]
    %v1254 = vld [vmem:[#allocation7 + $0xee8] sm:$0xff]
    %v1255 = vld [vmem:[#allocation7 + $0xef0] sm:$0xff]
    %v1256 = vld [vmem:[#allocation7 + $0xef8] sm:$0xff]
    %v1257 = vld [vmem:[#allocation7 + $0xf00] sm:$0xff]
    %v1258 = vld [vmem:[#allocation7 + $0xf08] sm:$0xff]
    %v1259 = vld [vmem:[#allocation7 + $0xf10] sm:$0xff]
    %v1260 = vld [vmem:[#allocation7 + $0xf18] sm:$0xff]
    %v1261 = vld [vmem:[#allocation7 + $0xf20] sm:$0xff]
    %v1262 = vld [vmem:[#allocation7 + $0xf28] sm:$0xff]
    %v1263 = vld [vmem:[#allocation7 + $0xf30] sm:$0xff]
    %v1264 = vld [vmem:[#allocation7 + $0xf38] sm:$0xff]
    %v1265 = vld [vmem:[#allocation7 + $0xf40] sm:$0xff]
    %v1266 = vld [vmem:[#allocation7 + $0xf48] sm:$0xff]
    %v1267 = vld [vmem:[#allocation7 + $0xf50] sm:$0xff]
    %v1268 = vld [vmem:[#allocation7 + $0xf58] sm:$0xff]
    %v1269 = vld [vmem:[#allocation7 + $0xf60] sm:$0xff]
    %v1270 = vld [vmem:[#allocation7 + $0xf68] sm:$0xff]
    %v1271 = vld [vmem:[#allocation7 + $0xf70] sm:$0xff]
    %v1272 = vld [vmem:[#allocation7 + $0xf78] sm:$0xff]
    %v1273 = vld [vmem:[#allocation7 + $0xf80] sm:$0xff]
    %v1274 = vld [vmem:[#allocation7 + $0xf88] sm:$0xff]
    %v1275 = vld [vmem:[#allocation7 + $0xf90] sm:$0xff]
    %v1276 = vld [vmem:[#allocation7 + $0xf98] sm:$0xff]
    %v1277 = vld [vmem:[#allocation7 + $0xfa0] sm:$0xff]
    %v1278 = vld [vmem:[#allocation7 + $0xfa8] sm:$0xff]
    %v1279 = vld [vmem:[#allocation7 + $0xfb0] sm:$0xff]
    %v1280 = vld [vmem:[#allocation7 + $0xfb8] sm:$0xff]
    %v1281 = vld [vmem:[#allocation7 + $0xfc0] sm:$0xff]
    %v1282 = vld [vmem:[#allocation7 + $0xfc8] sm:$0xff]
    %v1283 = vld [vmem:[#allocation7 + $0xfd0] sm:$0xff]
    %v1284 = vld [vmem:[#allocation7 + $0xfd8] sm:$0xff]
    %v1285 = vld [vmem:[#allocation7 + $0xfe0] sm:$0xff]
    %v1286 = vld [vmem:[#allocation7 + $0xfe8] sm:$0xff]
    %v1287 = vld [vmem:[#allocation7 + $0xff0] sm:$0xff]
    %v1288 = vld [vmem:[#allocation7 + $0xff8] sm:$0xff]
    %v1289 = vld [vmem:[#allocation7 + $0x1000] sm:$0xff]
    %v1290 = vld [vmem:[#allocation7 + $0x1008] sm:$0xff]
    %v1291 = vld [vmem:[#allocation7 + $0x1010] sm:$0xff]
    %v1292 = vld [vmem:[#allocation7 + $0x1018] sm:$0xff]
    %v1293 = vld [vmem:[#allocation7 + $0x1020] sm:$0xff]
    %v1294 = vld [vmem:[#allocation7 + $0x1028] sm:$0xff]
    %v1295 = vld [vmem:[#allocation7 + $0x1030] sm:$0xff]
    %v1296 = vld [vmem:[#allocation7 + $0x1038] sm:$0xff]
    %v1297 = vld [vmem:[#allocation7 + $0x1040] sm:$0xff]
    %v1298 = vld [vmem:[#allocation7 + $0x1048] sm:$0xff]
    %v1299 = vld [vmem:[#allocation7 + $0x1050] sm:$0xff]
    %v1300 = vld [vmem:[#allocation7 + $0x1058] sm:$0xff]
    %v1301 = vld [vmem:[#allocation7 + $0x1060] sm:$0xff]
    %v1302 = vld [vmem:[#allocation7 + $0x1068] sm:$0xff]
    %v1303 = vld [vmem:[#allocation7 + $0x1070] sm:$0xff]
    %v1304 = vld [vmem:[#allocation7 + $0x1078] sm:$0xff]
    %v1305 = vld [vmem:[#allocation7 + $0x1080] sm:$0xff]
    %v1306 = vld [vmem:[#allocation7 + $0x1088] sm:$0xff]
    %v1307 = vld [vmem:[#allocation7 + $0x1090] sm:$0xff]
    %v1308 = vld [vmem:[#allocation7 + $0x1098] sm:$0xff]
    %v1309 = vld [vmem:[#allocation7 + $0x10a0] sm:$0xff]
    %v1310 = vld [vmem:[#allocation7 + $0x10a8] sm:$0xff]
    %v1311 = vld [vmem:[#allocation7 + $0x10b0] sm:$0xff]
    %v1312 = vld [vmem:[#allocation7 + $0x10b8] sm:$0xff]
    %v1313 = vld [vmem:[#allocation7 + $0x10c0] sm:$0xff]
    %v1314 = vld [vmem:[#allocation7 + $0x10c8] sm:$0xff]
    %v1315 = vld [vmem:[#allocation7 + $0x10d0] sm:$0xff]
    %v1316 = vld [vmem:[#allocation7 + $0x10d8] sm:$0xff]
    %v1317 = vld [vmem:[#allocation7 + $0x10e0] sm:$0xff]
    %v1318 = vld [vmem:[#allocation7 + $0x10e8] sm:$0xff]
    %v1319 = vld [vmem:[#allocation7 + $0x10f0] sm:$0xff]
    %v1320 = vld [vmem:[#allocation7 + $0x10f8] sm:$0xff]
    %v1321 = vld [vmem:[#allocation7 + $0x1100] sm:$0xff]
    %v1322 = vld [vmem:[#allocation7 + $0x1108] sm:$0xff]
    %v1323 = vld [vmem:[#allocation7 + $0x1110] sm:$0xff]
    %v1324 = vld [vmem:[#allocation7 + $0x1118] sm:$0xff]
    %v1325 = vld [vmem:[#allocation7 + $0x1120] sm:$0xff]
    %v1326 = vld [vmem:[#allocation7 + $0x1128] sm:$0xff]
    %v1327 = vld [vmem:[#allocation7 + $0x1130] sm:$0xff]
    %v1328 = vld [vmem:[#allocation7 + $0x1138] sm:$0xff]
    %v1329 = vld [vmem:[#allocation7 + $0x1140] sm:$0xff]
    %v1330 = vld [vmem:[#allocation7 + $0x1148] sm:$0xff]
    %v1331 = vld [vmem:[#allocation7 + $0x1150] sm:$0xff]
    %v1332 = vld [vmem:[#allocation7 + $0x1158] sm:$0xff]
    %v1333 = vld [vmem:[#allocation7 + $0x1160] sm:$0xff]
    %v1334 = vld [vmem:[#allocation7 + $0x1168] sm:$0xff]
    %v1335 = vld [vmem:[#allocation7 + $0x1170] sm:$0xff]
    %v1336 = vld [vmem:[#allocation7 + $0x1178] sm:$0xff]
    %v1337 = vld [vmem:[#allocation7 + $0x1180] sm:$0xff]
    %v1338 = vld [vmem:[#allocation7 + $0x1188] sm:$0xff]
    %v1339 = vld [vmem:[#allocation7 + $0x1190] sm:$0xff]
    %v1340 = vld [vmem:[#allocation7 + $0x1198] sm:$0xff]
    %v1341 = vld [vmem:[#allocation7 + $0x11a0] sm:$0xff]
    %v1342 = vld [vmem:[#allocation7 + $0x11a8] sm:$0xff]
    %v1343 = vld [vmem:[#allocation7 + $0x11b0] sm:$0xff]
    %v1344 = vld [vmem:[#allocation7 + $0x11b8] sm:$0xff]
    %v1345 = vld [vmem:[#allocation7 + $0x11c0] sm:$0xff]
    %v1346 = vld [vmem:[#allocation7 + $0x11c8] sm:$0xff]
    %v1347 = vld [vmem:[#allocation7 + $0x11d0] sm:$0xff]
    %v1348 = vld [vmem:[#allocation7 + $0x11d8] sm:$0xff]
    %v1349 = vld [vmem:[#allocation7 + $0x11e0] sm:$0xff]
    %v1350 = vld [vmem:[#allocation7 + $0x11e8] sm:$0xff]
    %v1351 = vld [vmem:[#allocation7 + $0x11f0] sm:$0xff]
    %v1352 = vld [vmem:[#allocation7 + $0x11f8] sm:$0xff]
    %v1353 = vld [vmem:[#allocation7 + $0x1200] sm:$0xff]
    %v1354 = vld [vmem:[#allocation7 + $0x1208] sm:$0xff]
    %v1355 = vld [vmem:[#allocation7 + $0x1210] sm:$0xff]
    %v1356 = vld [vmem:[#allocation7 + $0x1218] sm:$0xff]
    %v1357 = vld [vmem:[#allocation7 + $0x1220] sm:$0xff]
    %v1358 = vld [vmem:[#allocation7 + $0x1228] sm:$0xff]
    %v1359 = vld [vmem:[#allocation7 + $0x1230] sm:$0xff]
    %v1360 = vld [vmem:[#allocation7 + $0x1238] sm:$0xff]
    %v1361 = vld [vmem:[#allocation7 + $0x1240] sm:$0xff]
    %v1362 = vld [vmem:[#allocation7 + $0x1248] sm:$0xff]
    %v1363 = vld [vmem:[#allocation7 + $0x1250] sm:$0xff]
    %v1364 = vld [vmem:[#allocation7 + $0x1258] sm:$0xff]
    %v1365 = vld [vmem:[#allocation7 + $0x1260] sm:$0xff]
    %v1366 = vld [vmem:[#allocation7 + $0x1268] sm:$0xff]
    %v1367 = vld [vmem:[#allocation7 + $0x1270] sm:$0xff]
    %v1368 = vld [vmem:[#allocation7 + $0x1278] sm:$0xff]
    %v1369 = vld [vmem:[#allocation7 + $0x1280] sm:$0xff]
    %v1370 = vld [vmem:[#allocation7 + $0x1288] sm:$0xff]
    %v1371 = vld [vmem:[#allocation7 + $0x1290] sm:$0xff]
    %v1372 = vld [vmem:[#allocation7 + $0x1298] sm:$0xff]
    %v1373 = vld [vmem:[#allocation7 + $0x12a0] sm:$0xff]
    %v1374 = vld [vmem:[#allocation7 + $0x12a8] sm:$0xff]
    %v1375 = vld [vmem:[#allocation7 + $0x12b0] sm:$0xff]
    %v1376 = vld [vmem:[#allocation7 + $0x12b8] sm:$0xff]
    %v1377 = vld [vmem:[#allocation7 + $0x12c0] sm:$0xff]
    %v1378 = vld [vmem:[#allocation7 + $0x12c8] sm:$0xff]
    %v1379 = vld [vmem:[#allocation7 + $0x12d0] sm:$0xff]
    %v1380 = vld [vmem:[#allocation7 + $0x12d8] sm:$0xff]
    %v1381 = vld [vmem:[#allocation7 + $0x12e0] sm:$0xff]
    %v1382 = vld [vmem:[#allocation7 + $0x12e8] sm:$0xff]
    %v1383 = vld [vmem:[#allocation7 + $0x12f0] sm:$0xff]
    %v1384 = vld [vmem:[#allocation7 + $0x12f8] sm:$0xff]
    %v1385 = vld [vmem:[#allocation7 + $0x1300] sm:$0xff]
    %v1386 = vld [vmem:[#allocation7 + $0x1308] sm:$0xff]
    %v1387 = vld [vmem:[#allocation7 + $0x1310] sm:$0xff]
    %v1388 = vld [vmem:[#allocation7 + $0x1318] sm:$0xff]
    %v1389 = vld [vmem:[#allocation7 + $0x1320] sm:$0xff]
    %v1390 = vld [vmem:[#allocation7 + $0x1328] sm:$0xff]
    %v1391 = vld [vmem:[#allocation7 + $0x1330] sm:$0xff]
    %v1392 = vld [vmem:[#allocation7 + $0x1338] sm:$0xff]
    %v1393 = vld [vmem:[#allocation7 + $0x1340] sm:$0xff]
    %v1394 = vld [vmem:[#allocation7 + $0x1348] sm:$0xff]
    %v1395 = vld [vmem:[#allocation7 + $0x1350] sm:$0xff]
    %v1396 = vld [vmem:[#allocation7 + $0x1358] sm:$0xff]
    %v1397 = vld [vmem:[#allocation7 + $0x1360] sm:$0xff]
    %v1398 = vld [vmem:[#allocation7 + $0x1368] sm:$0xff]
    %v1399 = vld [vmem:[#allocation7 + $0x1370] sm:$0xff]
    %v1400 = vld [vmem:[#allocation7 + $0x1378] sm:$0xff]
    %v1401 = vld [vmem:[#allocation7 + $0x1380] sm:$0xff]
    %v1402 = vld [vmem:[#allocation7 + $0x1388] sm:$0xff]
    %v1403 = vld [vmem:[#allocation7 + $0x1390] sm:$0xff]
    %v1404 = vld [vmem:[#allocation7 + $0x1398] sm:$0xff]
    %v1405 = vld [vmem:[#allocation7 + $0x13a0] sm:$0xff]
    %v1406 = vld [vmem:[#allocation7 + $0x13a8] sm:$0xff]
    %v1407 = vld [vmem:[#allocation7 + $0x13b0] sm:$0xff]
    %v1408 = vld [vmem:[#allocation7 + $0x13b8] sm:$0xff]
    %v1409 = vld [vmem:[#allocation7 + $0x13c0] sm:$0xff]
    %v1410 = vld [vmem:[#allocation7 + $0x13c8] sm:$0xff]
    %v1411 = vld [vmem:[#allocation7 + $0x13d0] sm:$0xff]
    %v1412 = vld [vmem:[#allocation7 + $0x13d8] sm:$0xff]
    %v1413 = vld [vmem:[#allocation7 + $0x13e0] sm:$0xff]
    %v1414 = vld [vmem:[#allocation7 + $0x13e8] sm:$0xff]
    %v1415 = vld [vmem:[#allocation7 + $0x13f0] sm:$0xff]
    %v1416 = vld [vmem:[#allocation7 + $0x13f8] sm:$0xff]
    %v1417 = vld [vmem:[#allocation7 + $0x1400] sm:$0xff]
    %v1418 = vld [vmem:[#allocation7 + $0x1408] sm:$0xff]
    %v1419 = vld [vmem:[#allocation7 + $0x1410] sm:$0xff]
    %v1420 = vld [vmem:[#allocation7 + $0x1418] sm:$0xff]
    %v1421 = vld [vmem:[#allocation7 + $0x1420] sm:$0xff]
    %v1422 = vld [vmem:[#allocation7 + $0x1428] sm:$0xff]
    %v1423 = vld [vmem:[#allocation7 + $0x1430] sm:$0xff]
    %v1424 = vld [vmem:[#allocation7 + $0x1438] sm:$0xff]
    %v1425 = vld [vmem:[#allocation7 + $0x1440] sm:$0xff]
    %v1426 = vld [vmem:[#allocation7 + $0x1448] sm:$0xff]
    %v1427 = vld [vmem:[#allocation7 + $0x1450] sm:$0xff]
    %v1428 = vld [vmem:[#allocation7 + $0x1458] sm:$0xff]
    %v1429 = vld [vmem:[#allocation7 + $0x1460] sm:$0xff]
    %v1430 = vld [vmem:[#allocation7 + $0x1468] sm:$0xff]
    %v1431 = vld [vmem:[#allocation7 + $0x1470] sm:$0xff]
    %v1432 = vld [vmem:[#allocation7 + $0x1478] sm:$0xff]
    %v1433 = vld [vmem:[#allocation7 + $0x1480] sm:$0xff]
    %v1434 = vld [vmem:[#allocation7 + $0x1488] sm:$0xff]
    %v1435 = vld [vmem:[#allocation7 + $0x1490] sm:$0xff]
    %v1436 = vld [vmem:[#allocation7 + $0x1498] sm:$0xff]
    %v1437 = vld [vmem:[#allocation7 + $0x14a0] sm:$0xff]
    %v1438 = vld [vmem:[#allocation7 + $0x14a8] sm:$0xff]
    %v1439 = vld [vmem:[#allocation7 + $0x14b0] sm:$0xff]
    %v1440 = vld [vmem:[#allocation7 + $0x14b8] sm:$0xff]
    %v1441 = vld [vmem:[#allocation7 + $0x14c0] sm:$0xff]
    %v1442 = vld [vmem:[#allocation7 + $0x14c8] sm:$0xff]
    %v1443 = vld [vmem:[#allocation7 + $0x14d0] sm:$0xff]
    %v1444 = vld [vmem:[#allocation7 + $0x14d8] sm:$0xff]
    %v1445 = vld [vmem:[#allocation7 + $0x14e0] sm:$0xff]
    %v1446 = vld [vmem:[#allocation7 + $0x14e8] sm:$0xff]
    %v1447 = vld [vmem:[#allocation7 + $0x14f0] sm:$0xff]
    %v1448 = vld [vmem:[#allocation7 + $0x14f8] sm:$0xff]
    %v1449 = vld [vmem:[#allocation7 + $0x1500] sm:$0xff]
    %v1450 = vld [vmem:[#allocation7 + $0x1508] sm:$0xff]
    %v1451 = vld [vmem:[#allocation7 + $0x1510] sm:$0xff]
    %v1452 = vld [vmem:[#allocation7 + $0x1518] sm:$0xff]
    %v1453 = vld [vmem:[#allocation7 + $0x1520] sm:$0xff]
    %v1454 = vld [vmem:[#allocation7 + $0x1528] sm:$0xff]
    %v1455 = vld [vmem:[#allocation7 + $0x1530] sm:$0xff]
    %v1456 = vld [vmem:[#allocation7 + $0x1538] sm:$0xff]
    %v1457 = vld [vmem:[#allocation7 + $0x1540] sm:$0xff]
    %v1458 = vld [vmem:[#allocation7 + $0x1548] sm:$0xff]
    %v1459 = vld [vmem:[#allocation7 + $0x1550] sm:$0xff]
    %v1460 = vld [vmem:[#allocation7 + $0x1558] sm:$0xff]
    %v1461 = vld [vmem:[#allocation7 + $0x1560] sm:$0xff]
    %v1462 = vld [vmem:[#allocation7 + $0x1568] sm:$0xff]
    %v1463 = vld [vmem:[#allocation7 + $0x1570] sm:$0xff]
    %v1464 = vld [vmem:[#allocation7 + $0x1578] sm:$0xff]
    %v1465 = vld [vmem:[#allocation7 + $0x1580] sm:$0xff]
    %v1466 = vld [vmem:[#allocation7 + $0x1588] sm:$0xff]
    %v1467 = vld [vmem:[#allocation7 + $0x1590] sm:$0xff]
    %v1468 = vld [vmem:[#allocation7 + $0x1598] sm:$0xff]
    %v1469 = vld [vmem:[#allocation7 + $0x15a0] sm:$0xff]
    %v1470 = vld [vmem:[#allocation7 + $0x15a8] sm:$0xff]
    %v1471 = vld [vmem:[#allocation7 + $0x15b0] sm:$0xff]
    %v1472 = vld [vmem:[#allocation7 + $0x15b8] sm:$0xff]
    %v1473 = vld [vmem:[#allocation7 + $0x15c0] sm:$0xff]
    %v1474 = vld [vmem:[#allocation7 + $0x15c8] sm:$0xff]
    %v1475 = vld [vmem:[#allocation7 + $0x15d0] sm:$0xff]
    %v1476 = vld [vmem:[#allocation7 + $0x15d8] sm:$0xff]
    %v1477 = vld [vmem:[#allocation7 + $0x15e0] sm:$0xff]
    %v1478 = vld [vmem:[#allocation7 + $0x15e8] sm:$0xff]
    %v1479 = vld [vmem:[#allocation7 + $0x15f0] sm:$0xff]
    %v1480 = vld [vmem:[#allocation7 + $0x15f8] sm:$0xff]
    %v1481 = vld [vmem:[#allocation7 + $0x1600] sm:$0xff]
    %v1482 = vld [vmem:[#allocation7 + $0x1608] sm:$0xff]
    %v1483 = vld [vmem:[#allocation7 + $0x1610] sm:$0xff]
    %v1484 = vld [vmem:[#allocation7 + $0x1618] sm:$0xff]
    %v1485 = vld [vmem:[#allocation7 + $0x1620] sm:$0xff]
    %v1486 = vld [vmem:[#allocation7 + $0x1628] sm:$0xff]
    %v1487 = vld [vmem:[#allocation7 + $0x1630] sm:$0xff]
    %v1488 = vld [vmem:[#allocation7 + $0x1638] sm:$0xff]
    %v1489 = vld [vmem:[#allocation7 + $0x1640] sm:$0xff]
    %v1490 = vld [vmem:[#allocation7 + $0x1648] sm:$0xff]
    %v1491 = vld [vmem:[#allocation7 + $0x1650] sm:$0xff]
    %v1492 = vld [vmem:[#allocation7 + $0x1658] sm:$0xff]
    %v1493 = vld [vmem:[#allocation7 + $0x1660] sm:$0xff]
    %v1494 = vld [vmem:[#allocation7 + $0x1668] sm:$0xff]
    %v1495 = vld [vmem:[#allocation7 + $0x1670] sm:$0xff]
    %v1496 = vld [vmem:[#allocation7 + $0x1678] sm:$0xff]
    %v1497 = vld [vmem:[#allocation7 + $0x1680] sm:$0xff]
    %v1498 = vld [vmem:[#allocation7 + $0x1688] sm:$0xff]
    %v1499 = vld [vmem:[#allocation7 + $0x1690] sm:$0xff]
    %v1500 = vld [vmem:[#allocation7 + $0x1698] sm:$0xff]
    %v1501 = vld [vmem:[#allocation7 + $0x16a0] sm:$0xff]
    %v1502 = vld [vmem:[#allocation7 + $0x16a8] sm:$0xff]
    %v1503 = vld [vmem:[#allocation7 + $0x16b0] sm:$0xff]
    %v1504 = vld [vmem:[#allocation7 + $0x16b8] sm:$0xff]
    %v1505 = vld [vmem:[#allocation7 + $0x16c0] sm:$0xff]
    %v1506 = vld [vmem:[#allocation7 + $0x16c8] sm:$0xff]
    %v1507 = vld [vmem:[#allocation7 + $0x16d0] sm:$0xff]
    %v1508 = vld [vmem:[#allocation7 + $0x16d8] sm:$0xff]
    %v1509 = vld [vmem:[#allocation7 + $0x16e0] sm:$0xff]
    %v1510 = vld [vmem:[#allocation7 + $0x16e8] sm:$0xff]
    %v1511 = vld [vmem:[#allocation7 + $0x16f0] sm:$0xff]
    %v1512 = vld [vmem:[#allocation7 + $0x16f8] sm:$0xff]
    %v1513 = vld [vmem:[#allocation7 + $0x1700] sm:$0xff]
    %v1514 = vld [vmem:[#allocation7 + $0x1708] sm:$0xff]
    %v1515 = vld [vmem:[#allocation7 + $0x1710] sm:$0xff]
    %v1516 = vld [vmem:[#allocation7 + $0x1718] sm:$0xff]
    %v1517 = vld [vmem:[#allocation7 + $0x1720] sm:$0xff]
    %v1518 = vld [vmem:[#allocation7 + $0x1728] sm:$0xff]
    %v1519 = vld [vmem:[#allocation7 + $0x1730] sm:$0xff]
    %v1520 = vld [vmem:[#allocation7 + $0x1738] sm:$0xff]
    %v1521 = vld [vmem:[#allocation7 + $0x1740] sm:$0xff]
    %v1522 = vld [vmem:[#allocation7 + $0x1748] sm:$0xff]
    %v1523 = vld [vmem:[#allocation7 + $0x1750] sm:$0xff]
    %v1524 = vld [vmem:[#allocation7 + $0x1758] sm:$0xff]
    %v1525 = vld [vmem:[#allocation7 + $0x1760] sm:$0xff]
    %v1526 = vld [vmem:[#allocation7 + $0x1768] sm:$0xff]
    %v1527 = vld [vmem:[#allocation7 + $0x1770] sm:$0xff]
    %v1528 = vld [vmem:[#allocation7 + $0x1778] sm:$0xff]
    %v1529 = vld [vmem:[#allocation7 + $0x1780] sm:$0xff]
    %v1530 = vld [vmem:[#allocation7 + $0x1788] sm:$0xff]
    %v1531 = vld [vmem:[#allocation7 + $0x1790] sm:$0xff]
    %v1532 = vld [vmem:[#allocation7 + $0x1798] sm:$0xff]
    %v1533 = vld [vmem:[#allocation7 + $0x17a0] sm:$0xff]
    %v1534 = vld [vmem:[#allocation7 + $0x17a8] sm:$0xff]
    %v1535 = vld [vmem:[#allocation7 + $0x17b0] sm:$0xff]
    %v1536 = vld [vmem:[#allocation7 + $0x17b8] sm:$0xff]
    %v1537 = vld [vmem:[#allocation7 + $0x17c0] sm:$0xff]
    %v1538 = vld [vmem:[#allocation7 + $0x17c8] sm:$0xff]
    %v1539 = vld [vmem:[#allocation7 + $0x17d0] sm:$0xff]
    %v1540 = vld [vmem:[#allocation7 + $0x17d8] sm:$0xff]
    %v1541 = vld [vmem:[#allocation7 + $0x17e0] sm:$0xff]
    %v1542 = vld [vmem:[#allocation7 + $0x17e8] sm:$0xff]
    %v1543 = vld [vmem:[#allocation7 + $0x17f0] sm:$0xff]
    %v1544 = vld [vmem:[#allocation7 + $0x17f8] sm:$0xff]
    %v2313 = vunpack.c.l.b16 %v777
    %v2314 = vunpack.c.h.b16 %v777
    %v2315 = vunpack.c.l.b16 %v778
    %v2316 = vunpack.c.h.b16 %v778
    %v2317 = vunpack.c.l.b16 %v779
    %v2318 = vunpack.c.h.b16 %v779
    %v2319 = vunpack.c.l.b16 %v780
    %v2320 = vunpack.c.h.b16 %v780
    %v2321 = vunpack.c.l.b16 %v781
    %v2322 = vunpack.c.h.b16 %v781
    %v2323 = vunpack.c.l.b16 %v782
    %v2324 = vunpack.c.h.b16 %v782
    %v2325 = vunpack.c.l.b16 %v783
    %v2326 = vunpack.c.h.b16 %v783
    %v2327 = vunpack.c.l.b16 %v784
    %v2328 = vunpack.c.h.b16 %v784
    %v2329 = vunpack.c.l.b16 %v785
    %v2330 = vunpack.c.h.b16 %v785
    %v2331 = vunpack.c.l.b16 %v786
    %v2332 = vunpack.c.h.b16 %v786
    %v2333 = vunpack.c.l.b16 %v787
    %v2334 = vunpack.c.h.b16 %v787
    %v2335 = vunpack.c.l.b16 %v788
    %v2336 = vunpack.c.h.b16 %v788
    %v2337 = vunpack.c.l.b16 %v789
    %v2338 = vunpack.c.h.b16 %v789
    %v2339 = vunpack.c.l.b16 %v790
    %v2340 = vunpack.c.h.b16 %v790
    %v2341 = vunpack.c.l.b16 %v791
    %v2342 = vunpack.c.h.b16 %v791
    %v2343 = vunpack.c.l.b16 %v792
    %v2344 = vunpack.c.h.b16 %v792
    %v2345 = vunpack.c.l.b16 %v793
    %v2346 = vunpack.c.h.b16 %v793
    %v2347 = vunpack.c.l.b16 %v794
    %v2348 = vunpack.c.h.b16 %v794
    %v2349 = vunpack.c.l.b16 %v795
    %v2350 = vunpack.c.h.b16 %v795
    %v2351 = vunpack.c.l.b16 %v796
    %v2352 = vunpack.c.h.b16 %v796
    %v2353 = vunpack.c.l.b16 %v797
    %v2354 = vunpack.c.h.b16 %v797
    %v2355 = vunpack.c.l.b16 %v798
    %v2356 = vunpack.c.h.b16 %v798
    %v2357 = vunpack.c.l.b16 %v799
    %v2358 = vunpack.c.h.b16 %v799
    %v2359 = vunpack.c.l.b16 %v800
    %v2360 = vunpack.c.h.b16 %v800
    %v2361 = vunpack.c.l.b16 %v801
    %v2362 = vunpack.c.h.b16 %v801
    %v2363 = vunpack.c.l.b16 %v802
    %v2364 = vunpack.c.h.b16 %v802
    %v2365 = vunpack.c.l.b16 %v803
    %v2366 = vunpack.c.h.b16 %v803
    %v2367 = vunpack.c.l.b16 %v804
    %v2368 = vunpack.c.h.b16 %v804
    %v2369 = vunpack.c.l.b16 %v805
    %v2370 = vunpack.c.h.b16 %v805
    %v2371 = vunpack.c.l.b16 %v806
    %v2372 = vunpack.c.h.b16 %v806
    %v2373 = vunpack.c.l.b16 %v807
    %v2374 = vunpack.c.h.b16 %v807
    %v2375 = vunpack.c.l.b16 %v808
    %v2376 = vunpack.c.h.b16 %v808
    %v2377 = vunpack.c.l.b16 %v809
    %v2378 = vunpack.c.h.b16 %v809
    %v2379 = vunpack.c.l.b16 %v810
    %v2380 = vunpack.c.h.b16 %v810
    %v2381 = vunpack.c.l.b16 %v811
    %v2382 = vunpack.c.h.b16 %v811
    %v2383 = vunpack.c.l.b16 %v812
    %v2384 = vunpack.c.h.b16 %v812
    %v2385 = vunpack.c.l.b16 %v813
    %v2386 = vunpack.c.h.b16 %v813
    %v2387 = vunpack.c.l.b16 %v814
    %v2388 = vunpack.c.h.b16 %v814
    %v2389 = vunpack.c.l.b16 %v815
    %v2390 = vunpack.c.h.b16 %v815
    %v2391 = vunpack.c.l.b16 %v816
    %v2392 = vunpack.c.h.b16 %v816
    %v2393 = vunpack.c.l.b16 %v817
    %v2394 = vunpack.c.h.b16 %v817
    %v2395 = vunpack.c.l.b16 %v818
    %v2396 = vunpack.c.h.b16 %v818
    %v2397 = vunpack.c.l.b16 %v819
    %v2398 = vunpack.c.h.b16 %v819
    %v2399 = vunpack.c.l.b16 %v820
    %v2400 = vunpack.c.h.b16 %v820
    %v2401 = vunpack.c.l.b16 %v821
    %v2402 = vunpack.c.h.b16 %v821
    %v2403 = vunpack.c.l.b16 %v822
    %v2404 = vunpack.c.h.b16 %v822
    %v2405 = vunpack.c.l.b16 %v823
    %v2406 = vunpack.c.h.b16 %v823
    %v2407 = vunpack.c.l.b16 %v824
    %v2408 = vunpack.c.h.b16 %v824
    %v2409 = vunpack.c.l.b16 %v825
    %v2410 = vunpack.c.h.b16 %v825
    %v2411 = vunpack.c.l.b16 %v826
    %v2412 = vunpack.c.h.b16 %v826
    %v2413 = vunpack.c.l.b16 %v827
    %v2414 = vunpack.c.h.b16 %v827
    %v2415 = vunpack.c.l.b16 %v828
    %v2416 = vunpack.c.h.b16 %v828
    %v2417 = vunpack.c.l.b16 %v829
    %v2418 = vunpack.c.h.b16 %v829
    %v2419 = vunpack.c.l.b16 %v830
    %v2420 = vunpack.c.h.b16 %v830
    %v2421 = vunpack.c.l.b16 %v831
    %v2422 = vunpack.c.h.b16 %v831
    %v2423 = vunpack.c.l.b16 %v832
    %v2424 = vunpack.c.h.b16 %v832
    %v2425 = vunpack.c.l.b16 %v833
    %v2426 = vunpack.c.h.b16 %v833
    %v2427 = vunpack.c.l.b16 %v834
    %v2428 = vunpack.c.h.b16 %v834
    %v2429 = vunpack.c.l.b16 %v835
    %v2430 = vunpack.c.h.b16 %v835
    %v2431 = vunpack.c.l.b16 %v836
    %v2432 = vunpack.c.h.b16 %v836
    %v2433 = vunpack.c.l.b16 %v837
    %v2434 = vunpack.c.h.b16 %v837
    %v2435 = vunpack.c.l.b16 %v838
    %v2436 = vunpack.c.h.b16 %v838
    %v2437 = vunpack.c.l.b16 %v839
    %v2438 = vunpack.c.h.b16 %v839
    %v2439 = vunpack.c.l.b16 %v840
    %v2440 = vunpack.c.h.b16 %v840
    %v2441 = vunpack.c.l.b16 %v841
    %v2442 = vunpack.c.h.b16 %v841
    %v2443 = vunpack.c.l.b16 %v842
    %v2444 = vunpack.c.h.b16 %v842
    %v2445 = vunpack.c.l.b16 %v843
    %v2446 = vunpack.c.h.b16 %v843
    %v2447 = vunpack.c.l.b16 %v844
    %v2448 = vunpack.c.h.b16 %v844
    %v2449 = vunpack.c.l.b16 %v845
    %v2450 = vunpack.c.h.b16 %v845
    %v2451 = vunpack.c.l.b16 %v846
    %v2452 = vunpack.c.h.b16 %v846
    %v2453 = vunpack.c.l.b16 %v847
    %v2454 = vunpack.c.h.b16 %v847
    %v2455 = vunpack.c.l.b16 %v848
    %v2456 = vunpack.c.h.b16 %v848
    %v2457 = vunpack.c.l.b16 %v849
    %v2458 = vunpack.c.h.b16 %v849
    %v2459 = vunpack.c.l.b16 %v850
    %v2460 = vunpack.c.h.b16 %v850
    %v2461 = vunpack.c.l.b16 %v851
    %v2462 = vunpack.c.h.b16 %v851
    %v2463 = vunpack.c.l.b16 %v852
    %v2464 = vunpack.c.h.b16 %v852
    %v2465 = vunpack.c.l.b16 %v853
    %v2466 = vunpack.c.h.b16 %v853
    %v2467 = vunpack.c.l.b16 %v854
    %v2468 = vunpack.c.h.b16 %v854
    %v2469 = vunpack.c.l.b16 %v855
    %v2470 = vunpack.c.h.b16 %v855
    %v2471 = vunpack.c.l.b16 %v856
    %v2472 = vunpack.c.h.b16 %v856
    %v2473 = vunpack.c.l.b16 %v857
    %v2474 = vunpack.c.h.b16 %v857
    %v2475 = vunpack.c.l.b16 %v858
    %v2476 = vunpack.c.h.b16 %v858
    %v2477 = vunpack.c.l.b16 %v859
    %v2478 = vunpack.c.h.b16 %v859
    %v2479 = vunpack.c.l.b16 %v860
    %v2480 = vunpack.c.h.b16 %v860
    %v2481 = vunpack.c.l.b16 %v861
    %v2482 = vunpack.c.h.b16 %v861
    %v2483 = vunpack.c.l.b16 %v862
    %v2484 = vunpack.c.h.b16 %v862
    %v2485 = vunpack.c.l.b16 %v863
    %v2486 = vunpack.c.h.b16 %v863
    %v2487 = vunpack.c.l.b16 %v864
    %v2488 = vunpack.c.h.b16 %v864
    %v2489 = vunpack.c.l.b16 %v865
    %v2490 = vunpack.c.h.b16 %v865
    %v2491 = vunpack.c.l.b16 %v866
    %v2492 = vunpack.c.h.b16 %v866
    %v2493 = vunpack.c.l.b16 %v867
    %v2494 = vunpack.c.h.b16 %v867
    %v2495 = vunpack.c.l.b16 %v868
    %v2496 = vunpack.c.h.b16 %v868
    %v2497 = vunpack.c.l.b16 %v869
    %v2498 = vunpack.c.h.b16 %v869
    %v2499 = vunpack.c.l.b16 %v870
    %v2500 = vunpack.c.h.b16 %v870
    %v2501 = vunpack.c.l.b16 %v871
    %v2502 = vunpack.c.h.b16 %v871
    %v2503 = vunpack.c.l.b16 %v872
    %v2504 = vunpack.c.h.b16 %v872
    %v2505 = vunpack.c.l.b16 %v873
    %v2506 = vunpack.c.h.b16 %v873
    %v2507 = vunpack.c.l.b16 %v874
    %v2508 = vunpack.c.h.b16 %v874
    %v2509 = vunpack.c.l.b16 %v875
    %v2510 = vunpack.c.h.b16 %v875
    %v2511 = vunpack.c.l.b16 %v876
    %v2512 = vunpack.c.h.b16 %v876
    %v2513 = vunpack.c.l.b16 %v877
    %v2514 = vunpack.c.h.b16 %v877
    %v2515 = vunpack.c.l.b16 %v878
    %v2516 = vunpack.c.h.b16 %v878
    %v2517 = vunpack.c.l.b16 %v879
    %v2518 = vunpack.c.h.b16 %v879
    %v2519 = vunpack.c.l.b16 %v880
    %v2520 = vunpack.c.h.b16 %v880
    %v2521 = vunpack.c.l.b16 %v881
    %v2522 = vunpack.c.h.b16 %v881
    %v2523 = vunpack.c.l.b16 %v882
    %v2524 = vunpack.c.h.b16 %v882
    %v2525 = vunpack.c.l.b16 %v883
    %v2526 = vunpack.c.h.b16 %v883
    %v2527 = vunpack.c.l.b16 %v884
    %v2528 = vunpack.c.h.b16 %v884
    %v2529 = vunpack.c.l.b16 %v885
    %v2530 = vunpack.c.h.b16 %v885
    %v2531 = vunpack.c.l.b16 %v886
    %v2532 = vunpack.c.h.b16 %v886
    %v2533 = vunpack.c.l.b16 %v887
    %v2534 = vunpack.c.h.b16 %v887
    %v2535 = vunpack.c.l.b16 %v888
    %v2536 = vunpack.c.h.b16 %v888
    %v2537 = vunpack.c.l.b16 %v889
    %v2538 = vunpack.c.h.b16 %v889
    %v2539 = vunpack.c.l.b16 %v890
    %v2540 = vunpack.c.h.b16 %v890
    %v2541 = vunpack.c.l.b16 %v891
    %v2542 = vunpack.c.h.b16 %v891
    %v2543 = vunpack.c.l.b16 %v892
    %v2544 = vunpack.c.h.b16 %v892
    %v2545 = vunpack.c.l.b16 %v893
    %v2546 = vunpack.c.h.b16 %v893
    %v2547 = vunpack.c.l.b16 %v894
    %v2548 = vunpack.c.h.b16 %v894
    %v2549 = vunpack.c.l.b16 %v895
    %v2550 = vunpack.c.h.b16 %v895
    %v2551 = vunpack.c.l.b16 %v896
    %v2552 = vunpack.c.h.b16 %v896
    %v2553 = vunpack.c.l.b16 %v897
    %v2554 = vunpack.c.h.b16 %v897
    %v2555 = vunpack.c.l.b16 %v898
    %v2556 = vunpack.c.h.b16 %v898
    %v2557 = vunpack.c.l.b16 %v899
    %v2558 = vunpack.c.h.b16 %v899
    %v2559 = vunpack.c.l.b16 %v900
    %v2560 = vunpack.c.h.b16 %v900
    %v2561 = vunpack.c.l.b16 %v901
    %v2562 = vunpack.c.h.b16 %v901
    %v2563 = vunpack.c.l.b16 %v902
    %v2564 = vunpack.c.h.b16 %v902
    %v2565 = vunpack.c.l.b16 %v903
    %v2566 = vunpack.c.h.b16 %v903
    %v2567 = vunpack.c.l.b16 %v904
    %v2568 = vunpack.c.h.b16 %v904
    %v2569 = vunpack.c.l.b16 %v905
    %v2570 = vunpack.c.h.b16 %v905
    %v2571 = vunpack.c.l.b16 %v906
    %v2572 = vunpack.c.h.b16 %v906
    %v2573 = vunpack.c.l.b16 %v907
    %v2574 = vunpack.c.h.b16 %v907
    %v2575 = vunpack.c.l.b16 %v908
    %v2576 = vunpack.c.h.b16 %v908
    %v2577 = vunpack.c.l.b16 %v909
    %v2578 = vunpack.c.h.b16 %v909
    %v2579 = vunpack.c.l.b16 %v910
    %v2580 = vunpack.c.h.b16 %v910
    %v2581 = vunpack.c.l.b16 %v911
    %v2582 = vunpack.c.h.b16 %v911
    %v2583 = vunpack.c.l.b16 %v912
    %v2584 = vunpack.c.h.b16 %v912
    %v2585 = vunpack.c.l.b16 %v913
    %v2586 = vunpack.c.h.b16 %v913
    %v2587 = vunpack.c.l.b16 %v914
    %v2588 = vunpack.c.h.b16 %v914
    %v2589 = vunpack.c.l.b16 %v915
    %v2590 = vunpack.c.h.b16 %v915
    %v2591 = vunpack.c.l.b16 %v916
    %v2592 = vunpack.c.h.b16 %v916
    %v2593 = vunpack.c.l.b16 %v917
    %v2594 = vunpack.c.h.b16 %v917
    %v2595 = vunpack.c.l.b16 %v918
    %v2596 = vunpack.c.h.b16 %v918
    %v2597 = vunpack.c.l.b16 %v919
    %v2598 = vunpack.c.h.b16 %v919
    %v2599 = vunpack.c.l.b16 %v920
    %v2600 = vunpack.c.h.b16 %v920
    %v2601 = vunpack.c.l.b16 %v921
    %v2602 = vunpack.c.h.b16 %v921
    %v2603 = vunpack.c.l.b16 %v922
    %v2604 = vunpack.c.h.b16 %v922
    %v2605 = vunpack.c.l.b16 %v923
    %v2606 = vunpack.c.h.b16 %v923
    %v2607 = vunpack.c.l.b16 %v924
    %v2608 = vunpack.c.h.b16 %v924
    %v2609 = vunpack.c.l.b16 %v925
    %v2610 = vunpack.c.h.b16 %v925
    %v2611 = vunpack.c.l.b16 %v926
    %v2612 = vunpack.c.h.b16 %v926
    %v2613 = vunpack.c.l.b16 %v927
    %v2614 = vunpack.c.h.b16 %v927
    %v2615 = vunpack.c.l.b16 %v928
    %v2616 = vunpack.c.h.b16 %v928
    %v2617 = vunpack.c.l.b16 %v929
    %v2618 = vunpack.c.h.b16 %v929
    %v2619 = vunpack.c.l.b16 %v930
    %v2620 = vunpack.c.h.b16 %v930
    %v2621 = vunpack.c.l.b16 %v931
    %v2622 = vunpack.c.h.b16 %v931
    %v2623 = vunpack.c.l.b16 %v932
    %v2624 = vunpack.c.h.b16 %v932
    %v2625 = vunpack.c.l.b16 %v933
    %v2626 = vunpack.c.h.b16 %v933
    %v2627 = vunpack.c.l.b16 %v934
    %v2628 = vunpack.c.h.b16 %v934
    %v2629 = vunpack.c.l.b16 %v935
    %v2630 = vunpack.c.h.b16 %v935
    %v2631 = vunpack.c.l.b16 %v936
    %v2632 = vunpack.c.h.b16 %v936
    %v2633 = vunpack.c.l.b16 %v937
    %v2634 = vunpack.c.h.b16 %v937
    %v2635 = vunpack.c.l.b16 %v938
    %v2636 = vunpack.c.h.b16 %v938
    %v2637 = vunpack.c.l.b16 %v939
    %v2638 = vunpack.c.h.b16 %v939
    %v2639 = vunpack.c.l.b16 %v940
    %v2640 = vunpack.c.h.b16 %v940
    %v2641 = vunpack.c.l.b16 %v941
    %v2642 = vunpack.c.h.b16 %v941
    %v2643 = vunpack.c.l.b16 %v942
    %v2644 = vunpack.c.h.b16 %v942
    %v2645 = vunpack.c.l.b16 %v943
    %v2646 = vunpack.c.h.b16 %v943
    %v2647 = vunpack.c.l.b16 %v944
    %v2648 = vunpack.c.h.b16 %v944
    %v2649 = vunpack.c.l.b16 %v945
    %v2650 = vunpack.c.h.b16 %v945
    %v2651 = vunpack.c.l.b16 %v946
    %v2652 = vunpack.c.h.b16 %v946
    %v2653 = vunpack.c.l.b16 %v947
    %v2654 = vunpack.c.h.b16 %v947
    %v2655 = vunpack.c.l.b16 %v948
    %v2656 = vunpack.c.h.b16 %v948
    %v2657 = vunpack.c.l.b16 %v949
    %v2658 = vunpack.c.h.b16 %v949
    %v2659 = vunpack.c.l.b16 %v950
    %v2660 = vunpack.c.h.b16 %v950
    %v2661 = vunpack.c.l.b16 %v951
    %v2662 = vunpack.c.h.b16 %v951
    %v2663 = vunpack.c.l.b16 %v952
    %v2664 = vunpack.c.h.b16 %v952
    %v2665 = vunpack.c.l.b16 %v953
    %v2666 = vunpack.c.h.b16 %v953
    %v2667 = vunpack.c.l.b16 %v954
    %v2668 = vunpack.c.h.b16 %v954
    %v2669 = vunpack.c.l.b16 %v955
    %v2670 = vunpack.c.h.b16 %v955
    %v2671 = vunpack.c.l.b16 %v956
    %v2672 = vunpack.c.h.b16 %v956
    %v2673 = vunpack.c.l.b16 %v957
    %v2674 = vunpack.c.h.b16 %v957
    %v2675 = vunpack.c.l.b16 %v958
    %v2676 = vunpack.c.h.b16 %v958
    %v2677 = vunpack.c.l.b16 %v959
    %v2678 = vunpack.c.h.b16 %v959
    %v2679 = vunpack.c.l.b16 %v960
    %v2680 = vunpack.c.h.b16 %v960
    %v2681 = vunpack.c.l.b16 %v961
    %v2682 = vunpack.c.h.b16 %v961
    %v2683 = vunpack.c.l.b16 %v962
    %v2684 = vunpack.c.h.b16 %v962
    %v2685 = vunpack.c.l.b16 %v963
    %v2686 = vunpack.c.h.b16 %v963
    %v2687 = vunpack.c.l.b16 %v964
    %v2688 = vunpack.c.h.b16 %v964
    %v2689 = vunpack.c.l.b16 %v965
    %v2690 = vunpack.c.h.b16 %v965
    %v2691 = vunpack.c.l.b16 %v966
    %v2692 = vunpack.c.h.b16 %v966
    %v2693 = vunpack.c.l.b16 %v967
    %v2694 = vunpack.c.h.b16 %v967
    %v2695 = vunpack.c.l.b16 %v968
    %v2696 = vunpack.c.h.b16 %v968
    %v2697 = vunpack.c.l.b16 %v969
    %v2698 = vunpack.c.h.b16 %v969
    %v2699 = vunpack.c.l.b16 %v970
    %v2700 = vunpack.c.h.b16 %v970
    %v2701 = vunpack.c.l.b16 %v971
    %v2702 = vunpack.c.h.b16 %v971
    %v2703 = vunpack.c.l.b16 %v972
    %v2704 = vunpack.c.h.b16 %v972
    %v2705 = vunpack.c.l.b16 %v973
    %v2706 = vunpack.c.h.b16 %v973
    %v2707 = vunpack.c.l.b16 %v974
    %v2708 = vunpack.c.h.b16 %v974
    %v2709 = vunpack.c.l.b16 %v975
    %v2710 = vunpack.c.h.b16 %v975
    %v2711 = vunpack.c.l.b16 %v976
    %v2712 = vunpack.c.h.b16 %v976
    %v2713 = vunpack.c.l.b16 %v977
    %v2714 = vunpack.c.h.b16 %v977
    %v2715 = vunpack.c.l.b16 %v978
    %v2716 = vunpack.c.h.b16 %v978
    %v2717 = vunpack.c.l.b16 %v979
    %v2718 = vunpack.c.h.b16 %v979
    %v2719 = vunpack.c.l.b16 %v980
    %v2720 = vunpack.c.h.b16 %v980
    %v2721 = vunpack.c.l.b16 %v981
    %v2722 = vunpack.c.h.b16 %v981
    %v2723 = vunpack.c.l.b16 %v982
    %v2724 = vunpack.c.h.b16 %v982
    %v2725 = vunpack.c.l.b16 %v983
    %v2726 = vunpack.c.h.b16 %v983
    %v2727 = vunpack.c.l.b16 %v984
    %v2728 = vunpack.c.h.b16 %v984
    %v2729 = vunpack.c.l.b16 %v985
    %v2730 = vunpack.c.h.b16 %v985
    %v2731 = vunpack.c.l.b16 %v986
    %v2732 = vunpack.c.h.b16 %v986
    %v2733 = vunpack.c.l.b16 %v987
    %v2734 = vunpack.c.h.b16 %v987
    %v2735 = vunpack.c.l.b16 %v988
    %v2736 = vunpack.c.h.b16 %v988
    %v2737 = vunpack.c.l.b16 %v989
    %v2738 = vunpack.c.h.b16 %v989
    %v2739 = vunpack.c.l.b16 %v990
    %v2740 = vunpack.c.h.b16 %v990
    %v2741 = vunpack.c.l.b16 %v991
    %v2742 = vunpack.c.h.b16 %v991
    %v2743 = vunpack.c.l.b16 %v992
    %v2744 = vunpack.c.h.b16 %v992
    %v2745 = vunpack.c.l.b16 %v993
    %v2746 = vunpack.c.h.b16 %v993
    %v2747 = vunpack.c.l.b16 %v994
    %v2748 = vunpack.c.h.b16 %v994
    %v2749 = vunpack.c.l.b16 %v995
    %v2750 = vunpack.c.h.b16 %v995
    %v2751 = vunpack.c.l.b16 %v996
    %v2752 = vunpack.c.h.b16 %v996
    %v2753 = vunpack.c.l.b16 %v997
    %v2754 = vunpack.c.h.b16 %v997
    %v2755 = vunpack.c.l.b16 %v998
    %v2756 = vunpack.c.h.b16 %v998
    %v2757 = vunpack.c.l.b16 %v999
    %v2758 = vunpack.c.h.b16 %v999
    %v2759 = vunpack.c.l.b16 %v1000
    %v2760 = vunpack.c.h.b16 %v1000
    %v2761 = vunpack.c.l.b16 %v1001
    %v2762 = vunpack.c.h.b16 %v1001
    %v2763 = vunpack.c.l.b16 %v1002
    %v2764 = vunpack.c.h.b16 %v1002
    %v2765 = vunpack.c.l.b16 %v1003
    %v2766 = vunpack.c.h.b16 %v1003
    %v2767 = vunpack.c.l.b16 %v1004
    %v2768 = vunpack.c.h.b16 %v1004
    %v2769 = vunpack.c.l.b16 %v1005
    %v2770 = vunpack.c.h.b16 %v1005
    %v2771 = vunpack.c.l.b16 %v1006
    %v2772 = vunpack.c.h.b16 %v1006
    %v2773 = vunpack.c.l.b16 %v1007
    %v2774 = vunpack.c.h.b16 %v1007
    %v2775 = vunpack.c.l.b16 %v1008
    %v2776 = vunpack.c.h.b16 %v1008
    %v2777 = vunpack.c.l.b16 %v1009
    %v2778 = vunpack.c.h.b16 %v1009
    %v2779 = vunpack.c.l.b16 %v1010
    %v2780 = vunpack.c.h.b16 %v1010
    %v2781 = vunpack.c.l.b16 %v1011
    %v2782 = vunpack.c.h.b16 %v1011
    %v2783 = vunpack.c.l.b16 %v1012
    %v2784 = vunpack.c.h.b16 %v1012
    %v2785 = vunpack.c.l.b16 %v1013
    %v2786 = vunpack.c.h.b16 %v1013
    %v2787 = vunpack.c.l.b16 %v1014
    %v2788 = vunpack.c.h.b16 %v1014
    %v2789 = vunpack.c.l.b16 %v1015
    %v2790 = vunpack.c.h.b16 %v1015
    %v2791 = vunpack.c.l.b16 %v1016
    %v2792 = vunpack.c.h.b16 %v1016
    %v2793 = vunpack.c.l.b16 %v1017
    %v2794 = vunpack.c.h.b16 %v1017
    %v2795 = vunpack.c.l.b16 %v1018
    %v2796 = vunpack.c.h.b16 %v1018
    %v2797 = vunpack.c.l.b16 %v1019
    %v2798 = vunpack.c.h.b16 %v1019
    %v2799 = vunpack.c.l.b16 %v1020
    %v2800 = vunpack.c.h.b16 %v1020
    %v2801 = vunpack.c.l.b16 %v1021
    %v2802 = vunpack.c.h.b16 %v1021
    %v2803 = vunpack.c.l.b16 %v1022
    %v2804 = vunpack.c.h.b16 %v1022
    %v2805 = vunpack.c.l.b16 %v1023
    %v2806 = vunpack.c.h.b16 %v1023
    %v2807 = vunpack.c.l.b16 %v1024
    %v2808 = vunpack.c.h.b16 %v1024
    %v2809 = vunpack.c.l.b16 %v1025
    %v2810 = vunpack.c.h.b16 %v1025
    %v2811 = vunpack.c.l.b16 %v1026
    %v2812 = vunpack.c.h.b16 %v1026
    %v2813 = vunpack.c.l.b16 %v1027
    %v2814 = vunpack.c.h.b16 %v1027
    %v2815 = vunpack.c.l.b16 %v1028
    %v2816 = vunpack.c.h.b16 %v1028
    %v2817 = vunpack.c.l.b16 %v1029
    %v2818 = vunpack.c.h.b16 %v1029
    %v2819 = vunpack.c.l.b16 %v1030
    %v2820 = vunpack.c.h.b16 %v1030
    %v2821 = vunpack.c.l.b16 %v1031
    %v2822 = vunpack.c.h.b16 %v1031
    %v2823 = vunpack.c.l.b16 %v1032
    %v2824 = vunpack.c.h.b16 %v1032
    %v2825 = vunpack.c.l.b16 %v1033
    %v2826 = vunpack.c.h.b16 %v1033
    %v2827 = vunpack.c.l.b16 %v1034
    %v2828 = vunpack.c.h.b16 %v1034
    %v2829 = vunpack.c.l.b16 %v1035
    %v2830 = vunpack.c.h.b16 %v1035
    %v2831 = vunpack.c.l.b16 %v1036
    %v2832 = vunpack.c.h.b16 %v1036
    %v2833 = vunpack.c.l.b16 %v1037
    %v2834 = vunpack.c.h.b16 %v1037
    %v2835 = vunpack.c.l.b16 %v1038
    %v2836 = vunpack.c.h.b16 %v1038
    %v2837 = vunpack.c.l.b16 %v1039
    %v2838 = vunpack.c.h.b16 %v1039
    %v2839 = vunpack.c.l.b16 %v1040
    %v2840 = vunpack.c.h.b16 %v1040
    %v2841 = vunpack.c.l.b16 %v1041
    %v2842 = vunpack.c.h.b16 %v1041
    %v2843 = vunpack.c.l.b16 %v1042
    %v2844 = vunpack.c.h.b16 %v1042
    %v2845 = vunpack.c.l.b16 %v1043
    %v2846 = vunpack.c.h.b16 %v1043
    %v2847 = vunpack.c.l.b16 %v1044
    %v2848 = vunpack.c.h.b16 %v1044
    %v2849 = vunpack.c.l.b16 %v1045
    %v2850 = vunpack.c.h.b16 %v1045
    %v2851 = vunpack.c.l.b16 %v1046
    %v2852 = vunpack.c.h.b16 %v1046
    %v2853 = vunpack.c.l.b16 %v1047
    %v2854 = vunpack.c.h.b16 %v1047
    %v2855 = vunpack.c.l.b16 %v1048
    %v2856 = vunpack.c.h.b16 %v1048
    %v2857 = vunpack.c.l.b16 %v1049
    %v2858 = vunpack.c.h.b16 %v1049
    %v2859 = vunpack.c.l.b16 %v1050
    %v2860 = vunpack.c.h.b16 %v1050
    %v2861 = vunpack.c.l.b16 %v1051
    %v2862 = vunpack.c.h.b16 %v1051
    %v2863 = vunpack.c.l.b16 %v1052
    %v2864 = vunpack.c.h.b16 %v1052
    %v2865 = vunpack.c.l.b16 %v1053
    %v2866 = vunpack.c.h.b16 %v1053
    %v2867 = vunpack.c.l.b16 %v1054
    %v2868 = vunpack.c.h.b16 %v1054
    %v2869 = vunpack.c.l.b16 %v1055
    %v2870 = vunpack.c.h.b16 %v1055
    %v2871 = vunpack.c.l.b16 %v1056
    %v2872 = vunpack.c.h.b16 %v1056
    %v2873 = vunpack.c.l.b16 %v1057
    %v2874 = vunpack.c.h.b16 %v1057
    %v2875 = vunpack.c.l.b16 %v1058
    %v2876 = vunpack.c.h.b16 %v1058
    %v2877 = vunpack.c.l.b16 %v1059
    %v2878 = vunpack.c.h.b16 %v1059
    %v2879 = vunpack.c.l.b16 %v1060
    %v2880 = vunpack.c.h.b16 %v1060
    %v2881 = vunpack.c.l.b16 %v1061
    %v2882 = vunpack.c.h.b16 %v1061
    %v2883 = vunpack.c.l.b16 %v1062
    %v2884 = vunpack.c.h.b16 %v1062
    %v2885 = vunpack.c.l.b16 %v1063
    %v2886 = vunpack.c.h.b16 %v1063
    %v2887 = vunpack.c.l.b16 %v1064
    %v2888 = vunpack.c.h.b16 %v1064
    %v2889 = vunpack.c.l.b16 %v1065
    %v2890 = vunpack.c.h.b16 %v1065
    %v2891 = vunpack.c.l.b16 %v1066
    %v2892 = vunpack.c.h.b16 %v1066
    %v2893 = vunpack.c.l.b16 %v1067
    %v2894 = vunpack.c.h.b16 %v1067
    %v2895 = vunpack.c.l.b16 %v1068
    %v2896 = vunpack.c.h.b16 %v1068
    %v2897 = vunpack.c.l.b16 %v1069
    %v2898 = vunpack.c.h.b16 %v1069
    %v2899 = vunpack.c.l.b16 %v1070
    %v2900 = vunpack.c.h.b16 %v1070
    %v2901 = vunpack.c.l.b16 %v1071
    %v2902 = vunpack.c.h.b16 %v1071
    %v2903 = vunpack.c.l.b16 %v1072
    %v2904 = vunpack.c.h.b16 %v1072
    %v2905 = vunpack.c.l.b16 %v1073
    %v2906 = vunpack.c.h.b16 %v1073
    %v2907 = vunpack.c.l.b16 %v1074
    %v2908 = vunpack.c.h.b16 %v1074
    %v2909 = vunpack.c.l.b16 %v1075
    %v2910 = vunpack.c.h.b16 %v1075
    %v2911 = vunpack.c.l.b16 %v1076
    %v2912 = vunpack.c.h.b16 %v1076
    %v2913 = vunpack.c.l.b16 %v1077
    %v2914 = vunpack.c.h.b16 %v1077
    %v2915 = vunpack.c.l.b16 %v1078
    %v2916 = vunpack.c.h.b16 %v1078
    %v2917 = vunpack.c.l.b16 %v1079
    %v2918 = vunpack.c.h.b16 %v1079
    %v2919 = vunpack.c.l.b16 %v1080
    %v2920 = vunpack.c.h.b16 %v1080
    %v2921 = vunpack.c.l.b16 %v1081
    %v2922 = vunpack.c.h.b16 %v1081
    %v2923 = vunpack.c.l.b16 %v1082
    %v2924 = vunpack.c.h.b16 %v1082
    %v2925 = vunpack.c.l.b16 %v1083
    %v2926 = vunpack.c.h.b16 %v1083
    %v2927 = vunpack.c.l.b16 %v1084
    %v2928 = vunpack.c.h.b16 %v1084
    %v2929 = vunpack.c.l.b16 %v1085
    %v2930 = vunpack.c.h.b16 %v1085
    %v2931 = vunpack.c.l.b16 %v1086
    %v2932 = vunpack.c.h.b16 %v1086
    %v2933 = vunpack.c.l.b16 %v1087
    %v2934 = vunpack.c.h.b16 %v1087
    %v2935 = vunpack.c.l.b16 %v1088
    %v2936 = vunpack.c.h.b16 %v1088
    %v2937 = vunpack.c.l.b16 %v1089
    %v2938 = vunpack.c.h.b16 %v1089
    %v2939 = vunpack.c.l.b16 %v1090
    %v2940 = vunpack.c.h.b16 %v1090
    %v2941 = vunpack.c.l.b16 %v1091
    %v2942 = vunpack.c.h.b16 %v1091
    %v2943 = vunpack.c.l.b16 %v1092
    %v2944 = vunpack.c.h.b16 %v1092
    %v2945 = vunpack.c.l.b16 %v1093
    %v2946 = vunpack.c.h.b16 %v1093
    %v2947 = vunpack.c.l.b16 %v1094
    %v2948 = vunpack.c.h.b16 %v1094
    %v2949 = vunpack.c.l.b16 %v1095
    %v2950 = vunpack.c.h.b16 %v1095
    %v2951 = vunpack.c.l.b16 %v1096
    %v2952 = vunpack.c.h.b16 %v1096
    %v2953 = vunpack.c.l.b16 %v1097
    %v2954 = vunpack.c.h.b16 %v1097
    %v2955 = vunpack.c.l.b16 %v1098
    %v2956 = vunpack.c.h.b16 %v1098
    %v2957 = vunpack.c.l.b16 %v1099
    %v2958 = vunpack.c.h.b16 %v1099
    %v2959 = vunpack.c.l.b16 %v1100
    %v2960 = vunpack.c.h.b16 %v1100
    %v2961 = vunpack.c.l.b16 %v1101
    %v2962 = vunpack.c.h.b16 %v1101
    %v2963 = vunpack.c.l.b16 %v1102
    %v2964 = vunpack.c.h.b16 %v1102
    %v2965 = vunpack.c.l.b16 %v1103
    %v2966 = vunpack.c.h.b16 %v1103
    %v2967 = vunpack.c.l.b16 %v1104
    %v2968 = vunpack.c.h.b16 %v1104
    %v2969 = vunpack.c.l.b16 %v1105
    %v2970 = vunpack.c.h.b16 %v1105
    %v2971 = vunpack.c.l.b16 %v1106
    %v2972 = vunpack.c.h.b16 %v1106
    %v2973 = vunpack.c.l.b16 %v1107
    %v2974 = vunpack.c.h.b16 %v1107
    %v2975 = vunpack.c.l.b16 %v1108
    %v2976 = vunpack.c.h.b16 %v1108
    %v2977 = vunpack.c.l.b16 %v1109
    %v2978 = vunpack.c.h.b16 %v1109
    %v2979 = vunpack.c.l.b16 %v1110
    %v2980 = vunpack.c.h.b16 %v1110
    %v2981 = vunpack.c.l.b16 %v1111
    %v2982 = vunpack.c.h.b16 %v1111
    %v2983 = vunpack.c.l.b16 %v1112
    %v2984 = vunpack.c.h.b16 %v1112
    %v2985 = vunpack.c.l.b16 %v1113
    %v2986 = vunpack.c.h.b16 %v1113
    %v2987 = vunpack.c.l.b16 %v1114
    %v2988 = vunpack.c.h.b16 %v1114
    %v2989 = vunpack.c.l.b16 %v1115
    %v2990 = vunpack.c.h.b16 %v1115
    %v2991 = vunpack.c.l.b16 %v1116
    %v2992 = vunpack.c.h.b16 %v1116
    %v2993 = vunpack.c.l.b16 %v1117
    %v2994 = vunpack.c.h.b16 %v1117
    %v2995 = vunpack.c.l.b16 %v1118
    %v2996 = vunpack.c.h.b16 %v1118
    %v2997 = vunpack.c.l.b16 %v1119
    %v2998 = vunpack.c.h.b16 %v1119
    %v2999 = vunpack.c.l.b16 %v1120
    %v3000 = vunpack.c.h.b16 %v1120
    %v3001 = vunpack.c.l.b16 %v1121
    %v3002 = vunpack.c.h.b16 %v1121
    %v3003 = vunpack.c.l.b16 %v1122
    %v3004 = vunpack.c.h.b16 %v1122
    %v3005 = vunpack.c.l.b16 %v1123
    %v3006 = vunpack.c.h.b16 %v1123
    %v3007 = vunpack.c.l.b16 %v1124
    %v3008 = vunpack.c.h.b16 %v1124
    %v3009 = vunpack.c.l.b16 %v1125
    %v3010 = vunpack.c.h.b16 %v1125
    %v3011 = vunpack.c.l.b16 %v1126
    %v3012 = vunpack.c.h.b16 %v1126
    %v3013 = vunpack.c.l.b16 %v1127
    %v3014 = vunpack.c.h.b16 %v1127
    %v3015 = vunpack.c.l.b16 %v1128
    %v3016 = vunpack.c.h.b16 %v1128
    %v3017 = vunpack.c.l.b16 %v1129
    %v3018 = vunpack.c.h.b16 %v1129
    %v3019 = vunpack.c.l.b16 %v1130
    %v3020 = vunpack.c.h.b16 %v1130
    %v3021 = vunpack.c.l.b16 %v1131
    %v3022 = vunpack.c.h.b16 %v1131
    %v3023 = vunpack.c.l.b16 %v1132
    %v3024 = vunpack.c.h.b16 %v1132
    %v3025 = vunpack.c.l.b16 %v1133
    %v3026 = vunpack.c.h.b16 %v1133
    %v3027 = vunpack.c.l.b16 %v1134
    %v3028 = vunpack.c.h.b16 %v1134
    %v3029 = vunpack.c.l.b16 %v1135
    %v3030 = vunpack.c.h.b16 %v1135
    %v3031 = vunpack.c.l.b16 %v1136
    %v3032 = vunpack.c.h.b16 %v1136
    %v3033 = vunpack.c.l.b16 %v1137
    %v3034 = vunpack.c.h.b16 %v1137
    %v3035 = vunpack.c.l.b16 %v1138
    %v3036 = vunpack.c.h.b16 %v1138
    %v3037 = vunpack.c.l.b16 %v1139
    %v3038 = vunpack.c.h.b16 %v1139
    %v3039 = vunpack.c.l.b16 %v1140
    %v3040 = vunpack.c.h.b16 %v1140
    %v3041 = vunpack.c.l.b16 %v1141
    %v3042 = vunpack.c.h.b16 %v1141
    %v3043 = vunpack.c.l.b16 %v1142
    %v3044 = vunpack.c.h.b16 %v1142
    %v3045 = vunpack.c.l.b16 %v1143
    %v3046 = vunpack.c.h.b16 %v1143
    %v3047 = vunpack.c.l.b16 %v1144
    %v3048 = vunpack.c.h.b16 %v1144
    %v3049 = vunpack.c.l.b16 %v1145
    %v3050 = vunpack.c.h.b16 %v1145
    %v3051 = vunpack.c.l.b16 %v1146
    %v3052 = vunpack.c.h.b16 %v1146
    %v3053 = vunpack.c.l.b16 %v1147
    %v3054 = vunpack.c.h.b16 %v1147
    %v3055 = vunpack.c.l.b16 %v1148
    %v3056 = vunpack.c.h.b16 %v1148
    %v3057 = vunpack.c.l.b16 %v1149
    %v3058 = vunpack.c.h.b16 %v1149
    %v3059 = vunpack.c.l.b16 %v1150
    %v3060 = vunpack.c.h.b16 %v1150
    %v3061 = vunpack.c.l.b16 %v1151
    %v3062 = vunpack.c.h.b16 %v1151
    %v3063 = vunpack.c.l.b16 %v1152
    %v3064 = vunpack.c.h.b16 %v1152
    %v3065 = vunpack.c.l.b16 %v1153
    %v3066 = vunpack.c.h.b16 %v1153
    %v3067 = vunpack.c.l.b16 %v1154
    %v3068 = vunpack.c.h.b16 %v1154
    %v3069 = vunpack.c.l.b16 %v1155
    %v3070 = vunpack.c.h.b16 %v1155
    %v3071 = vunpack.c.l.b16 %v1156
    %v3072 = vunpack.c.h.b16 %v1156
    %v3073 = vunpack.c.l.b16 %v1157
    %v3074 = vunpack.c.h.b16 %v1157
    %v3075 = vunpack.c.l.b16 %v1158
    %v3076 = vunpack.c.h.b16 %v1158
    %v3077 = vunpack.c.l.b16 %v1159
    %v3078 = vunpack.c.h.b16 %v1159
    %v3079 = vunpack.c.l.b16 %v1160
    %v3080 = vunpack.c.h.b16 %v1160
    %v3081 = vunpack.c.l.b16 %v1161
    %v3082 = vunpack.c.h.b16 %v1161
    %v3083 = vunpack.c.l.b16 %v1162
    %v3084 = vunpack.c.h.b16 %v1162
    %v3085 = vunpack.c.l.b16 %v1163
    %v3086 = vunpack.c.h.b16 %v1163
    %v3087 = vunpack.c.l.b16 %v1164
    %v3088 = vunpack.c.h.b16 %v1164
    %v3089 = vunpack.c.l.b16 %v1165
    %v3090 = vunpack.c.h.b16 %v1165
    %v3091 = vunpack.c.l.b16 %v1166
    %v3092 = vunpack.c.h.b16 %v1166
    %v3093 = vunpack.c.l.b16 %v1167
    %v3094 = vunpack.c.h.b16 %v1167
    %v3095 = vunpack.c.l.b16 %v1168
    %v3096 = vunpack.c.h.b16 %v1168
    %v3097 = vunpack.c.l.b16 %v1169
    %v3098 = vunpack.c.h.b16 %v1169
    %v3099 = vunpack.c.l.b16 %v1170
    %v3100 = vunpack.c.h.b16 %v1170
    %v3101 = vunpack.c.l.b16 %v1171
    %v3102 = vunpack.c.h.b16 %v1171
    %v3103 = vunpack.c.l.b16 %v1172
    %v3104 = vunpack.c.h.b16 %v1172
    %v3105 = vunpack.c.l.b16 %v1173
    %v3106 = vunpack.c.h.b16 %v1173
    %v3107 = vunpack.c.l.b16 %v1174
    %v3108 = vunpack.c.h.b16 %v1174
    %v3109 = vunpack.c.l.b16 %v1175
    %v3110 = vunpack.c.h.b16 %v1175
    %v3111 = vunpack.c.l.b16 %v1176
    %v3112 = vunpack.c.h.b16 %v1176
    %v3113 = vunpack.c.l.b16 %v1177
    %v3114 = vunpack.c.h.b16 %v1177
    %v3115 = vunpack.c.l.b16 %v1178
    %v3116 = vunpack.c.h.b16 %v1178
    %v3117 = vunpack.c.l.b16 %v1179
    %v3118 = vunpack.c.h.b16 %v1179
    %v3119 = vunpack.c.l.b16 %v1180
    %v3120 = vunpack.c.h.b16 %v1180
    %v3121 = vunpack.c.l.b16 %v1181
    %v3122 = vunpack.c.h.b16 %v1181
    %v3123 = vunpack.c.l.b16 %v1182
    %v3124 = vunpack.c.h.b16 %v1182
    %v3125 = vunpack.c.l.b16 %v1183
    %v3126 = vunpack.c.h.b16 %v1183
    %v3127 = vunpack.c.l.b16 %v1184
    %v3128 = vunpack.c.h.b16 %v1184
    %v3129 = vunpack.c.l.b16 %v1185
    %v3130 = vunpack.c.h.b16 %v1185
    %v3131 = vunpack.c.l.b16 %v1186
    %v3132 = vunpack.c.h.b16 %v1186
    %v3133 = vunpack.c.l.b16 %v1187
    %v3134 = vunpack.c.h.b16 %v1187
    %v3135 = vunpack.c.l.b16 %v1188
    %v3136 = vunpack.c.h.b16 %v1188
    %v3137 = vunpack.c.l.b16 %v1189
    %v3138 = vunpack.c.h.b16 %v1189
    %v3139 = vunpack.c.l.b16 %v1190
    %v3140 = vunpack.c.h.b16 %v1190
    %v3141 = vunpack.c.l.b16 %v1191
    %v3142 = vunpack.c.h.b16 %v1191
    %v3143 = vunpack.c.l.b16 %v1192
    %v3144 = vunpack.c.h.b16 %v1192
    %v3145 = vunpack.c.l.b16 %v1193
    %v3146 = vunpack.c.h.b16 %v1193
    %v3147 = vunpack.c.l.b16 %v1194
    %v3148 = vunpack.c.h.b16 %v1194
    %v3149 = vunpack.c.l.b16 %v1195
    %v3150 = vunpack.c.h.b16 %v1195
    %v3151 = vunpack.c.l.b16 %v1196
    %v3152 = vunpack.c.h.b16 %v1196
    %v3153 = vunpack.c.l.b16 %v1197
    %v3154 = vunpack.c.h.b16 %v1197
    %v3155 = vunpack.c.l.b16 %v1198
    %v3156 = vunpack.c.h.b16 %v1198
    %v3157 = vunpack.c.l.b16 %v1199
    %v3158 = vunpack.c.h.b16 %v1199
    %v3159 = vunpack.c.l.b16 %v1200
    %v3160 = vunpack.c.h.b16 %v1200
    %v3161 = vunpack.c.l.b16 %v1201
    %v3162 = vunpack.c.h.b16 %v1201
    %v3163 = vunpack.c.l.b16 %v1202
    %v3164 = vunpack.c.h.b16 %v1202
    %v3165 = vunpack.c.l.b16 %v1203
    %v3166 = vunpack.c.h.b16 %v1203
    %v3167 = vunpack.c.l.b16 %v1204
    %v3168 = vunpack.c.h.b16 %v1204
    %v3169 = vunpack.c.l.b16 %v1205
    %v3170 = vunpack.c.h.b16 %v1205
    %v3171 = vunpack.c.l.b16 %v1206
    %v3172 = vunpack.c.h.b16 %v1206
    %v3173 = vunpack.c.l.b16 %v1207
    %v3174 = vunpack.c.h.b16 %v1207
    %v3175 = vunpack.c.l.b16 %v1208
    %v3176 = vunpack.c.h.b16 %v1208
    %v3177 = vunpack.c.l.b16 %v1209
    %v3178 = vunpack.c.h.b16 %v1209
    %v3179 = vunpack.c.l.b16 %v1210
    %v3180 = vunpack.c.h.b16 %v1210
    %v3181 = vunpack.c.l.b16 %v1211
    %v3182 = vunpack.c.h.b16 %v1211
    %v3183 = vunpack.c.l.b16 %v1212
    %v3184 = vunpack.c.h.b16 %v1212
    %v3185 = vunpack.c.l.b16 %v1213
    %v3186 = vunpack.c.h.b16 %v1213
    %v3187 = vunpack.c.l.b16 %v1214
    %v3188 = vunpack.c.h.b16 %v1214
    %v3189 = vunpack.c.l.b16 %v1215
    %v3190 = vunpack.c.h.b16 %v1215
    %v3191 = vunpack.c.l.b16 %v1216
    %v3192 = vunpack.c.h.b16 %v1216
    %v3193 = vunpack.c.l.b16 %v1217
    %v3194 = vunpack.c.h.b16 %v1217
    %v3195 = vunpack.c.l.b16 %v1218
    %v3196 = vunpack.c.h.b16 %v1218
    %v3197 = vunpack.c.l.b16 %v1219
    %v3198 = vunpack.c.h.b16 %v1219
    %v3199 = vunpack.c.l.b16 %v1220
    %v3200 = vunpack.c.h.b16 %v1220
    %v3201 = vunpack.c.l.b16 %v1221
    %v3202 = vunpack.c.h.b16 %v1221
    %v3203 = vunpack.c.l.b16 %v1222
    %v3204 = vunpack.c.h.b16 %v1222
    %v3205 = vunpack.c.l.b16 %v1223
    %v3206 = vunpack.c.h.b16 %v1223
    %v3207 = vunpack.c.l.b16 %v1224
    %v3208 = vunpack.c.h.b16 %v1224
    %v3209 = vunpack.c.l.b16 %v1225
    %v3210 = vunpack.c.h.b16 %v1225
    %v3211 = vunpack.c.l.b16 %v1226
    %v3212 = vunpack.c.h.b16 %v1226
    %v3213 = vunpack.c.l.b16 %v1227
    %v3214 = vunpack.c.h.b16 %v1227
    %v3215 = vunpack.c.l.b16 %v1228
    %v3216 = vunpack.c.h.b16 %v1228
    %v3217 = vunpack.c.l.b16 %v1229
    %v3218 = vunpack.c.h.b16 %v1229
    %v3219 = vunpack.c.l.b16 %v1230
    %v3220 = vunpack.c.h.b16 %v1230
    %v3221 = vunpack.c.l.b16 %v1231
    %v3222 = vunpack.c.h.b16 %v1231
    %v3223 = vunpack.c.l.b16 %v1232
    %v3224 = vunpack.c.h.b16 %v1232
    %v3225 = vunpack.c.l.b16 %v1233
    %v3226 = vunpack.c.h.b16 %v1233
    %v3227 = vunpack.c.l.b16 %v1234
    %v3228 = vunpack.c.h.b16 %v1234
    %v3229 = vunpack.c.l.b16 %v1235
    %v3230 = vunpack.c.h.b16 %v1235
    %v3231 = vunpack.c.l.b16 %v1236
    %v3232 = vunpack.c.h.b16 %v1236
    %v3233 = vunpack.c.l.b16 %v1237
    %v3234 = vunpack.c.h.b16 %v1237
    %v3235 = vunpack.c.l.b16 %v1238
    %v3236 = vunpack.c.h.b16 %v1238
    %v3237 = vunpack.c.l.b16 %v1239
    %v3238 = vunpack.c.h.b16 %v1239
    %v3239 = vunpack.c.l.b16 %v1240
    %v3240 = vunpack.c.h.b16 %v1240
    %v3241 = vunpack.c.l.b16 %v1241
    %v3242 = vunpack.c.h.b16 %v1241
    %v3243 = vunpack.c.l.b16 %v1242
    %v3244 = vunpack.c.h.b16 %v1242
    %v3245 = vunpack.c.l.b16 %v1243
    %v3246 = vunpack.c.h.b16 %v1243
    %v3247 = vunpack.c.l.b16 %v1244
    %v3248 = vunpack.c.h.b16 %v1244
    %v3249 = vunpack.c.l.b16 %v1245
    %v3250 = vunpack.c.h.b16 %v1245
    %v3251 = vunpack.c.l.b16 %v1246
    %v3252 = vunpack.c.h.b16 %v1246
    %v3253 = vunpack.c.l.b16 %v1247
    %v3254 = vunpack.c.h.b16 %v1247
    %v3255 = vunpack.c.l.b16 %v1248
    %v3256 = vunpack.c.h.b16 %v1248
    %v3257 = vunpack.c.l.b16 %v1249
    %v3258 = vunpack.c.h.b16 %v1249
    %v3259 = vunpack.c.l.b16 %v1250
    %v3260 = vunpack.c.h.b16 %v1250
    %v3261 = vunpack.c.l.b16 %v1251
    %v3262 = vunpack.c.h.b16 %v1251
    %v3263 = vunpack.c.l.b16 %v1252
    %v3264 = vunpack.c.h.b16 %v1252
    %v3265 = vunpack.c.l.b16 %v1253
    %v3266 = vunpack.c.h.b16 %v1253
    %v3267 = vunpack.c.l.b16 %v1254
    %v3268 = vunpack.c.h.b16 %v1254
    %v3269 = vunpack.c.l.b16 %v1255
    %v3270 = vunpack.c.h.b16 %v1255
    %v3271 = vunpack.c.l.b16 %v1256
    %v3272 = vunpack.c.h.b16 %v1256
    %v3273 = vunpack.c.l.b16 %v1257
    %v3274 = vunpack.c.h.b16 %v1257
    %v3275 = vunpack.c.l.b16 %v1258
    %v3276 = vunpack.c.h.b16 %v1258
    %v3277 = vunpack.c.l.b16 %v1259
    %v3278 = vunpack.c.h.b16 %v1259
    %v3279 = vunpack.c.l.b16 %v1260
    %v3280 = vunpack.c.h.b16 %v1260
    %v3281 = vunpack.c.l.b16 %v1261
    %v3282 = vunpack.c.h.b16 %v1261
    %v3283 = vunpack.c.l.b16 %v1262
    %v3284 = vunpack.c.h.b16 %v1262
    %v3285 = vunpack.c.l.b16 %v1263
    %v3286 = vunpack.c.h.b16 %v1263
    %v3287 = vunpack.c.l.b16 %v1264
    %v3288 = vunpack.c.h.b16 %v1264
    %v3289 = vunpack.c.l.b16 %v1265
    %v3290 = vunpack.c.h.b16 %v1265
    %v3291 = vunpack.c.l.b16 %v1266
    %v3292 = vunpack.c.h.b16 %v1266
    %v3293 = vunpack.c.l.b16 %v1267
    %v3294 = vunpack.c.h.b16 %v1267
    %v3295 = vunpack.c.l.b16 %v1268
    %v3296 = vunpack.c.h.b16 %v1268
    %v3297 = vunpack.c.l.b16 %v1269
    %v3298 = vunpack.c.h.b16 %v1269
    %v3299 = vunpack.c.l.b16 %v1270
    %v3300 = vunpack.c.h.b16 %v1270
    %v3301 = vunpack.c.l.b16 %v1271
    %v3302 = vunpack.c.h.b16 %v1271
    %v3303 = vunpack.c.l.b16 %v1272
    %v3304 = vunpack.c.h.b16 %v1272
    %v3305 = vunpack.c.l.b16 %v1273
    %v3306 = vunpack.c.h.b16 %v1273
    %v3307 = vunpack.c.l.b16 %v1274
    %v3308 = vunpack.c.h.b16 %v1274
    %v3309 = vunpack.c.l.b16 %v1275
    %v3310 = vunpack.c.h.b16 %v1275
    %v3311 = vunpack.c.l.b16 %v1276
    %v3312 = vunpack.c.h.b16 %v1276
    %v3313 = vunpack.c.l.b16 %v1277
    %v3314 = vunpack.c.h.b16 %v1277
    %v3315 = vunpack.c.l.b16 %v1278
    %v3316 = vunpack.c.h.b16 %v1278
    %v3317 = vunpack.c.l.b16 %v1279
    %v3318 = vunpack.c.h.b16 %v1279
    %v3319 = vunpack.c.l.b16 %v1280
    %v3320 = vunpack.c.h.b16 %v1280
    %v3321 = vunpack.c.l.b16 %v1281
    %v3322 = vunpack.c.h.b16 %v1281
    %v3323 = vunpack.c.l.b16 %v1282
    %v3324 = vunpack.c.h.b16 %v1282
    %v3325 = vunpack.c.l.b16 %v1283
    %v3326 = vunpack.c.h.b16 %v1283
    %v3327 = vunpack.c.l.b16 %v1284
    %v3328 = vunpack.c.h.b16 %v1284
    %v3329 = vunpack.c.l.b16 %v1285
    %v3330 = vunpack.c.h.b16 %v1285
    %v3331 = vunpack.c.l.b16 %v1286
    %v3332 = vunpack.c.h.b16 %v1286
    %v3333 = vunpack.c.l.b16 %v1287
    %v3334 = vunpack.c.h.b16 %v1287
    %v3335 = vunpack.c.l.b16 %v1288
    %v3336 = vunpack.c.h.b16 %v1288
    %v3337 = vunpack.c.l.b16 %v1289
    %v3338 = vunpack.c.h.b16 %v1289
    %v3339 = vunpack.c.l.b16 %v1290
    %v3340 = vunpack.c.h.b16 %v1290
    %v3341 = vunpack.c.l.b16 %v1291
    %v3342 = vunpack.c.h.b16 %v1291
    %v3343 = vunpack.c.l.b16 %v1292
    %v3344 = vunpack.c.h.b16 %v1292
    %v3345 = vunpack.c.l.b16 %v1293
    %v3346 = vunpack.c.h.b16 %v1293
    %v3347 = vunpack.c.l.b16 %v1294
    %v3348 = vunpack.c.h.b16 %v1294
    %v3349 = vunpack.c.l.b16 %v1295
    %v3350 = vunpack.c.h.b16 %v1295
    %v3351 = vunpack.c.l.b16 %v1296
    %v3352 = vunpack.c.h.b16 %v1296
    %v3353 = vunpack.c.l.b16 %v1297
    %v3354 = vunpack.c.h.b16 %v1297
    %v3355 = vunpack.c.l.b16 %v1298
    %v3356 = vunpack.c.h.b16 %v1298
    %v3357 = vunpack.c.l.b16 %v1299
    %v3358 = vunpack.c.h.b16 %v1299
    %v3359 = vunpack.c.l.b16 %v1300
    %v3360 = vunpack.c.h.b16 %v1300
    %v3361 = vunpack.c.l.b16 %v1301
    %v3362 = vunpack.c.h.b16 %v1301
    %v3363 = vunpack.c.l.b16 %v1302
    %v3364 = vunpack.c.h.b16 %v1302
    %v3365 = vunpack.c.l.b16 %v1303
    %v3366 = vunpack.c.h.b16 %v1303
    %v3367 = vunpack.c.l.b16 %v1304
    %v3368 = vunpack.c.h.b16 %v1304
    %v3369 = vunpack.c.l.b16 %v1305
    %v3370 = vunpack.c.h.b16 %v1305
    %v3371 = vunpack.c.l.b16 %v1306
    %v3372 = vunpack.c.h.b16 %v1306
    %v3373 = vunpack.c.l.b16 %v1307
    %v3374 = vunpack.c.h.b16 %v1307
    %v3375 = vunpack.c.l.b16 %v1308
    %v3376 = vunpack.c.h.b16 %v1308
    %v3377 = vunpack.c.l.b16 %v1309
    %v3378 = vunpack.c.h.b16 %v1309
    %v3379 = vunpack.c.l.b16 %v1310
    %v3380 = vunpack.c.h.b16 %v1310
    %v3381 = vunpack.c.l.b16 %v1311
    %v3382 = vunpack.c.h.b16 %v1311
    %v3383 = vunpack.c.l.b16 %v1312
    %v3384 = vunpack.c.h.b16 %v1312
    %v3385 = vunpack.c.l.b16 %v1313
    %v3386 = vunpack.c.h.b16 %v1313
    %v3387 = vunpack.c.l.b16 %v1314
    %v3388 = vunpack.c.h.b16 %v1314
    %v3389 = vunpack.c.l.b16 %v1315
    %v3390 = vunpack.c.h.b16 %v1315
    %v3391 = vunpack.c.l.b16 %v1316
    %v3392 = vunpack.c.h.b16 %v1316
    %v3393 = vunpack.c.l.b16 %v1317
    %v3394 = vunpack.c.h.b16 %v1317
    %v3395 = vunpack.c.l.b16 %v1318
    %v3396 = vunpack.c.h.b16 %v1318
    %v3397 = vunpack.c.l.b16 %v1319
    %v3398 = vunpack.c.h.b16 %v1319
    %v3399 = vunpack.c.l.b16 %v1320
    %v3400 = vunpack.c.h.b16 %v1320
    %v3401 = vunpack.c.l.b16 %v1321
    %v3402 = vunpack.c.h.b16 %v1321
    %v3403 = vunpack.c.l.b16 %v1322
    %v3404 = vunpack.c.h.b16 %v1322
    %v3405 = vunpack.c.l.b16 %v1323
    %v3406 = vunpack.c.h.b16 %v1323
    %v3407 = vunpack.c.l.b16 %v1324
    %v3408 = vunpack.c.h.b16 %v1324
    %v3409 = vunpack.c.l.b16 %v1325
    %v3410 = vunpack.c.h.b16 %v1325
    %v3411 = vunpack.c.l.b16 %v1326
    %v3412 = vunpack.c.h.b16 %v1326
    %v3413 = vunpack.c.l.b16 %v1327
    %v3414 = vunpack.c.h.b16 %v1327
    %v3415 = vunpack.c.l.b16 %v1328
    %v3416 = vunpack.c.h.b16 %v1328
    %v3417 = vunpack.c.l.b16 %v1329
    %v3418 = vunpack.c.h.b16 %v1329
    %v3419 = vunpack.c.l.b16 %v1330
    %v3420 = vunpack.c.h.b16 %v1330
    %v3421 = vunpack.c.l.b16 %v1331
    %v3422 = vunpack.c.h.b16 %v1331
    %v3423 = vunpack.c.l.b16 %v1332
    %v3424 = vunpack.c.h.b16 %v1332
    %v3425 = vunpack.c.l.b16 %v1333
    %v3426 = vunpack.c.h.b16 %v1333
    %v3427 = vunpack.c.l.b16 %v1334
    %v3428 = vunpack.c.h.b16 %v1334
    %v3429 = vunpack.c.l.b16 %v1335
    %v3430 = vunpack.c.h.b16 %v1335
    %v3431 = vunpack.c.l.b16 %v1336
    %v3432 = vunpack.c.h.b16 %v1336
    %v3433 = vunpack.c.l.b16 %v1337
    %v3434 = vunpack.c.h.b16 %v1337
    %v3435 = vunpack.c.l.b16 %v1338
    %v3436 = vunpack.c.h.b16 %v1338
    %v3437 = vunpack.c.l.b16 %v1339
    %v3438 = vunpack.c.h.b16 %v1339
    %v3439 = vunpack.c.l.b16 %v1340
    %v3440 = vunpack.c.h.b16 %v1340
    %v3441 = vunpack.c.l.b16 %v1341
    %v3442 = vunpack.c.h.b16 %v1341
    %v3443 = vunpack.c.l.b16 %v1342
    %v3444 = vunpack.c.h.b16 %v1342
    %v3445 = vunpack.c.l.b16 %v1343
    %v3446 = vunpack.c.h.b16 %v1343
    %v3447 = vunpack.c.l.b16 %v1344
    %v3448 = vunpack.c.h.b16 %v1344
    %v3449 = vunpack.c.l.b16 %v1345
    %v3450 = vunpack.c.h.b16 %v1345
    %v3451 = vunpack.c.l.b16 %v1346
    %v3452 = vunpack.c.h.b16 %v1346
    %v3453 = vunpack.c.l.b16 %v1347
    %v3454 = vunpack.c.h.b16 %v1347
    %v3455 = vunpack.c.l.b16 %v1348
    %v3456 = vunpack.c.h.b16 %v1348
    %v3457 = vunpack.c.l.b16 %v1349
    %v3458 = vunpack.c.h.b16 %v1349
    %v3459 = vunpack.c.l.b16 %v1350
    %v3460 = vunpack.c.h.b16 %v1350
    %v3461 = vunpack.c.l.b16 %v1351
    %v3462 = vunpack.c.h.b16 %v1351
    %v3463 = vunpack.c.l.b16 %v1352
    %v3464 = vunpack.c.h.b16 %v1352
    %v3465 = vunpack.c.l.b16 %v1353
    %v3466 = vunpack.c.h.b16 %v1353
    %v3467 = vunpack.c.l.b16 %v1354
    %v3468 = vunpack.c.h.b16 %v1354
    %v3469 = vunpack.c.l.b16 %v1355
    %v3470 = vunpack.c.h.b16 %v1355
    %v3471 = vunpack.c.l.b16 %v1356
    %v3472 = vunpack.c.h.b16 %v1356
    %v3473 = vunpack.c.l.b16 %v1357
    %v3474 = vunpack.c.h.b16 %v1357
    %v3475 = vunpack.c.l.b16 %v1358
    %v3476 = vunpack.c.h.b16 %v1358
    %v3477 = vunpack.c.l.b16 %v1359
    %v3478 = vunpack.c.h.b16 %v1359
    %v3479 = vunpack.c.l.b16 %v1360
    %v3480 = vunpack.c.h.b16 %v1360
    %v3481 = vunpack.c.l.b16 %v1361
    %v3482 = vunpack.c.h.b16 %v1361
    %v3483 = vunpack.c.l.b16 %v1362
    %v3484 = vunpack.c.h.b16 %v1362
    %v3485 = vunpack.c.l.b16 %v1363
    %v3486 = vunpack.c.h.b16 %v1363
    %v3487 = vunpack.c.l.b16 %v1364
    %v3488 = vunpack.c.h.b16 %v1364
    %v3489 = vunpack.c.l.b16 %v1365
    %v3490 = vunpack.c.h.b16 %v1365
    %v3491 = vunpack.c.l.b16 %v1366
    %v3492 = vunpack.c.h.b16 %v1366
    %v3493 = vunpack.c.l.b16 %v1367
    %v3494 = vunpack.c.h.b16 %v1367
    %v3495 = vunpack.c.l.b16 %v1368
    %v3496 = vunpack.c.h.b16 %v1368
    %v3497 = vunpack.c.l.b16 %v1369
    %v3498 = vunpack.c.h.b16 %v1369
    %v3499 = vunpack.c.l.b16 %v1370
    %v3500 = vunpack.c.h.b16 %v1370
    %v3501 = vunpack.c.l.b16 %v1371
    %v3502 = vunpack.c.h.b16 %v1371
    %v3503 = vunpack.c.l.b16 %v1372
    %v3504 = vunpack.c.h.b16 %v1372
    %v3505 = vunpack.c.l.b16 %v1373
    %v3506 = vunpack.c.h.b16 %v1373
    %v3507 = vunpack.c.l.b16 %v1374
    %v3508 = vunpack.c.h.b16 %v1374
    %v3509 = vunpack.c.l.b16 %v1375
    %v3510 = vunpack.c.h.b16 %v1375
    %v3511 = vunpack.c.l.b16 %v1376
    %v3512 = vunpack.c.h.b16 %v1376
    %v3513 = vunpack.c.l.b16 %v1377
    %v3514 = vunpack.c.h.b16 %v1377
    %v3515 = vunpack.c.l.b16 %v1378
    %v3516 = vunpack.c.h.b16 %v1378
    %v3517 = vunpack.c.l.b16 %v1379
    %v3518 = vunpack.c.h.b16 %v1379
    %v3519 = vunpack.c.l.b16 %v1380
    %v3520 = vunpack.c.h.b16 %v1380
    %v3521 = vunpack.c.l.b16 %v1381
    %v3522 = vunpack.c.h.b16 %v1381
    %v3523 = vunpack.c.l.b16 %v1382
    %v3524 = vunpack.c.h.b16 %v1382
    %v3525 = vunpack.c.l.b16 %v1383
    %v3526 = vunpack.c.h.b16 %v1383
    %v3527 = vunpack.c.l.b16 %v1384
    %v3528 = vunpack.c.h.b16 %v1384
    %v3529 = vunpack.c.l.b16 %v1385
    %v3530 = vunpack.c.h.b16 %v1385
    %v3531 = vunpack.c.l.b16 %v1386
    %v3532 = vunpack.c.h.b16 %v1386
    %v3533 = vunpack.c.l.b16 %v1387
    %v3534 = vunpack.c.h.b16 %v1387
    %v3535 = vunpack.c.l.b16 %v1388
    %v3536 = vunpack.c.h.b16 %v1388
    %v3537 = vunpack.c.l.b16 %v1389
    %v3538 = vunpack.c.h.b16 %v1389
    %v3539 = vunpack.c.l.b16 %v1390
    %v3540 = vunpack.c.h.b16 %v1390
    %v3541 = vunpack.c.l.b16 %v1391
    %v3542 = vunpack.c.h.b16 %v1391
    %v3543 = vunpack.c.l.b16 %v1392
    %v3544 = vunpack.c.h.b16 %v1392
    %v3545 = vunpack.c.l.b16 %v1393
    %v3546 = vunpack.c.h.b16 %v1393
    %v3547 = vunpack.c.l.b16 %v1394
    %v3548 = vunpack.c.h.b16 %v1394
    %v3549 = vunpack.c.l.b16 %v1395
    %v3550 = vunpack.c.h.b16 %v1395
    %v3551 = vunpack.c.l.b16 %v1396
    %v3552 = vunpack.c.h.b16 %v1396
    %v3553 = vunpack.c.l.b16 %v1397
    %v3554 = vunpack.c.h.b16 %v1397
    %v3555 = vunpack.c.l.b16 %v1398
    %v3556 = vunpack.c.h.b16 %v1398
    %v3557 = vunpack.c.l.b16 %v1399
    %v3558 = vunpack.c.h.b16 %v1399
    %v3559 = vunpack.c.l.b16 %v1400
    %v3560 = vunpack.c.h.b16 %v1400
    %v3561 = vunpack.c.l.b16 %v1401
    %v3562 = vunpack.c.h.b16 %v1401
    %v3563 = vunpack.c.l.b16 %v1402
    %v3564 = vunpack.c.h.b16 %v1402
    %v3565 = vunpack.c.l.b16 %v1403
    %v3566 = vunpack.c.h.b16 %v1403
    %v3567 = vunpack.c.l.b16 %v1404
    %v3568 = vunpack.c.h.b16 %v1404
    %v3569 = vunpack.c.l.b16 %v1405
    %v3570 = vunpack.c.h.b16 %v1405
    %v3571 = vunpack.c.l.b16 %v1406
    %v3572 = vunpack.c.h.b16 %v1406
    %v3573 = vunpack.c.l.b16 %v1407
    %v3574 = vunpack.c.h.b16 %v1407
    %v3575 = vunpack.c.l.b16 %v1408
    %v3576 = vunpack.c.h.b16 %v1408
    %v3577 = vunpack.c.l.b16 %v1409
    %v3578 = vunpack.c.h.b16 %v1409
    %v3579 = vunpack.c.l.b16 %v1410
    %v3580 = vunpack.c.h.b16 %v1410
    %v3581 = vunpack.c.l.b16 %v1411
    %v3582 = vunpack.c.h.b16 %v1411
    %v3583 = vunpack.c.l.b16 %v1412
    %v3584 = vunpack.c.h.b16 %v1412
    %v3585 = vunpack.c.l.b16 %v1413
    %v3586 = vunpack.c.h.b16 %v1413
    %v3587 = vunpack.c.l.b16 %v1414
    %v3588 = vunpack.c.h.b16 %v1414
    %v3589 = vunpack.c.l.b16 %v1415
    %v3590 = vunpack.c.h.b16 %v1415
    %v3591 = vunpack.c.l.b16 %v1416
    %v3592 = vunpack.c.h.b16 %v1416
    %v3593 = vunpack.c.l.b16 %v1417
    %v3594 = vunpack.c.h.b16 %v1417
    %v3595 = vunpack.c.l.b16 %v1418
    %v3596 = vunpack.c.h.b16 %v1418
    %v3597 = vunpack.c.l.b16 %v1419
    %v3598 = vunpack.c.h.b16 %v1419
    %v3599 = vunpack.c.l.b16 %v1420
    %v3600 = vunpack.c.h.b16 %v1420
    %v3601 = vunpack.c.l.b16 %v1421
    %v3602 = vunpack.c.h.b16 %v1421
    %v3603 = vunpack.c.l.b16 %v1422
    %v3604 = vunpack.c.h.b16 %v1422
    %v3605 = vunpack.c.l.b16 %v1423
    %v3606 = vunpack.c.h.b16 %v1423
    %v3607 = vunpack.c.l.b16 %v1424
    %v3608 = vunpack.c.h.b16 %v1424
    %v3609 = vunpack.c.l.b16 %v1425
    %v3610 = vunpack.c.h.b16 %v1425
    %v3611 = vunpack.c.l.b16 %v1426
    %v3612 = vunpack.c.h.b16 %v1426
    %v3613 = vunpack.c.l.b16 %v1427
    %v3614 = vunpack.c.h.b16 %v1427
    %v3615 = vunpack.c.l.b16 %v1428
    %v3616 = vunpack.c.h.b16 %v1428
    %v3617 = vunpack.c.l.b16 %v1429
    %v3618 = vunpack.c.h.b16 %v1429
    %v3619 = vunpack.c.l.b16 %v1430
    %v3620 = vunpack.c.h.b16 %v1430
    %v3621 = vunpack.c.l.b16 %v1431
    %v3622 = vunpack.c.h.b16 %v1431
    %v3623 = vunpack.c.l.b16 %v1432
    %v3624 = vunpack.c.h.b16 %v1432
    %v3625 = vunpack.c.l.b16 %v1433
    %v3626 = vunpack.c.h.b16 %v1433
    %v3627 = vunpack.c.l.b16 %v1434
    %v3628 = vunpack.c.h.b16 %v1434
    %v3629 = vunpack.c.l.b16 %v1435
    %v3630 = vunpack.c.h.b16 %v1435
    %v3631 = vunpack.c.l.b16 %v1436
    %v3632 = vunpack.c.h.b16 %v1436
    %v3633 = vunpack.c.l.b16 %v1437
    %v3634 = vunpack.c.h.b16 %v1437
    %v3635 = vunpack.c.l.b16 %v1438
    %v3636 = vunpack.c.h.b16 %v1438
    %v3637 = vunpack.c.l.b16 %v1439
    %v3638 = vunpack.c.h.b16 %v1439
    %v3639 = vunpack.c.l.b16 %v1440
    %v3640 = vunpack.c.h.b16 %v1440
    %v3641 = vunpack.c.l.b16 %v1441
    %v3642 = vunpack.c.h.b16 %v1441
    %v3643 = vunpack.c.l.b16 %v1442
    %v3644 = vunpack.c.h.b16 %v1442
    %v3645 = vunpack.c.l.b16 %v1443
    %v3646 = vunpack.c.h.b16 %v1443
    %v3647 = vunpack.c.l.b16 %v1444
    %v3648 = vunpack.c.h.b16 %v1444
    %v3649 = vunpack.c.l.b16 %v1445
    %v3650 = vunpack.c.h.b16 %v1445
    %v3651 = vunpack.c.l.b16 %v1446
    %v3652 = vunpack.c.h.b16 %v1446
    %v3653 = vunpack.c.l.b16 %v1447
    %v3654 = vunpack.c.h.b16 %v1447
    %v3655 = vunpack.c.l.b16 %v1448
    %v3656 = vunpack.c.h.b16 %v1448
    %v3657 = vunpack.c.l.b16 %v1449
    %v3658 = vunpack.c.h.b16 %v1449
    %v3659 = vunpack.c.l.b16 %v1450
    %v3660 = vunpack.c.h.b16 %v1450
    %v3661 = vunpack.c.l.b16 %v1451
    %v3662 = vunpack.c.h.b16 %v1451
    %v3663 = vunpack.c.l.b16 %v1452
    %v3664 = vunpack.c.h.b16 %v1452
    %v3665 = vunpack.c.l.b16 %v1453
    %v3666 = vunpack.c.h.b16 %v1453
    %v3667 = vunpack.c.l.b16 %v1454
    %v3668 = vunpack.c.h.b16 %v1454
    %v3669 = vunpack.c.l.b16 %v1455
    %v3670 = vunpack.c.h.b16 %v1455
    %v3671 = vunpack.c.l.b16 %v1456
    %v3672 = vunpack.c.h.b16 %v1456
    %v3673 = vunpack.c.l.b16 %v1457
    %v3674 = vunpack.c.h.b16 %v1457
    %v3675 = vunpack.c.l.b16 %v1458
    %v3676 = vunpack.c.h.b16 %v1458
    %v3677 = vunpack.c.l.b16 %v1459
    %v3678 = vunpack.c.h.b16 %v1459
    %v3679 = vunpack.c.l.b16 %v1460
    %v3680 = vunpack.c.h.b16 %v1460
    %v3681 = vunpack.c.l.b16 %v1461
    %v3682 = vunpack.c.h.b16 %v1461
    %v3683 = vunpack.c.l.b16 %v1462
    %v3684 = vunpack.c.h.b16 %v1462
    %v3685 = vunpack.c.l.b16 %v1463
    %v3686 = vunpack.c.h.b16 %v1463
    %v3687 = vunpack.c.l.b16 %v1464
    %v3688 = vunpack.c.h.b16 %v1464
    %v3689 = vunpack.c.l.b16 %v1465
    %v3690 = vunpack.c.h.b16 %v1465
    %v3691 = vunpack.c.l.b16 %v1466
    %v3692 = vunpack.c.h.b16 %v1466
    %v3693 = vunpack.c.l.b16 %v1467
    %v3694 = vunpack.c.h.b16 %v1467
    %v3695 = vunpack.c.l.b16 %v1468
    %v3696 = vunpack.c.h.b16 %v1468
    %v3697 = vunpack.c.l.b16 %v1469
    %v3698 = vunpack.c.h.b16 %v1469
    %v3699 = vunpack.c.l.b16 %v1470
    %v3700 = vunpack.c.h.b16 %v1470
    %v3701 = vunpack.c.l.b16 %v1471
    %v3702 = vunpack.c.h.b16 %v1471
    %v3703 = vunpack.c.l.b16 %v1472
    %v3704 = vunpack.c.h.b16 %v1472
    %v3705 = vunpack.c.l.b16 %v1473
    %v3706 = vunpack.c.h.b16 %v1473
    %v3707 = vunpack.c.l.b16 %v1474
    %v3708 = vunpack.c.h.b16 %v1474
    %v3709 = vunpack.c.l.b16 %v1475
    %v3710 = vunpack.c.h.b16 %v1475
    %v3711 = vunpack.c.l.b16 %v1476
    %v3712 = vunpack.c.h.b16 %v1476
    %v3713 = vunpack.c.l.b16 %v1477
    %v3714 = vunpack.c.h.b16 %v1477
    %v3715 = vunpack.c.l.b16 %v1478
    %v3716 = vunpack.c.h.b16 %v1478
    %v3717 = vunpack.c.l.b16 %v1479
    %v3718 = vunpack.c.h.b16 %v1479
    %v3719 = vunpack.c.l.b16 %v1480
    %v3720 = vunpack.c.h.b16 %v1480
    %v3721 = vunpack.c.l.b16 %v1481
    %v3722 = vunpack.c.h.b16 %v1481
    %v3723 = vunpack.c.l.b16 %v1482
    %v3724 = vunpack.c.h.b16 %v1482
    %v3725 = vunpack.c.l.b16 %v1483
    %v3726 = vunpack.c.h.b16 %v1483
    %v3727 = vunpack.c.l.b16 %v1484
    %v3728 = vunpack.c.h.b16 %v1484
    %v3729 = vunpack.c.l.b16 %v1485
    %v3730 = vunpack.c.h.b16 %v1485
    %v3731 = vunpack.c.l.b16 %v1486
    %v3732 = vunpack.c.h.b16 %v1486
    %v3733 = vunpack.c.l.b16 %v1487
    %v3734 = vunpack.c.h.b16 %v1487
    %v3735 = vunpack.c.l.b16 %v1488
    %v3736 = vunpack.c.h.b16 %v1488
    %v3737 = vunpack.c.l.b16 %v1489
    %v3738 = vunpack.c.h.b16 %v1489
    %v3739 = vunpack.c.l.b16 %v1490
    %v3740 = vunpack.c.h.b16 %v1490
    %v3741 = vunpack.c.l.b16 %v1491
    %v3742 = vunpack.c.h.b16 %v1491
    %v3743 = vunpack.c.l.b16 %v1492
    %v3744 = vunpack.c.h.b16 %v1492
    %v3745 = vunpack.c.l.b16 %v1493
    %v3746 = vunpack.c.h.b16 %v1493
    %v3747 = vunpack.c.l.b16 %v1494
    %v3748 = vunpack.c.h.b16 %v1494
    %v3749 = vunpack.c.l.b16 %v1495
    %v3750 = vunpack.c.h.b16 %v1495
    %v3751 = vunpack.c.l.b16 %v1496
    %v3752 = vunpack.c.h.b16 %v1496
    %v3753 = vunpack.c.l.b16 %v1497
    %v3754 = vunpack.c.h.b16 %v1497
    %v3755 = vunpack.c.l.b16 %v1498
    %v3756 = vunpack.c.h.b16 %v1498
    %v3757 = vunpack.c.l.b16 %v1499
    %v3758 = vunpack.c.h.b16 %v1499
    %v3759 = vunpack.c.l.b16 %v1500
    %v3760 = vunpack.c.h.b16 %v1500
    %v3761 = vunpack.c.l.b16 %v1501
    %v3762 = vunpack.c.h.b16 %v1501
    %v3763 = vunpack.c.l.b16 %v1502
    %v3764 = vunpack.c.h.b16 %v1502
    %v3765 = vunpack.c.l.b16 %v1503
    %v3766 = vunpack.c.h.b16 %v1503
    %v3767 = vunpack.c.l.b16 %v1504
    %v3768 = vunpack.c.h.b16 %v1504
    %v3769 = vunpack.c.l.b16 %v1505
    %v3770 = vunpack.c.h.b16 %v1505
    %v3771 = vunpack.c.l.b16 %v1506
    %v3772 = vunpack.c.h.b16 %v1506
    %v3773 = vunpack.c.l.b16 %v1507
    %v3774 = vunpack.c.h.b16 %v1507
    %v3775 = vunpack.c.l.b16 %v1508
    %v3776 = vunpack.c.h.b16 %v1508
    %v3777 = vunpack.c.l.b16 %v1509
    %v3778 = vunpack.c.h.b16 %v1509
    %v3779 = vunpack.c.l.b16 %v1510
    %v3780 = vunpack.c.h.b16 %v1510
    %v3781 = vunpack.c.l.b16 %v1511
    %v3782 = vunpack.c.h.b16 %v1511
    %v3783 = vunpack.c.l.b16 %v1512
    %v3784 = vunpack.c.h.b16 %v1512
    %v3785 = vunpack.c.l.b16 %v1513
    %v3786 = vunpack.c.h.b16 %v1513
    %v3787 = vunpack.c.l.b16 %v1514
    %v3788 = vunpack.c.h.b16 %v1514
    %v3789 = vunpack.c.l.b16 %v1515
    %v3790 = vunpack.c.h.b16 %v1515
    %v3791 = vunpack.c.l.b16 %v1516
    %v3792 = vunpack.c.h.b16 %v1516
    %v3793 = vunpack.c.l.b16 %v1517
    %v3794 = vunpack.c.h.b16 %v1517
    %v3795 = vunpack.c.l.b16 %v1518
    %v3796 = vunpack.c.h.b16 %v1518
    %v3797 = vunpack.c.l.b16 %v1519
    %v3798 = vunpack.c.h.b16 %v1519
    %v3799 = vunpack.c.l.b16 %v1520
    %v3800 = vunpack.c.h.b16 %v1520
    %v3801 = vunpack.c.l.b16 %v1521
    %v3802 = vunpack.c.h.b16 %v1521
    %v3803 = vunpack.c.l.b16 %v1522
    %v3804 = vunpack.c.h.b16 %v1522
    %v3805 = vunpack.c.l.b16 %v1523
    %v3806 = vunpack.c.h.b16 %v1523
    %v3807 = vunpack.c.l.b16 %v1524
    %v3808 = vunpack.c.h.b16 %v1524
    %v3809 = vunpack.c.l.b16 %v1525
    %v3810 = vunpack.c.h.b16 %v1525
    %v3811 = vunpack.c.l.b16 %v1526
    %v3812 = vunpack.c.h.b16 %v1526
    %v3813 = vunpack.c.l.b16 %v1527
    %v3814 = vunpack.c.h.b16 %v1527
    %v3815 = vunpack.c.l.b16 %v1528
    %v3816 = vunpack.c.h.b16 %v1528
    %v3817 = vunpack.c.l.b16 %v1529
    %v3818 = vunpack.c.h.b16 %v1529
    %v3819 = vunpack.c.l.b16 %v1530
    %v3820 = vunpack.c.h.b16 %v1530
    %v3821 = vunpack.c.l.b16 %v1531
    %v3822 = vunpack.c.h.b16 %v1531
    %v3823 = vunpack.c.l.b16 %v1532
    %v3824 = vunpack.c.h.b16 %v1532
    %v3825 = vunpack.c.l.b16 %v1533
    %v3826 = vunpack.c.h.b16 %v1533
    %v3827 = vunpack.c.l.b16 %v1534
    %v3828 = vunpack.c.h.b16 %v1534
    %v3829 = vunpack.c.l.b16 %v1535
    %v3830 = vunpack.c.h.b16 %v1535
    %v3831 = vunpack.c.l.b16 %v1536
    %v3832 = vunpack.c.h.b16 %v1536
    %v3833 = vunpack.c.l.b16 %v1537
    %v3834 = vunpack.c.h.b16 %v1537
    %v3835 = vunpack.c.l.b16 %v1538
    %v3836 = vunpack.c.h.b16 %v1538
    %v3837 = vunpack.c.l.b16 %v1539
    %v3838 = vunpack.c.h.b16 %v1539
    %v3839 = vunpack.c.l.b16 %v1540
    %v3840 = vunpack.c.h.b16 %v1540
    %v3841 = vunpack.c.l.b16 %v1541
    %v3842 = vunpack.c.h.b16 %v1541
    %v3843 = vunpack.c.l.b16 %v1542
    %v3844 = vunpack.c.h.b16 %v1542
    %v3845 = vunpack.c.l.b16 %v1543
    %v3846 = vunpack.c.h.b16 %v1543
    %v3847 = vunpack.c.l.b16 %v1544
    %v3848 = vunpack.c.h.b16 %v1544
    %v3849 = vpack.c.b16 %v2325, %v2313
    %v3850 = vpack.c.b16 %v2326, %v2314
    %v3851 = vpack.c.b16 %v2327, %v2315
    %v3852 = vpack.c.b16 %v2328, %v2316
    %v3853 = vpack.c.b16 %v2329, %v2317
    %v3854 = vpack.c.b16 %v2330, %v2318
    %v3855 = vpack.c.b16 %v2331, %v2319
    %v3856 = vpack.c.b16 %v2332, %v2320
    %v3857 = vpack.c.b16 %v2333, %v2321
    %v3858 = vpack.c.b16 %v2334, %v2322
    %v3859 = vpack.c.b16 %v2335, %v2323
    %v3860 = vpack.c.b16 %v2336, %v2324
    %v3861 = vpack.c.b16 %v2349, %v2337
    %v3862 = vpack.c.b16 %v2350, %v2338
    %v3863 = vpack.c.b16 %v2351, %v2339
    %v3864 = vpack.c.b16 %v2352, %v2340
    %v3865 = vpack.c.b16 %v2353, %v2341
    %v3866 = vpack.c.b16 %v2354, %v2342
    %v3867 = vpack.c.b16 %v2355, %v2343
    %v3868 = vpack.c.b16 %v2356, %v2344
    %v3869 = vpack.c.b16 %v2357, %v2345
    %v3870 = vpack.c.b16 %v2358, %v2346
    %v3871 = vpack.c.b16 %v2359, %v2347
    %v3872 = vpack.c.b16 %v2360, %v2348
    %v3873 = vpack.c.b16 %v2373, %v2361
    %v3874 = vpack.c.b16 %v2374, %v2362
    %v3875 = vpack.c.b16 %v2375, %v2363
    %v3876 = vpack.c.b16 %v2376, %v2364
    %v3877 = vpack.c.b16 %v2377, %v2365
    %v3878 = vpack.c.b16 %v2378, %v2366
    %v3879 = vpack.c.b16 %v2379, %v2367
    %v3880 = vpack.c.b16 %v2380, %v2368
    %v3881 = vpack.c.b16 %v2381, %v2369
    %v3882 = vpack.c.b16 %v2382, %v2370
    %v3883 = vpack.c.b16 %v2383, %v2371
    %v3884 = vpack.c.b16 %v2384, %v2372
    %v3885 = vpack.c.b16 %v2397, %v2385
    %v3886 = vpack.c.b16 %v2398, %v2386
    %v3887 = vpack.c.b16 %v2399, %v2387
    %v3888 = vpack.c.b16 %v2400, %v2388
    %v3889 = vpack.c.b16 %v2401, %v2389
    %v3890 = vpack.c.b16 %v2402, %v2390
    %v3891 = vpack.c.b16 %v2403, %v2391
    %v3892 = vpack.c.b16 %v2404, %v2392
    %v3893 = vpack.c.b16 %v2405, %v2393
    %v3894 = vpack.c.b16 %v2406, %v2394
    %v3895 = vpack.c.b16 %v2407, %v2395
    %v3896 = vpack.c.b16 %v2408, %v2396
    %v3897 = vpack.c.b16 %v2421, %v2409
    %v3898 = vpack.c.b16 %v2422, %v2410
    %v3899 = vpack.c.b16 %v2423, %v2411
    %v3900 = vpack.c.b16 %v2424, %v2412
    %v3901 = vpack.c.b16 %v2425, %v2413
    %v3902 = vpack.c.b16 %v2426, %v2414
    %v3903 = vpack.c.b16 %v2427, %v2415
    %v3904 = vpack.c.b16 %v2428, %v2416
    %v3905 = vpack.c.b16 %v2429, %v2417
    %v3906 = vpack.c.b16 %v2430, %v2418
    %v3907 = vpack.c.b16 %v2431, %v2419
    %v3908 = vpack.c.b16 %v2432, %v2420
    %v3909 = vpack.c.b16 %v2445, %v2433
    %v3910 = vpack.c.b16 %v2446, %v2434
    %v3911 = vpack.c.b16 %v2447, %v2435
    %v3912 = vpack.c.b16 %v2448, %v2436
    %v3913 = vpack.c.b16 %v2449, %v2437
    %v3914 = vpack.c.b16 %v2450, %v2438
    %v3915 = vpack.c.b16 %v2451, %v2439
    %v3916 = vpack.c.b16 %v2452, %v2440
    %v3917 = vpack.c.b16 %v2453, %v2441
    %v3918 = vpack.c.b16 %v2454, %v2442
    %v3919 = vpack.c.b16 %v2455, %v2443
    %v3920 = vpack.c.b16 %v2456, %v2444
    %v3921 = vpack.c.b16 %v2469, %v2457
    %v3922 = vpack.c.b16 %v2470, %v2458
    %v3923 = vpack.c.b16 %v2471, %v2459
    %v3924 = vpack.c.b16 %v2472, %v2460
    %v3925 = vpack.c.b16 %v2473, %v2461
    %v3926 = vpack.c.b16 %v2474, %v2462
    %v3927 = vpack.c.b16 %v2475, %v2463
    %v3928 = vpack.c.b16 %v2476, %v2464
    %v3929 = vpack.c.b16 %v2477, %v2465
    %v3930 = vpack.c.b16 %v2478, %v2466
    %v3931 = vpack.c.b16 %v2479, %v2467
    %v3932 = vpack.c.b16 %v2480, %v2468
    %v3933 = vpack.c.b16 %v2493, %v2481
    %v3934 = vpack.c.b16 %v2494, %v2482
    %v3935 = vpack.c.b16 %v2495, %v2483
    %v3936 = vpack.c.b16 %v2496, %v2484
    %v3937 = vpack.c.b16 %v2497, %v2485
    %v3938 = vpack.c.b16 %v2498, %v2486
    %v3939 = vpack.c.b16 %v2499, %v2487
    %v3940 = vpack.c.b16 %v2500, %v2488
    %v3941 = vpack.c.b16 %v2501, %v2489
    %v3942 = vpack.c.b16 %v2502, %v2490
    %v3943 = vpack.c.b16 %v2503, %v2491
    %v3944 = vpack.c.b16 %v2504, %v2492
    %v3945 = vpack.c.b16 %v2517, %v2505
    %v3946 = vpack.c.b16 %v2518, %v2506
    %v3947 = vpack.c.b16 %v2519, %v2507
    %v3948 = vpack.c.b16 %v2520, %v2508
    %v3949 = vpack.c.b16 %v2521, %v2509
    %v3950 = vpack.c.b16 %v2522, %v2510
    %v3951 = vpack.c.b16 %v2523, %v2511
    %v3952 = vpack.c.b16 %v2524, %v2512
    %v3953 = vpack.c.b16 %v2525, %v2513
    %v3954 = vpack.c.b16 %v2526, %v2514
    %v3955 = vpack.c.b16 %v2527, %v2515
    %v3956 = vpack.c.b16 %v2528, %v2516
    %v3957 = vpack.c.b16 %v2541, %v2529
    %v3958 = vpack.c.b16 %v2542, %v2530
    %v3959 = vpack.c.b16 %v2543, %v2531
    %v3960 = vpack.c.b16 %v2544, %v2532
    %v3961 = vpack.c.b16 %v2545, %v2533
    %v3962 = vpack.c.b16 %v2546, %v2534
    %v3963 = vpack.c.b16 %v2547, %v2535
    %v3964 = vpack.c.b16 %v2548, %v2536
    %v3965 = vpack.c.b16 %v2549, %v2537
    %v3966 = vpack.c.b16 %v2550, %v2538
    %v3967 = vpack.c.b16 %v2551, %v2539
    %v3968 = vpack.c.b16 %v2552, %v2540
    %v3969 = vpack.c.b16 %v2565, %v2553
    %v3970 = vpack.c.b16 %v2566, %v2554
    %v3971 = vpack.c.b16 %v2567, %v2555
    %v3972 = vpack.c.b16 %v2568, %v2556
    %v3973 = vpack.c.b16 %v2569, %v2557
    %v3974 = vpack.c.b16 %v2570, %v2558
    %v3975 = vpack.c.b16 %v2571, %v2559
    %v3976 = vpack.c.b16 %v2572, %v2560
    %v3977 = vpack.c.b16 %v2573, %v2561
    %v3978 = vpack.c.b16 %v2574, %v2562
    %v3979 = vpack.c.b16 %v2575, %v2563
    %v3980 = vpack.c.b16 %v2576, %v2564
    %v3981 = vpack.c.b16 %v2589, %v2577
    %v3982 = vpack.c.b16 %v2590, %v2578
    %v3983 = vpack.c.b16 %v2591, %v2579
    %v3984 = vpack.c.b16 %v2592, %v2580
    %v3985 = vpack.c.b16 %v2593, %v2581
    %v3986 = vpack.c.b16 %v2594, %v2582
    %v3987 = vpack.c.b16 %v2595, %v2583
    %v3988 = vpack.c.b16 %v2596, %v2584
    %v3989 = vpack.c.b16 %v2597, %v2585
    %v3990 = vpack.c.b16 %v2598, %v2586
    %v3991 = vpack.c.b16 %v2599, %v2587
    %v3992 = vpack.c.b16 %v2600, %v2588
    %v3993 = vpack.c.b16 %v2613, %v2601
    %v3994 = vpack.c.b16 %v2614, %v2602
    %v3995 = vpack.c.b16 %v2615, %v2603
    %v3996 = vpack.c.b16 %v2616, %v2604
    %v3997 = vpack.c.b16 %v2617, %v2605
    %v3998 = vpack.c.b16 %v2618, %v2606
    %v3999 = vpack.c.b16 %v2619, %v2607
    %v4000 = vpack.c.b16 %v2620, %v2608
    %v4001 = vpack.c.b16 %v2621, %v2609
    %v4002 = vpack.c.b16 %v2622, %v2610
    %v4003 = vpack.c.b16 %v2623, %v2611
    %v4004 = vpack.c.b16 %v2624, %v2612
    %v4005 = vpack.c.b16 %v2637, %v2625
    %v4006 = vpack.c.b16 %v2638, %v2626
    %v4007 = vpack.c.b16 %v2639, %v2627
    %v4008 = vpack.c.b16 %v2640, %v2628
    %v4009 = vpack.c.b16 %v2641, %v2629
    %v4010 = vpack.c.b16 %v2642, %v2630
    %v4011 = vpack.c.b16 %v2643, %v2631
    %v4012 = vpack.c.b16 %v2644, %v2632
    %v4013 = vpack.c.b16 %v2645, %v2633
    %v4014 = vpack.c.b16 %v2646, %v2634
    %v4015 = vpack.c.b16 %v2647, %v2635
    %v4016 = vpack.c.b16 %v2648, %v2636
    %v4017 = vpack.c.b16 %v2661, %v2649
    %v4018 = vpack.c.b16 %v2662, %v2650
    %v4019 = vpack.c.b16 %v2663, %v2651
    %v4020 = vpack.c.b16 %v2664, %v2652
    %v4021 = vpack.c.b16 %v2665, %v2653
    %v4022 = vpack.c.b16 %v2666, %v2654
    %v4023 = vpack.c.b16 %v2667, %v2655
    %v4024 = vpack.c.b16 %v2668, %v2656
    %v4025 = vpack.c.b16 %v2669, %v2657
    %v4026 = vpack.c.b16 %v2670, %v2658
    %v4027 = vpack.c.b16 %v2671, %v2659
    %v4028 = vpack.c.b16 %v2672, %v2660
    %v4029 = vpack.c.b16 %v2685, %v2673
    %v4030 = vpack.c.b16 %v2686, %v2674
    %v4031 = vpack.c.b16 %v2687, %v2675
    %v4032 = vpack.c.b16 %v2688, %v2676
    %v4033 = vpack.c.b16 %v2689, %v2677
    %v4034 = vpack.c.b16 %v2690, %v2678
    %v4035 = vpack.c.b16 %v2691, %v2679
    %v4036 = vpack.c.b16 %v2692, %v2680
    %v4037 = vpack.c.b16 %v2693, %v2681
    %v4038 = vpack.c.b16 %v2694, %v2682
    %v4039 = vpack.c.b16 %v2695, %v2683
    %v4040 = vpack.c.b16 %v2696, %v2684
    %v4041 = vpack.c.b16 %v2709, %v2697
    %v4042 = vpack.c.b16 %v2710, %v2698
    %v4043 = vpack.c.b16 %v2711, %v2699
    %v4044 = vpack.c.b16 %v2712, %v2700
    %v4045 = vpack.c.b16 %v2713, %v2701
    %v4046 = vpack.c.b16 %v2714, %v2702
    %v4047 = vpack.c.b16 %v2715, %v2703
    %v4048 = vpack.c.b16 %v2716, %v2704
    %v4049 = vpack.c.b16 %v2717, %v2705
    %v4050 = vpack.c.b16 %v2718, %v2706
    %v4051 = vpack.c.b16 %v2719, %v2707
    %v4052 = vpack.c.b16 %v2720, %v2708
    %v4053 = vpack.c.b16 %v2733, %v2721
    %v4054 = vpack.c.b16 %v2734, %v2722
    %v4055 = vpack.c.b16 %v2735, %v2723
    %v4056 = vpack.c.b16 %v2736, %v2724
    %v4057 = vpack.c.b16 %v2737, %v2725
    %v4058 = vpack.c.b16 %v2738, %v2726
    %v4059 = vpack.c.b16 %v2739, %v2727
    %v4060 = vpack.c.b16 %v2740, %v2728
    %v4061 = vpack.c.b16 %v2741, %v2729
    %v4062 = vpack.c.b16 %v2742, %v2730
    %v4063 = vpack.c.b16 %v2743, %v2731
    %v4064 = vpack.c.b16 %v2744, %v2732
    %v4065 = vpack.c.b16 %v2757, %v2745
    %v4066 = vpack.c.b16 %v2758, %v2746
    %v4067 = vpack.c.b16 %v2759, %v2747
    %v4068 = vpack.c.b16 %v2760, %v2748
    %v4069 = vpack.c.b16 %v2761, %v2749
    %v4070 = vpack.c.b16 %v2762, %v2750
    %v4071 = vpack.c.b16 %v2763, %v2751
    %v4072 = vpack.c.b16 %v2764, %v2752
    %v4073 = vpack.c.b16 %v2765, %v2753
    %v4074 = vpack.c.b16 %v2766, %v2754
    %v4075 = vpack.c.b16 %v2767, %v2755
    %v4076 = vpack.c.b16 %v2768, %v2756
    %v4077 = vpack.c.b16 %v2781, %v2769
    %v4078 = vpack.c.b16 %v2782, %v2770
    %v4079 = vpack.c.b16 %v2783, %v2771
    %v4080 = vpack.c.b16 %v2784, %v2772
    %v4081 = vpack.c.b16 %v2785, %v2773
    %v4082 = vpack.c.b16 %v2786, %v2774
    %v4083 = vpack.c.b16 %v2787, %v2775
    %v4084 = vpack.c.b16 %v2788, %v2776
    %v4085 = vpack.c.b16 %v2789, %v2777
    %v4086 = vpack.c.b16 %v2790, %v2778
    %v4087 = vpack.c.b16 %v2791, %v2779
    %v4088 = vpack.c.b16 %v2792, %v2780
    %v4089 = vpack.c.b16 %v2805, %v2793
    %v4090 = vpack.c.b16 %v2806, %v2794
    %v4091 = vpack.c.b16 %v2807, %v2795
    %v4092 = vpack.c.b16 %v2808, %v2796
    %v4093 = vpack.c.b16 %v2809, %v2797
    %v4094 = vpack.c.b16 %v2810, %v2798
    %v4095 = vpack.c.b16 %v2811, %v2799
    %v4096 = vpack.c.b16 %v2812, %v2800
    %v4097 = vpack.c.b16 %v2813, %v2801
    %v4098 = vpack.c.b16 %v2814, %v2802
    %v4099 = vpack.c.b16 %v2815, %v2803
    %v4100 = vpack.c.b16 %v2816, %v2804
    %v4101 = vpack.c.b16 %v2829, %v2817
    %v4102 = vpack.c.b16 %v2830, %v2818
    %v4103 = vpack.c.b16 %v2831, %v2819
    %v4104 = vpack.c.b16 %v2832, %v2820
    %v4105 = vpack.c.b16 %v2833, %v2821
    %v4106 = vpack.c.b16 %v2834, %v2822
    %v4107 = vpack.c.b16 %v2835, %v2823
    %v4108 = vpack.c.b16 %v2836, %v2824
    %v4109 = vpack.c.b16 %v2837, %v2825
    %v4110 = vpack.c.b16 %v2838, %v2826
    %v4111 = vpack.c.b16 %v2839, %v2827
    %v4112 = vpack.c.b16 %v2840, %v2828
    %v4113 = vpack.c.b16 %v2853, %v2841
    %v4114 = vpack.c.b16 %v2854, %v2842
    %v4115 = vpack.c.b16 %v2855, %v2843
    %v4116 = vpack.c.b16 %v2856, %v2844
    %v4117 = vpack.c.b16 %v2857, %v2845
    %v4118 = vpack.c.b16 %v2858, %v2846
    %v4119 = vpack.c.b16 %v2859, %v2847
    %v4120 = vpack.c.b16 %v2860, %v2848
    %v4121 = vpack.c.b16 %v2861, %v2849
    %v4122 = vpack.c.b16 %v2862, %v2850
    %v4123 = vpack.c.b16 %v2863, %v2851
    %v4124 = vpack.c.b16 %v2864, %v2852
    %v4125 = vpack.c.b16 %v2877, %v2865
    %v4126 = vpack.c.b16 %v2878, %v2866
    %v4127 = vpack.c.b16 %v2879, %v2867
    %v4128 = vpack.c.b16 %v2880, %v2868
    %v4129 = vpack.c.b16 %v2881, %v2869
    %v4130 = vpack.c.b16 %v2882, %v2870
    %v4131 = vpack.c.b16 %v2883, %v2871
    %v4132 = vpack.c.b16 %v2884, %v2872
    %v4133 = vpack.c.b16 %v2885, %v2873
    %v4134 = vpack.c.b16 %v2886, %v2874
    %v4135 = vpack.c.b16 %v2887, %v2875
    %v4136 = vpack.c.b16 %v2888, %v2876
    %v4137 = vpack.c.b16 %v2901, %v2889
    %v4138 = vpack.c.b16 %v2902, %v2890
    %v4139 = vpack.c.b16 %v2903, %v2891
    %v4140 = vpack.c.b16 %v2904, %v2892
    %v4141 = vpack.c.b16 %v2905, %v2893
    %v4142 = vpack.c.b16 %v2906, %v2894
    %v4143 = vpack.c.b16 %v2907, %v2895
    %v4144 = vpack.c.b16 %v2908, %v2896
    %v4145 = vpack.c.b16 %v2909, %v2897
    %v4146 = vpack.c.b16 %v2910, %v2898
    %v4147 = vpack.c.b16 %v2911, %v2899
    %v4148 = vpack.c.b16 %v2912, %v2900
    %v4149 = vpack.c.b16 %v2925, %v2913
    %v4150 = vpack.c.b16 %v2926, %v2914
    %v4151 = vpack.c.b16 %v2927, %v2915
    %v4152 = vpack.c.b16 %v2928, %v2916
    %v4153 = vpack.c.b16 %v2929, %v2917
    %v4154 = vpack.c.b16 %v2930, %v2918
    %v4155 = vpack.c.b16 %v2931, %v2919
    %v4156 = vpack.c.b16 %v2932, %v2920
    %v4157 = vpack.c.b16 %v2933, %v2921
    %v4158 = vpack.c.b16 %v2934, %v2922
    %v4159 = vpack.c.b16 %v2935, %v2923
    %v4160 = vpack.c.b16 %v2936, %v2924
    %v4161 = vpack.c.b16 %v2949, %v2937
    %v4162 = vpack.c.b16 %v2950, %v2938
    %v4163 = vpack.c.b16 %v2951, %v2939
    %v4164 = vpack.c.b16 %v2952, %v2940
    %v4165 = vpack.c.b16 %v2953, %v2941
    %v4166 = vpack.c.b16 %v2954, %v2942
    %v4167 = vpack.c.b16 %v2955, %v2943
    %v4168 = vpack.c.b16 %v2956, %v2944
    %v4169 = vpack.c.b16 %v2957, %v2945
    %v4170 = vpack.c.b16 %v2958, %v2946
    %v4171 = vpack.c.b16 %v2959, %v2947
    %v4172 = vpack.c.b16 %v2960, %v2948
    %v4173 = vpack.c.b16 %v2973, %v2961
    %v4174 = vpack.c.b16 %v2974, %v2962
    %v4175 = vpack.c.b16 %v2975, %v2963
    %v4176 = vpack.c.b16 %v2976, %v2964
    %v4177 = vpack.c.b16 %v2977, %v2965
    %v4178 = vpack.c.b16 %v2978, %v2966
    %v4179 = vpack.c.b16 %v2979, %v2967
    %v4180 = vpack.c.b16 %v2980, %v2968
    %v4181 = vpack.c.b16 %v2981, %v2969
    %v4182 = vpack.c.b16 %v2982, %v2970
    %v4183 = vpack.c.b16 %v2983, %v2971
    %v4184 = vpack.c.b16 %v2984, %v2972
    %v4185 = vpack.c.b16 %v2997, %v2985
    %v4186 = vpack.c.b16 %v2998, %v2986
    %v4187 = vpack.c.b16 %v2999, %v2987
    %v4188 = vpack.c.b16 %v3000, %v2988
    %v4189 = vpack.c.b16 %v3001, %v2989
    %v4190 = vpack.c.b16 %v3002, %v2990
    %v4191 = vpack.c.b16 %v3003, %v2991
    %v4192 = vpack.c.b16 %v3004, %v2992
    %v4193 = vpack.c.b16 %v3005, %v2993
    %v4194 = vpack.c.b16 %v3006, %v2994
    %v4195 = vpack.c.b16 %v3007, %v2995
    %v4196 = vpack.c.b16 %v3008, %v2996
    %v4197 = vpack.c.b16 %v3021, %v3009
    %v4198 = vpack.c.b16 %v3022, %v3010
    %v4199 = vpack.c.b16 %v3023, %v3011
    %v4200 = vpack.c.b16 %v3024, %v3012
    %v4201 = vpack.c.b16 %v3025, %v3013
    %v4202 = vpack.c.b16 %v3026, %v3014
    %v4203 = vpack.c.b16 %v3027, %v3015
    %v4204 = vpack.c.b16 %v3028, %v3016
    %v4205 = vpack.c.b16 %v3029, %v3017
    %v4206 = vpack.c.b16 %v3030, %v3018
    %v4207 = vpack.c.b16 %v3031, %v3019
    %v4208 = vpack.c.b16 %v3032, %v3020
    %v4209 = vpack.c.b16 %v3045, %v3033
    %v4210 = vpack.c.b16 %v3046, %v3034
    %v4211 = vpack.c.b16 %v3047, %v3035
    %v4212 = vpack.c.b16 %v3048, %v3036
    %v4213 = vpack.c.b16 %v3049, %v3037
    %v4214 = vpack.c.b16 %v3050, %v3038
    %v4215 = vpack.c.b16 %v3051, %v3039
    %v4216 = vpack.c.b16 %v3052, %v3040
    %v4217 = vpack.c.b16 %v3053, %v3041
    %v4218 = vpack.c.b16 %v3054, %v3042
    %v4219 = vpack.c.b16 %v3055, %v3043
    %v4220 = vpack.c.b16 %v3056, %v3044
    %v4221 = vpack.c.b16 %v3069, %v3057
    %v4222 = vpack.c.b16 %v3070, %v3058
    %v4223 = vpack.c.b16 %v3071, %v3059
    %v4224 = vpack.c.b16 %v3072, %v3060
    %v4225 = vpack.c.b16 %v3073, %v3061
    %v4226 = vpack.c.b16 %v3074, %v3062
    %v4227 = vpack.c.b16 %v3075, %v3063
    %v4228 = vpack.c.b16 %v3076, %v3064
    %v4229 = vpack.c.b16 %v3077, %v3065
    %v4230 = vpack.c.b16 %v3078, %v3066
    %v4231 = vpack.c.b16 %v3079, %v3067
    %v4232 = vpack.c.b16 %v3080, %v3068
    %v4233 = vpack.c.b16 %v3093, %v3081
    %v4234 = vpack.c.b16 %v3094, %v3082
    %v4235 = vpack.c.b16 %v3095, %v3083
    %v4236 = vpack.c.b16 %v3096, %v3084
    %v4237 = vpack.c.b16 %v3097, %v3085
    %v4238 = vpack.c.b16 %v3098, %v3086
    %v4239 = vpack.c.b16 %v3099, %v3087
    %v4240 = vpack.c.b16 %v3100, %v3088
    %v4241 = vpack.c.b16 %v3101, %v3089
    %v4242 = vpack.c.b16 %v3102, %v3090
    %v4243 = vpack.c.b16 %v3103, %v3091
    %v4244 = vpack.c.b16 %v3104, %v3092
    %v4245 = vpack.c.b16 %v3117, %v3105
    %v4246 = vpack.c.b16 %v3118, %v3106
    %v4247 = vpack.c.b16 %v3119, %v3107
    %v4248 = vpack.c.b16 %v3120, %v3108
    %v4249 = vpack.c.b16 %v3121, %v3109
    %v4250 = vpack.c.b16 %v3122, %v3110
    %v4251 = vpack.c.b16 %v3123, %v3111
    %v4252 = vpack.c.b16 %v3124, %v3112
    %v4253 = vpack.c.b16 %v3125, %v3113
    %v4254 = vpack.c.b16 %v3126, %v3114
    %v4255 = vpack.c.b16 %v3127, %v3115
    %v4256 = vpack.c.b16 %v3128, %v3116
    %v4257 = vpack.c.b16 %v3141, %v3129
    %v4258 = vpack.c.b16 %v3142, %v3130
    %v4259 = vpack.c.b16 %v3143, %v3131
    %v4260 = vpack.c.b16 %v3144, %v3132
    %v4261 = vpack.c.b16 %v3145, %v3133
    %v4262 = vpack.c.b16 %v3146, %v3134
    %v4263 = vpack.c.b16 %v3147, %v3135
    %v4264 = vpack.c.b16 %v3148, %v3136
    %v4265 = vpack.c.b16 %v3149, %v3137
    %v4266 = vpack.c.b16 %v3150, %v3138
    %v4267 = vpack.c.b16 %v3151, %v3139
    %v4268 = vpack.c.b16 %v3152, %v3140
    %v4269 = vpack.c.b16 %v3165, %v3153
    %v4270 = vpack.c.b16 %v3166, %v3154
    %v4271 = vpack.c.b16 %v3167, %v3155
    %v4272 = vpack.c.b16 %v3168, %v3156
    %v4273 = vpack.c.b16 %v3169, %v3157
    %v4274 = vpack.c.b16 %v3170, %v3158
    %v4275 = vpack.c.b16 %v3171, %v3159
    %v4276 = vpack.c.b16 %v3172, %v3160
    %v4277 = vpack.c.b16 %v3173, %v3161
    %v4278 = vpack.c.b16 %v3174, %v3162
    %v4279 = vpack.c.b16 %v3175, %v3163
    %v4280 = vpack.c.b16 %v3176, %v3164
    %v4281 = vpack.c.b16 %v3189, %v3177
    %v4282 = vpack.c.b16 %v3190, %v3178
    %v4283 = vpack.c.b16 %v3191, %v3179
    %v4284 = vpack.c.b16 %v3192, %v3180
    %v4285 = vpack.c.b16 %v3193, %v3181
    %v4286 = vpack.c.b16 %v3194, %v3182
    %v4287 = vpack.c.b16 %v3195, %v3183
    %v4288 = vpack.c.b16 %v3196, %v3184
    %v4289 = vpack.c.b16 %v3197, %v3185
    %v4290 = vpack.c.b16 %v3198, %v3186
    %v4291 = vpack.c.b16 %v3199, %v3187
    %v4292 = vpack.c.b16 %v3200, %v3188
    %v4293 = vpack.c.b16 %v3213, %v3201
    %v4294 = vpack.c.b16 %v3214, %v3202
    %v4295 = vpack.c.b16 %v3215, %v3203
    %v4296 = vpack.c.b16 %v3216, %v3204
    %v4297 = vpack.c.b16 %v3217, %v3205
    %v4298 = vpack.c.b16 %v3218, %v3206
    %v4299 = vpack.c.b16 %v3219, %v3207
    %v4300 = vpack.c.b16 %v3220, %v3208
    %v4301 = vpack.c.b16 %v3221, %v3209
    %v4302 = vpack.c.b16 %v3222, %v3210
    %v4303 = vpack.c.b16 %v3223, %v3211
    %v4304 = vpack.c.b16 %v3224, %v3212
    %v4305 = vpack.c.b16 %v3237, %v3225
    %v4306 = vpack.c.b16 %v3238, %v3226
    %v4307 = vpack.c.b16 %v3239, %v3227
    %v4308 = vpack.c.b16 %v3240, %v3228
    %v4309 = vpack.c.b16 %v3241, %v3229
    %v4310 = vpack.c.b16 %v3242, %v3230
    %v4311 = vpack.c.b16 %v3243, %v3231
    %v4312 = vpack.c.b16 %v3244, %v3232
    %v4313 = vpack.c.b16 %v3245, %v3233
    %v4314 = vpack.c.b16 %v3246, %v3234
    %v4315 = vpack.c.b16 %v3247, %v3235
    %v4316 = vpack.c.b16 %v3248, %v3236
    %v4317 = vpack.c.b16 %v3261, %v3249
    %v4318 = vpack.c.b16 %v3262, %v3250
    %v4319 = vpack.c.b16 %v3263, %v3251
    %v4320 = vpack.c.b16 %v3264, %v3252
    %v4321 = vpack.c.b16 %v3265, %v3253
    %v4322 = vpack.c.b16 %v3266, %v3254
    %v4323 = vpack.c.b16 %v3267, %v3255
    %v4324 = vpack.c.b16 %v3268, %v3256
    %v4325 = vpack.c.b16 %v3269, %v3257
    %v4326 = vpack.c.b16 %v3270, %v3258
    %v4327 = vpack.c.b16 %v3271, %v3259
    %v4328 = vpack.c.b16 %v3272, %v3260
    %v4329 = vpack.c.b16 %v3285, %v3273
    %v4330 = vpack.c.b16 %v3286, %v3274
    %v4331 = vpack.c.b16 %v3287, %v3275
    %v4332 = vpack.c.b16 %v3288, %v3276
    %v4333 = vpack.c.b16 %v3289, %v3277
    %v4334 = vpack.c.b16 %v3290, %v3278
    %v4335 = vpack.c.b16 %v3291, %v3279
    %v4336 = vpack.c.b16 %v3292, %v3280
    %v4337 = vpack.c.b16 %v3293, %v3281
    %v4338 = vpack.c.b16 %v3294, %v3282
    %v4339 = vpack.c.b16 %v3295, %v3283
    %v4340 = vpack.c.b16 %v3296, %v3284
    %v4341 = vpack.c.b16 %v3309, %v3297
    %v4342 = vpack.c.b16 %v3310, %v3298
    %v4343 = vpack.c.b16 %v3311, %v3299
    %v4344 = vpack.c.b16 %v3312, %v3300
    %v4345 = vpack.c.b16 %v3313, %v3301
    %v4346 = vpack.c.b16 %v3314, %v3302
    %v4347 = vpack.c.b16 %v3315, %v3303
    %v4348 = vpack.c.b16 %v3316, %v3304
    %v4349 = vpack.c.b16 %v3317, %v3305
    %v4350 = vpack.c.b16 %v3318, %v3306
    %v4351 = vpack.c.b16 %v3319, %v3307
    %v4352 = vpack.c.b16 %v3320, %v3308
    %v4353 = vpack.c.b16 %v3333, %v3321
    %v4354 = vpack.c.b16 %v3334, %v3322
    %v4355 = vpack.c.b16 %v3335, %v3323
    %v4356 = vpack.c.b16 %v3336, %v3324
    %v4357 = vpack.c.b16 %v3337, %v3325
    %v4358 = vpack.c.b16 %v3338, %v3326
    %v4359 = vpack.c.b16 %v3339, %v3327
    %v4360 = vpack.c.b16 %v3340, %v3328
    %v4361 = vpack.c.b16 %v3341, %v3329
    %v4362 = vpack.c.b16 %v3342, %v3330
    %v4363 = vpack.c.b16 %v3343, %v3331
    %v4364 = vpack.c.b16 %v3344, %v3332
    %v4365 = vpack.c.b16 %v3357, %v3345
    %v4366 = vpack.c.b16 %v3358, %v3346
    %v4367 = vpack.c.b16 %v3359, %v3347
    %v4368 = vpack.c.b16 %v3360, %v3348
    %v4369 = vpack.c.b16 %v3361, %v3349
    %v4370 = vpack.c.b16 %v3362, %v3350
    %v4371 = vpack.c.b16 %v3363, %v3351
    %v4372 = vpack.c.b16 %v3364, %v3352
    %v4373 = vpack.c.b16 %v3365, %v3353
    %v4374 = vpack.c.b16 %v3366, %v3354
    %v4375 = vpack.c.b16 %v3367, %v3355
    %v4376 = vpack.c.b16 %v3368, %v3356
    %v4377 = vpack.c.b16 %v3381, %v3369
    %v4378 = vpack.c.b16 %v3382, %v3370
    %v4379 = vpack.c.b16 %v3383, %v3371
    %v4380 = vpack.c.b16 %v3384, %v3372
    %v4381 = vpack.c.b16 %v3385, %v3373
    %v4382 = vpack.c.b16 %v3386, %v3374
    %v4383 = vpack.c.b16 %v3387, %v3375
    %v4384 = vpack.c.b16 %v3388, %v3376
    %v4385 = vpack.c.b16 %v3389, %v3377
    %v4386 = vpack.c.b16 %v3390, %v3378
    %v4387 = vpack.c.b16 %v3391, %v3379
    %v4388 = vpack.c.b16 %v3392, %v3380
    %v4389 = vpack.c.b16 %v3405, %v3393
    %v4390 = vpack.c.b16 %v3406, %v3394
    %v4391 = vpack.c.b16 %v3407, %v3395
    %v4392 = vpack.c.b16 %v3408, %v3396
    %v4393 = vpack.c.b16 %v3409, %v3397
    %v4394 = vpack.c.b16 %v3410, %v3398
    %v4395 = vpack.c.b16 %v3411, %v3399
    %v4396 = vpack.c.b16 %v3412, %v3400
    %v4397 = vpack.c.b16 %v3413, %v3401
    %v4398 = vpack.c.b16 %v3414, %v3402
    %v4399 = vpack.c.b16 %v3415, %v3403
    %v4400 = vpack.c.b16 %v3416, %v3404
    %v4401 = vpack.c.b16 %v3429, %v3417
    %v4402 = vpack.c.b16 %v3430, %v3418
    %v4403 = vpack.c.b16 %v3431, %v3419
    %v4404 = vpack.c.b16 %v3432, %v3420
    %v4405 = vpack.c.b16 %v3433, %v3421
    %v4406 = vpack.c.b16 %v3434, %v3422
    %v4407 = vpack.c.b16 %v3435, %v3423
    %v4408 = vpack.c.b16 %v3436, %v3424
    %v4409 = vpack.c.b16 %v3437, %v3425
    %v4410 = vpack.c.b16 %v3438, %v3426
    %v4411 = vpack.c.b16 %v3439, %v3427
    %v4412 = vpack.c.b16 %v3440, %v3428
    %v4413 = vpack.c.b16 %v3453, %v3441
    %v4414 = vpack.c.b16 %v3454, %v3442
    %v4415 = vpack.c.b16 %v3455, %v3443
    %v4416 = vpack.c.b16 %v3456, %v3444
    %v4417 = vpack.c.b16 %v3457, %v3445
    %v4418 = vpack.c.b16 %v3458, %v3446
    %v4419 = vpack.c.b16 %v3459, %v3447
    %v4420 = vpack.c.b16 %v3460, %v3448
    %v4421 = vpack.c.b16 %v3461, %v3449
    %v4422 = vpack.c.b16 %v3462, %v3450
    %v4423 = vpack.c.b16 %v3463, %v3451
    %v4424 = vpack.c.b16 %v3464, %v3452
    %v4425 = vpack.c.b16 %v3477, %v3465
    %v4426 = vpack.c.b16 %v3478, %v3466
    %v4427 = vpack.c.b16 %v3479, %v3467
    %v4428 = vpack.c.b16 %v3480, %v3468
    %v4429 = vpack.c.b16 %v3481, %v3469
    %v4430 = vpack.c.b16 %v3482, %v3470
    %v4431 = vpack.c.b16 %v3483, %v3471
    %v4432 = vpack.c.b16 %v3484, %v3472
    %v4433 = vpack.c.b16 %v3485, %v3473
    %v4434 = vpack.c.b16 %v3486, %v3474
    %v4435 = vpack.c.b16 %v3487, %v3475
    %v4436 = vpack.c.b16 %v3488, %v3476
    %v4437 = vpack.c.b16 %v3501, %v3489
    %v4438 = vpack.c.b16 %v3502, %v3490
    %v4439 = vpack.c.b16 %v3503, %v3491
    %v4440 = vpack.c.b16 %v3504, %v3492
    %v4441 = vpack.c.b16 %v3505, %v3493
    %v4442 = vpack.c.b16 %v3506, %v3494
    %v4443 = vpack.c.b16 %v3507, %v3495
    %v4444 = vpack.c.b16 %v3508, %v3496
    %v4445 = vpack.c.b16 %v3509, %v3497
    %v4446 = vpack.c.b16 %v3510, %v3498
    %v4447 = vpack.c.b16 %v3511, %v3499
    %v4448 = vpack.c.b16 %v3512, %v3500
    %v4449 = vpack.c.b16 %v3525, %v3513
    %v4450 = vpack.c.b16 %v3526, %v3514
    %v4451 = vpack.c.b16 %v3527, %v3515
    %v4452 = vpack.c.b16 %v3528, %v3516
    %v4453 = vpack.c.b16 %v3529, %v3517
    %v4454 = vpack.c.b16 %v3530, %v3518
    %v4455 = vpack.c.b16 %v3531, %v3519
    %v4456 = vpack.c.b16 %v3532, %v3520
    %v4457 = vpack.c.b16 %v3533, %v3521
    %v4458 = vpack.c.b16 %v3534, %v3522
    %v4459 = vpack.c.b16 %v3535, %v3523
    %v4460 = vpack.c.b16 %v3536, %v3524
    %v4461 = vpack.c.b16 %v3549, %v3537
    %v4462 = vpack.c.b16 %v3550, %v3538
    %v4463 = vpack.c.b16 %v3551, %v3539
    %v4464 = vpack.c.b16 %v3552, %v3540
    %v4465 = vpack.c.b16 %v3553, %v3541
    %v4466 = vpack.c.b16 %v3554, %v3542
    %v4467 = vpack.c.b16 %v3555, %v3543
    %v4468 = vpack.c.b16 %v3556, %v3544
    %v4469 = vpack.c.b16 %v3557, %v3545
    %v4470 = vpack.c.b16 %v3558, %v3546
    %v4471 = vpack.c.b16 %v3559, %v3547
    %v4472 = vpack.c.b16 %v3560, %v3548
    %v4473 = vpack.c.b16 %v3573, %v3561
    %v4474 = vpack.c.b16 %v3574, %v3562
    %v4475 = vpack.c.b16 %v3575, %v3563
    %v4476 = vpack.c.b16 %v3576, %v3564
    %v4477 = vpack.c.b16 %v3577, %v3565
    %v4478 = vpack.c.b16 %v3578, %v3566
    %v4479 = vpack.c.b16 %v3579, %v3567
    %v4480 = vpack.c.b16 %v3580, %v3568
    %v4481 = vpack.c.b16 %v3581, %v3569
    %v4482 = vpack.c.b16 %v3582, %v3570
    %v4483 = vpack.c.b16 %v3583, %v3571
    %v4484 = vpack.c.b16 %v3584, %v3572
    %v4485 = vpack.c.b16 %v3597, %v3585
    %v4486 = vpack.c.b16 %v3598, %v3586
    %v4487 = vpack.c.b16 %v3599, %v3587
    %v4488 = vpack.c.b16 %v3600, %v3588
    %v4489 = vpack.c.b16 %v3601, %v3589
    %v4490 = vpack.c.b16 %v3602, %v3590
    %v4491 = vpack.c.b16 %v3603, %v3591
    %v4492 = vpack.c.b16 %v3604, %v3592
    %v4493 = vpack.c.b16 %v3605, %v3593
    %v4494 = vpack.c.b16 %v3606, %v3594
    %v4495 = vpack.c.b16 %v3607, %v3595
    %v4496 = vpack.c.b16 %v3608, %v3596
    %v4497 = vpack.c.b16 %v3621, %v3609
    %v4498 = vpack.c.b16 %v3622, %v3610
    %v4499 = vpack.c.b16 %v3623, %v3611
    %v4500 = vpack.c.b16 %v3624, %v3612
    %v4501 = vpack.c.b16 %v3625, %v3613
    %v4502 = vpack.c.b16 %v3626, %v3614
    %v4503 = vpack.c.b16 %v3627, %v3615
    %v4504 = vpack.c.b16 %v3628, %v3616
    %v4505 = vpack.c.b16 %v3629, %v3617
    %v4506 = vpack.c.b16 %v3630, %v3618
    %v4507 = vpack.c.b16 %v3631, %v3619
    %v4508 = vpack.c.b16 %v3632, %v3620
    %v4509 = vpack.c.b16 %v3645, %v3633
    %v4510 = vpack.c.b16 %v3646, %v3634
    %v4511 = vpack.c.b16 %v3647, %v3635
    %v4512 = vpack.c.b16 %v3648, %v3636
    %v4513 = vpack.c.b16 %v3649, %v3637
    %v4514 = vpack.c.b16 %v3650, %v3638
    %v4515 = vpack.c.b16 %v3651, %v3639
    %v4516 = vpack.c.b16 %v3652, %v3640
    %v4517 = vpack.c.b16 %v3653, %v3641
    %v4518 = vpack.c.b16 %v3654, %v3642
    %v4519 = vpack.c.b16 %v3655, %v3643
    %v4520 = vpack.c.b16 %v3656, %v3644
    %v4521 = vpack.c.b16 %v3669, %v3657
    %v4522 = vpack.c.b16 %v3670, %v3658
    %v4523 = vpack.c.b16 %v3671, %v3659
    %v4524 = vpack.c.b16 %v3672, %v3660
    %v4525 = vpack.c.b16 %v3673, %v3661
    %v4526 = vpack.c.b16 %v3674, %v3662
    %v4527 = vpack.c.b16 %v3675, %v3663
    %v4528 = vpack.c.b16 %v3676, %v3664
    %v4529 = vpack.c.b16 %v3677, %v3665
    %v4530 = vpack.c.b16 %v3678, %v3666
    %v4531 = vpack.c.b16 %v3679, %v3667
    %v4532 = vpack.c.b16 %v3680, %v3668
    %v4533 = vpack.c.b16 %v3693, %v3681
    %v4534 = vpack.c.b16 %v3694, %v3682
    %v4535 = vpack.c.b16 %v3695, %v3683
    %v4536 = vpack.c.b16 %v3696, %v3684
    %v4537 = vpack.c.b16 %v3697, %v3685
    %v4538 = vpack.c.b16 %v3698, %v3686
    %v4539 = vpack.c.b16 %v3699, %v3687
    %v4540 = vpack.c.b16 %v3700, %v3688
    %v4541 = vpack.c.b16 %v3701, %v3689
    %v4542 = vpack.c.b16 %v3702, %v3690
    %v4543 = vpack.c.b16 %v3703, %v3691
    %v4544 = vpack.c.b16 %v3704, %v3692
    %v4545 = vpack.c.b16 %v3717, %v3705
    %v4546 = vpack.c.b16 %v3718, %v3706
    %v4547 = vpack.c.b16 %v3719, %v3707
    %v4548 = vpack.c.b16 %v3720, %v3708
    %v4549 = vpack.c.b16 %v3721, %v3709
    %v4550 = vpack.c.b16 %v3722, %v3710
    %v4551 = vpack.c.b16 %v3723, %v3711
    %v4552 = vpack.c.b16 %v3724, %v3712
    %v4553 = vpack.c.b16 %v3725, %v3713
    %v4554 = vpack.c.b16 %v3726, %v3714
    %v4555 = vpack.c.b16 %v3727, %v3715
    %v4556 = vpack.c.b16 %v3728, %v3716
    %v4557 = vpack.c.b16 %v3741, %v3729
    %v4558 = vpack.c.b16 %v3742, %v3730
    %v4559 = vpack.c.b16 %v3743, %v3731
    %v4560 = vpack.c.b16 %v3744, %v3732
    %v4561 = vpack.c.b16 %v3745, %v3733
    %v4562 = vpack.c.b16 %v3746, %v3734
    %v4563 = vpack.c.b16 %v3747, %v3735
    %v4564 = vpack.c.b16 %v3748, %v3736
    %v4565 = vpack.c.b16 %v3749, %v3737
    %v4566 = vpack.c.b16 %v3750, %v3738
    %v4567 = vpack.c.b16 %v3751, %v3739
    %v4568 = vpack.c.b16 %v3752, %v3740
    %v4569 = vpack.c.b16 %v3765, %v3753
    %v4570 = vpack.c.b16 %v3766, %v3754
    %v4571 = vpack.c.b16 %v3767, %v3755
    %v4572 = vpack.c.b16 %v3768, %v3756
    %v4573 = vpack.c.b16 %v3769, %v3757
    %v4574 = vpack.c.b16 %v3770, %v3758
    %v4575 = vpack.c.b16 %v3771, %v3759
    %v4576 = vpack.c.b16 %v3772, %v3760
    %v4577 = vpack.c.b16 %v3773, %v3761
    %v4578 = vpack.c.b16 %v3774, %v3762
    %v4579 = vpack.c.b16 %v3775, %v3763
    %v4580 = vpack.c.b16 %v3776, %v3764
    %v4581 = vpack.c.b16 %v3789, %v3777
    %v4582 = vpack.c.b16 %v3790, %v3778
    %v4583 = vpack.c.b16 %v3791, %v3779
    %v4584 = vpack.c.b16 %v3792, %v3780
    %v4585 = vpack.c.b16 %v3793, %v3781
    %v4586 = vpack.c.b16 %v3794, %v3782
    %v4587 = vpack.c.b16 %v3795, %v3783
    %v4588 = vpack.c.b16 %v3796, %v3784
    %v4589 = vpack.c.b16 %v3797, %v3785
    %v4590 = vpack.c.b16 %v3798, %v3786
    %v4591 = vpack.c.b16 %v3799, %v3787
    %v4592 = vpack.c.b16 %v3800, %v3788
    %v4593 = vpack.c.b16 %v3813, %v3801
    %v4594 = vpack.c.b16 %v3814, %v3802
    %v4595 = vpack.c.b16 %v3815, %v3803
    %v4596 = vpack.c.b16 %v3816, %v3804
    %v4597 = vpack.c.b16 %v3817, %v3805
    %v4598 = vpack.c.b16 %v3818, %v3806
    %v4599 = vpack.c.b16 %v3819, %v3807
    %v4600 = vpack.c.b16 %v3820, %v3808
    %v4601 = vpack.c.b16 %v3821, %v3809
    %v4602 = vpack.c.b16 %v3822, %v3810
    %v4603 = vpack.c.b16 %v3823, %v3811
    %v4604 = vpack.c.b16 %v3824, %v3812
    %v4605 = vpack.c.b16 %v3837, %v3825
    %v4606 = vpack.c.b16 %v3838, %v3826
    %v4607 = vpack.c.b16 %v3839, %v3827
    %v4608 = vpack.c.b16 %v3840, %v3828
    %v4609 = vpack.c.b16 %v3841, %v3829
    %v4610 = vpack.c.b16 %v3842, %v3830
    %v4611 = vpack.c.b16 %v3843, %v3831
    %v4612 = vpack.c.b16 %v3844, %v3832
    %v4613 = vpack.c.b16 %v3845, %v3833
    %v4614 = vpack.c.b16 %v3846, %v3834
    %v4615 = vpack.c.b16 %v3847, %v3835
    %v4616 = vpack.c.b16 %v3848, %v3836
    %5385 = vmatprep.subr.bf16.mxu0 %v3934
    %5386 = vmatpush1.bf16.msra.mxu0 %v3933
    %5387 = vmatprep.subr.bf16.mxu0 %v3922
    %5388 = vmatpush1.bf16.msra.mxu0 %v3921
    %5389 = vmatprep.subr.bf16.mxu0 %v3910
    %5390 = vmatpush1.bf16.msra.mxu0 %v3909
    %5391 = vmatprep.subr.bf16.mxu0 %v3898
    %5392 = vmatpush1.bf16.msra.mxu0 %v3897
    %5393 = vmatprep.subr.bf16.mxu0 %v3886
    %5394 = vmatpush1.bf16.msra.mxu0 %v3885
    %5395 = vmatprep.subr.bf16.mxu0 %v3874
    %5396 = vmatpush1.bf16.msra.mxu0 %v3873
    %5397 = vmatprep.subr.bf16.mxu0 %v3862
    %5398 = vmatpush1.bf16.msra.mxu0 %v3861
    %5399 = vmatprep.subr.bf16.mxu0 %v3850
    %5400 = vmatpush1.bf16.msra.mxu0 %v3849
    %5401 = vmatprep.subr.bf16.mxu0 %v4030
    %5402 = vmatpush2.bf16.msra.mxu0 %v4029
    %5403 = vmatprep.subr.bf16.mxu0 %v4018
    %5404 = vmatpush2.bf16.msra.mxu0 %v4017
    %5405 = vmatprep.subr.bf16.mxu0 %v4006
    %5406 = vmatpush2.bf16.msra.mxu0 %v4005
    %5407 = vmatprep.subr.bf16.mxu0 %v3994
    %5408 = vmatpush2.bf16.msra.mxu0 %v3993
    %5409 = vmatprep.subr.bf16.mxu0 %v3982
    %5410 = vmatpush2.bf16.msra.mxu0 %v3981
    %5411 = vmatprep.subr.bf16.mxu0 %v3970
    %5412 = vmatpush2.bf16.msra.mxu0 %v3969
    %5413 = vmatprep.subr.bf16.mxu0 %v3958
    %5414 = vmatpush2.bf16.msra.mxu0 %v3957
    %5415 = vmatprep.subr.bf16.mxu0 %v3946
    %5416 = vmatpush2.bf16.msra.mxu0 %v3945
    %5417 = vmatprep.mubr.bf16.mxu0 %v770
    %5418 = vmatmul.mubr.bf16.gmra.mxu0 %v769
    %v5419 = vpop.f32.mrf.mxu0
    %v5420 = vadd.f32 0.0, %v5419
    %v5421 = vpop.f32.mrf.mxu0
    %v5422 = vadd.f32 0.0, %v5421
    %v5423 = vpop.f32.mrf.mxu0
    %v5424 = vpop.f32.mrf.mxu0
    %5425 = vdwg.mxu0
    %5426 = vmatprep.subr.bf16.mxu0 %v4126
    %5427 = vmatpush1.bf16.msra.mxu0 %v4125
    %5428 = vmatprep.subr.bf16.mxu0 %v4114
    %5429 = vmatpush1.bf16.msra.mxu0 %v4113
    %5430 = vmatprep.subr.bf16.mxu0 %v4102
    %5431 = vmatpush1.bf16.msra.mxu0 %v4101
    %5432 = vmatprep.subr.bf16.mxu0 %v4090
    %5433 = vmatpush1.bf16.msra.mxu0 %v4089
    %5434 = vmatprep.subr.bf16.mxu0 %v4078
    %5435 = vmatpush1.bf16.msra.mxu0 %v4077
    %5436 = vmatprep.subr.bf16.mxu0 %v4066
    %5437 = vmatpush1.bf16.msra.mxu0 %v4065
    %5438 = vmatprep.subr.bf16.mxu0 %v4054
    %5439 = vmatpush1.bf16.msra.mxu0 %v4053
    %5440 = vmatprep.subr.bf16.mxu0 %v4042
    %5441 = vmatpush1.bf16.msra.mxu0 %v4041
    %5442 = vmatprep.subr.bf16.mxu0 %v4222
    %5443 = vmatpush2.bf16.msra.mxu0 %v4221
    %5444 = vmatprep.subr.bf16.mxu0 %v4210
    %5445 = vmatpush2.bf16.msra.mxu0 %v4209
    %5446 = vmatprep.subr.bf16.mxu0 %v4198
    %5447 = vmatpush2.bf16.msra.mxu0 %v4197
    %5448 = vmatprep.subr.bf16.mxu0 %v4186
    %5449 = vmatpush2.bf16.msra.mxu0 %v4185
    %5450 = vmatprep.subr.bf16.mxu0 %v4174
    %5451 = vmatpush2.bf16.msra.mxu0 %v4173
    %5452 = vmatprep.subr.bf16.mxu0 %v4162
    %5453 = vmatpush2.bf16.msra.mxu0 %v4161
    %5454 = vmatprep.subr.bf16.mxu0 %v4150
    %5455 = vmatpush2.bf16.msra.mxu0 %v4149
    %5456 = vmatprep.subr.bf16.mxu0 %v4138
    %5457 = vmatpush2.bf16.msra.mxu0 %v4137
    %5458 = vmatprep.mubr.bf16.mxu0 %v772
    %5459 = vmatmul.mubr.bf16.gmra.mxu0 %v771
    %v5460 = vpop.f32.mrf.mxu0
    %v5461 = vadd.f32 %v5420, %v5460
    %v5462 = vpop.f32.mrf.mxu0
    %v5463 = vadd.f32 %v5422, %v5462
    %v5464 = vpop.f32.mrf.mxu0
    %v5465 = vpop.f32.mrf.mxu0
    %5466 = vdwg.mxu0
    %5467 = vmatprep.subr.bf16.mxu0 %v4318
    %5468 = vmatpush1.bf16.msra.mxu0 %v4317
    %5469 = vmatprep.subr.bf16.mxu0 %v4306
    %5470 = vmatpush1.bf16.msra.mxu0 %v4305
    %5471 = vmatprep.subr.bf16.mxu0 %v4294
    %5472 = vmatpush1.bf16.msra.mxu0 %v4293
    %5473 = vmatprep.subr.bf16.mxu0 %v4282
    %5474 = vmatpush1.bf16.msra.mxu0 %v4281
    %5475 = vmatprep.subr.bf16.mxu0 %v4270
    %5476 = vmatpush1.bf16.msra.mxu0 %v4269
    %5477 = vmatprep.subr.bf16.mxu0 %v4258
    %5478 = vmatpush1.bf16.msra.mxu0 %v4257
    %5479 = vmatprep.subr.bf16.mxu0 %v4246
    %5480 = vmatpush1.bf16.msra.mxu0 %v4245
    %5481 = vmatprep.subr.bf16.mxu0 %v4234
    %5482 = vmatpush1.bf16.msra.mxu0 %v4233
    %5483 = vmatprep.subr.bf16.mxu0 %v4414
    %5484 = vmatpush2.bf16.msra.mxu0 %v4413
    %5485 = vmatprep.subr.bf16.mxu0 %v4402
    %5486 = vmatpush2.bf16.msra.mxu0 %v4401
    %5487 = vmatprep.subr.bf16.mxu0 %v4390
    %5488 = vmatpush2.bf16.msra.mxu0 %v4389
    %5489 = vmatprep.subr.bf16.mxu0 %v4378
    %5490 = vmatpush2.bf16.msra.mxu0 %v4377
    %5491 = vmatprep.subr.bf16.mxu0 %v4366
    %5492 = vmatpush2.bf16.msra.mxu0 %v4365
    %5493 = vmatprep.subr.bf16.mxu0 %v4354
    %5494 = vmatpush2.bf16.msra.mxu0 %v4353
    %5495 = vmatprep.subr.bf16.mxu0 %v4342
    %5496 = vmatpush2.bf16.msra.mxu0 %v4341
    %5497 = vmatprep.subr.bf16.mxu0 %v4330
    %5498 = vmatpush2.bf16.msra.mxu0 %v4329
    %5499 = vmatprep.mubr.bf16.mxu0 %v774
    %5500 = vmatmul.mubr.bf16.gmra.mxu0 %v773
    %v5501 = vpop.f32.mrf.mxu0
    %v5502 = vadd.f32 %v5461, %v5501
    %v5503 = vpop.f32.mrf.mxu0
    %v5504 = vadd.f32 %v5463, %v5503
    %v5505 = vpop.f32.mrf.mxu0
    %v5506 = vpop.f32.mrf.mxu0
    %5507 = vdwg.mxu0
    %5508 = vmatprep.subr.bf16.mxu0 %v4510
    %5509 = vmatpush1.bf16.msra.mxu0 %v4509
    %5510 = vmatprep.subr.bf16.mxu0 %v4498
    %5511 = vmatpush1.bf16.msra.mxu0 %v4497
    %5512 = vmatprep.subr.bf16.mxu0 %v4486
    %5513 = vmatpush1.bf16.msra.mxu0 %v4485
    %5514 = vmatprep.subr.bf16.mxu0 %v4474
    %5515 = vmatpush1.bf16.msra.mxu0 %v4473
    %5516 = vmatprep.subr.bf16.mxu0 %v4462
    %5517 = vmatpush1.bf16.msra.mxu0 %v4461
    %5518 = vmatprep.subr.bf16.mxu0 %v4450
    %5519 = vmatpush1.bf16.msra.mxu0 %v4449
    %5520 = vmatprep.subr.bf16.mxu0 %v4438
    %5521 = vmatpush1.bf16.msra.mxu0 %v4437
    %5522 = vmatprep.subr.bf16.mxu0 %v4426
    %5523 = vmatpush1.bf16.msra.mxu0 %v4425
    %5524 = vmatprep.subr.bf16.mxu0 %v4606
    %5525 = vmatpush2.bf16.msra.mxu0 %v4605
    %5526 = vmatprep.subr.bf16.mxu0 %v4594
    %5527 = vmatpush2.bf16.msra.mxu0 %v4593
    %5528 = vmatprep.subr.bf16.mxu0 %v4582
    %5529 = vmatpush2.bf16.msra.mxu0 %v4581
    %5530 = vmatprep.subr.bf16.mxu0 %v4570
    %5531 = vmatpush2.bf16.msra.mxu0 %v4569
    %5532 = vmatprep.subr.bf16.mxu0 %v4558
    %5533 = vmatpush2.bf16.msra.mxu0 %v4557
    %5534 = vmatprep.subr.bf16.mxu0 %v4546
    %5535 = vmatpush2.bf16.msra.mxu0 %v4545
    %5536 = vmatprep.subr.bf16.mxu0 %v4534
    %5537 = vmatpush2.bf16.msra.mxu0 %v4533
    %5538 = vmatprep.subr.bf16.mxu0 %v4522
    %5539 = vmatpush2.bf16.msra.mxu0 %v4521
    %5540 = vmatprep.mubr.bf16.mxu0 %v776
    %5541 = vmatmul.mubr.bf16.gmra.mxu0 %v775
    %v5542 = vpop.f32.mrf.mxu0
    %v5543 = vadd.f32 %v5502, %v5542
    %v5544 = vpop.f32.mrf.mxu0
    %v5545 = vadd.f32 %v5504, %v5544
    %v5546 = vpop.f32.mrf.mxu0
    %v5547 = vpop.f32.mrf.mxu0
    %5548 = vdwg.mxu0
    %5549 = vmatprep.subr.bf16.mxu0 %v3936
    %5550 = vmatpush1.bf16.msra.mxu0 %v3935
    %5551 = vmatprep.subr.bf16.mxu0 %v3924
    %5552 = vmatpush1.bf16.msra.mxu0 %v3923
    %5553 = vmatprep.subr.bf16.mxu0 %v3912
    %5554 = vmatpush1.bf16.msra.mxu0 %v3911
    %5555 = vmatprep.subr.bf16.mxu0 %v3900
    %5556 = vmatpush1.bf16.msra.mxu0 %v3899
    %5557 = vmatprep.subr.bf16.mxu0 %v3888
    %5558 = vmatpush1.bf16.msra.mxu0 %v3887
    %5559 = vmatprep.subr.bf16.mxu0 %v3876
    %5560 = vmatpush1.bf16.msra.mxu0 %v3875
    %5561 = vmatprep.subr.bf16.mxu0 %v3864
    %5562 = vmatpush1.bf16.msra.mxu0 %v3863
    %5563 = vmatprep.subr.bf16.mxu0 %v3852
    %5564 = vmatpush1.bf16.msra.mxu0 %v3851
    %5565 = vmatprep.subr.bf16.mxu0 %v4032
    %5566 = vmatpush2.bf16.msra.mxu0 %v4031
    %5567 = vmatprep.subr.bf16.mxu0 %v4020
    %5568 = vmatpush2.bf16.msra.mxu0 %v4019
    %5569 = vmatprep.subr.bf16.mxu0 %v4008
    %5570 = vmatpush2.bf16.msra.mxu0 %v4007
    %5571 = vmatprep.subr.bf16.mxu0 %v3996
    %5572 = vmatpush2.bf16.msra.mxu0 %v3995
    %5573 = vmatprep.subr.bf16.mxu0 %v3984
    %5574 = vmatpush2.bf16.msra.mxu0 %v3983
    %5575 = vmatprep.subr.bf16.mxu0 %v3972
    %5576 = vmatpush2.bf16.msra.mxu0 %v3971
    %5577 = vmatprep.subr.bf16.mxu0 %v3960
    %5578 = vmatpush2.bf16.msra.mxu0 %v3959
    %5579 = vmatprep.subr.bf16.mxu0 %v3948
    %5580 = vmatpush2.bf16.msra.mxu0 %v3947
    %5581 = vmatprep.mubr.bf16.mxu0 %v770
    %5582 = vmatmul.mubr.bf16.gmra.mxu0 %v769
    %v5583 = vpop.f32.mrf.mxu0
    %v5584 = vadd.f32 0.0, %v5583
    %v5585 = vpop.f32.mrf.mxu0
    %v5586 = vadd.f32 0.0, %v5585
    %v5587 = vpop.f32.mrf.mxu0
    %v5588 = vpop.f32.mrf.mxu0
    %5589 = vdwg.mxu0
    %5590 = vmatprep.subr.bf16.mxu0 %v4128
    %5591 = vmatpush1.bf16.msra.mxu0 %v4127
    %5592 = vmatprep.subr.bf16.mxu0 %v4116
    %5593 = vmatpush1.bf16.msra.mxu0 %v4115
    %5594 = vmatprep.subr.bf16.mxu0 %v4104
    %5595 = vmatpush1.bf16.msra.mxu0 %v4103
    %5596 = vmatprep.subr.bf16.mxu0 %v4092
    %5597 = vmatpush1.bf16.msra.mxu0 %v4091
    %5598 = vmatprep.subr.bf16.mxu0 %v4080
    %5599 = vmatpush1.bf16.msra.mxu0 %v4079
    %5600 = vmatprep.subr.bf16.mxu0 %v4068
    %5601 = vmatpush1.bf16.msra.mxu0 %v4067
    %5602 = vmatprep.subr.bf16.mxu0 %v4056
    %5603 = vmatpush1.bf16.msra.mxu0 %v4055
    %5604 = vmatprep.subr.bf16.mxu0 %v4044
    %5605 = vmatpush1.bf16.msra.mxu0 %v4043
    %5606 = vmatprep.subr.bf16.mxu0 %v4224
    %5607 = vmatpush2.bf16.msra.mxu0 %v4223
    %5608 = vmatprep.subr.bf16.mxu0 %v4212
    %5609 = vmatpush2.bf16.msra.mxu0 %v4211
    %5610 = vmatprep.subr.bf16.mxu0 %v4200
    %5611 = vmatpush2.bf16.msra.mxu0 %v4199
    %5612 = vmatprep.subr.bf16.mxu0 %v4188
    %5613 = vmatpush2.bf16.msra.mxu0 %v4187
    %5614 = vmatprep.subr.bf16.mxu0 %v4176
    %5615 = vmatpush2.bf16.msra.mxu0 %v4175
    %5616 = vmatprep.subr.bf16.mxu0 %v4164
    %5617 = vmatpush2.bf16.msra.mxu0 %v4163
    %5618 = vmatprep.subr.bf16.mxu0 %v4152
    %5619 = vmatpush2.bf16.msra.mxu0 %v4151
    %5620 = vmatprep.subr.bf16.mxu0 %v4140
    %5621 = vmatpush2.bf16.msra.mxu0 %v4139
    %5622 = vmatprep.mubr.bf16.mxu0 %v772
    %5623 = vmatmul.mubr.bf16.gmra.mxu0 %v771
    %v5624 = vpop.f32.mrf.mxu0
    %v5625 = vadd.f32 %v5584, %v5624
    %v5626 = vpop.f32.mrf.mxu0
    %v5627 = vadd.f32 %v5586, %v5626
    %v5628 = vpop.f32.mrf.mxu0
    %v5629 = vpop.f32.mrf.mxu0
    %5630 = vdwg.mxu0
    %5631 = vmatprep.subr.bf16.mxu0 %v4320
    %5632 = vmatpush1.bf16.msra.mxu0 %v4319
    %5633 = vmatprep.subr.bf16.mxu0 %v4308
    %5634 = vmatpush1.bf16.msra.mxu0 %v4307
    %5635 = vmatprep.subr.bf16.mxu0 %v4296
    %5636 = vmatpush1.bf16.msra.mxu0 %v4295
    %5637 = vmatprep.subr.bf16.mxu0 %v4284
    %5638 = vmatpush1.bf16.msra.mxu0 %v4283
    %5639 = vmatprep.subr.bf16.mxu0 %v4272
    %5640 = vmatpush1.bf16.msra.mxu0 %v4271
    %5641 = vmatprep.subr.bf16.mxu0 %v4260
    %5642 = vmatpush1.bf16.msra.mxu0 %v4259
    %5643 = vmatprep.subr.bf16.mxu0 %v4248
    %5644 = vmatpush1.bf16.msra.mxu0 %v4247
    %5645 = vmatprep.subr.bf16.mxu0 %v4236
    %5646 = vmatpush1.bf16.msra.mxu0 %v4235
    %5647 = vmatprep.subr.bf16.mxu0 %v4416
    %5648 = vmatpush2.bf16.msra.mxu0 %v4415
    %5649 = vmatprep.subr.bf16.mxu0 %v4404
    %5650 = vmatpush2.bf16.msra.mxu0 %v4403
    %5651 = vmatprep.subr.bf16.mxu0 %v4392
    %5652 = vmatpush2.bf16.msra.mxu0 %v4391
    %5653 = vmatprep.subr.bf16.mxu0 %v4380
    %5654 = vmatpush2.bf16.msra.mxu0 %v4379
    %5655 = vmatprep.subr.bf16.mxu0 %v4368
    %5656 = vmatpush2.bf16.msra.mxu0 %v4367
    %5657 = vmatprep.subr.bf16.mxu0 %v4356
    %5658 = vmatpush2.bf16.msra.mxu0 %v4355
    %5659 = vmatprep.subr.bf16.mxu0 %v4344
    %5660 = vmatpush2.bf16.msra.mxu0 %v4343
    %5661 = vmatprep.subr.bf16.mxu0 %v4332
    %5662 = vmatpush2.bf16.msra.mxu0 %v4331
    %5663 = vmatprep.mubr.bf16.mxu0 %v774
    %5664 = vmatmul.mubr.bf16.gmra.mxu0 %v773
    %v5665 = vpop.f32.mrf.mxu0
    %v5666 = vadd.f32 %v5625, %v5665
    %v5667 = vpop.f32.mrf.mxu0
    %v5668 = vadd.f32 %v5627, %v5667
    %v5669 = vpop.f32.mrf.mxu0
    %v5670 = vpop.f32.mrf.mxu0
    %5671 = vdwg.mxu0
    %5672 = vmatprep.subr.bf16.mxu0 %v4512
    %5673 = vmatpush1.bf16.msra.mxu0 %v4511
    %5674 = vmatprep.subr.bf16.mxu0 %v4500
    %5675 = vmatpush1.bf16.msra.mxu0 %v4499
    %5676 = vmatprep.subr.bf16.mxu0 %v4488
    %5677 = vmatpush1.bf16.msra.mxu0 %v4487
    %5678 = vmatprep.subr.bf16.mxu0 %v4476
    %5679 = vmatpush1.bf16.msra.mxu0 %v4475
    %5680 = vmatprep.subr.bf16.mxu0 %v4464
    %5681 = vmatpush1.bf16.msra.mxu0 %v4463
    %5682 = vmatprep.subr.bf16.mxu0 %v4452
    %5683 = vmatpush1.bf16.msra.mxu0 %v4451
    %5684 = vmatprep.subr.bf16.mxu0 %v4440
    %5685 = vmatpush1.bf16.msra.mxu0 %v4439
    %5686 = vmatprep.subr.bf16.mxu0 %v4428
    %5687 = vmatpush1.bf16.msra.mxu0 %v4427
    %5688 = vmatprep.subr.bf16.mxu0 %v4608
    %5689 = vmatpush2.bf16.msra.mxu0 %v4607
    %5690 = vmatprep.subr.bf16.mxu0 %v4596
    %5691 = vmatpush2.bf16.msra.mxu0 %v4595
    %5692 = vmatprep.subr.bf16.mxu0 %v4584
    %5693 = vmatpush2.bf16.msra.mxu0 %v4583
    %5694 = vmatprep.subr.bf16.mxu0 %v4572
    %5695 = vmatpush2.bf16.msra.mxu0 %v4571
    %5696 = vmatprep.subr.bf16.mxu0 %v4560
    %5697 = vmatpush2.bf16.msra.mxu0 %v4559
    %5698 = vmatprep.subr.bf16.mxu0 %v4548
    %5699 = vmatpush2.bf16.msra.mxu0 %v4547
    %5700 = vmatprep.subr.bf16.mxu0 %v4536
    %5701 = vmatpush2.bf16.msra.mxu0 %v4535
    %5702 = vmatprep.subr.bf16.mxu0 %v4524
    %5703 = vmatpush2.bf16.msra.mxu0 %v4523
    %5704 = vmatprep.mubr.bf16.mxu0 %v776
    %5705 = vmatmul.mubr.bf16.gmra.mxu0 %v775
    %v5706 = vpop.f32.mrf.mxu0
    %v5707 = vadd.f32 %v5666, %v5706
    %v5708 = vpop.f32.mrf.mxu0
    %v5709 = vadd.f32 %v5668, %v5708
    %v5710 = vpop.f32.mrf.mxu0
    %v5711 = vpop.f32.mrf.mxu0
    %5712 = vdwg.mxu0
    %5713 = vmatprep.subr.bf16.mxu0 %v3938
    %5714 = vmatpush1.bf16.msra.mxu0 %v3937
    %5715 = vmatprep.subr.bf16.mxu0 %v3926
    %5716 = vmatpush1.bf16.msra.mxu0 %v3925
    %5717 = vmatprep.subr.bf16.mxu0 %v3914
    %5718 = vmatpush1.bf16.msra.mxu0 %v3913
    %5719 = vmatprep.subr.bf16.mxu0 %v3902
    %5720 = vmatpush1.bf16.msra.mxu0 %v3901
    %5721 = vmatprep.subr.bf16.mxu0 %v3890
    %5722 = vmatpush1.bf16.msra.mxu0 %v3889
    %5723 = vmatprep.subr.bf16.mxu0 %v3878
    %5724 = vmatpush1.bf16.msra.mxu0 %v3877
    %5725 = vmatprep.subr.bf16.mxu0 %v3866
    %5726 = vmatpush1.bf16.msra.mxu0 %v3865
    %5727 = vmatprep.subr.bf16.mxu0 %v3854
    %5728 = vmatpush1.bf16.msra.mxu0 %v3853
    %5729 = vmatprep.subr.bf16.mxu0 %v4034
    %5730 = vmatpush2.bf16.msra.mxu0 %v4033
    %5731 = vmatprep.subr.bf16.mxu0 %v4022
    %5732 = vmatpush2.bf16.msra.mxu0 %v4021
    %5733 = vmatprep.subr.bf16.mxu0 %v4010
    %5734 = vmatpush2.bf16.msra.mxu0 %v4009
    %5735 = vmatprep.subr.bf16.mxu0 %v3998
    %5736 = vmatpush2.bf16.msra.mxu0 %v3997
    %5737 = vmatprep.subr.bf16.mxu0 %v3986
    %5738 = vmatpush2.bf16.msra.mxu0 %v3985
    %5739 = vmatprep.subr.bf16.mxu0 %v3974
    %5740 = vmatpush2.bf16.msra.mxu0 %v3973
    %5741 = vmatprep.subr.bf16.mxu0 %v3962
    %5742 = vmatpush2.bf16.msra.mxu0 %v3961
    %5743 = vmatprep.subr.bf16.mxu0 %v3950
    %5744 = vmatpush2.bf16.msra.mxu0 %v3949
    %5745 = vmatprep.mubr.bf16.mxu0 %v770
    %5746 = vmatmul.mubr.bf16.gmra.mxu0 %v769
    %v5747 = vpop.f32.mrf.mxu0
    %v5748 = vadd.f32 0.0, %v5747
    %v5749 = vpop.f32.mrf.mxu0
    %v5750 = vadd.f32 0.0, %v5749
    %v5751 = vpop.f32.mrf.mxu0
    %v5752 = vpop.f32.mrf.mxu0
    %5753 = vdwg.mxu0
    %5754 = vmatprep.subr.bf16.mxu0 %v4130
    %5755 = vmatpush1.bf16.msra.mxu0 %v4129
    %5756 = vmatprep.subr.bf16.mxu0 %v4118
    %5757 = vmatpush1.bf16.msra.mxu0 %v4117
    %5758 = vmatprep.subr.bf16.mxu0 %v4106
    %5759 = vmatpush1.bf16.msra.mxu0 %v4105
    %5760 = vmatprep.subr.bf16.mxu0 %v4094
    %5761 = vmatpush1.bf16.msra.mxu0 %v4093
    %5762 = vmatprep.subr.bf16.mxu0 %v4082
    %5763 = vmatpush1.bf16.msra.mxu0 %v4081
    %5764 = vmatprep.subr.bf16.mxu0 %v4070
    %5765 = vmatpush1.bf16.msra.mxu0 %v4069
    %5766 = vmatprep.subr.bf16.mxu0 %v4058
    %5767 = vmatpush1.bf16.msra.mxu0 %v4057
    %5768 = vmatprep.subr.bf16.mxu0 %v4046
    %5769 = vmatpush1.bf16.msra.mxu0 %v4045
    %5770 = vmatprep.subr.bf16.mxu0 %v4226
    %5771 = vmatpush2.bf16.msra.mxu0 %v4225
    %5772 = vmatprep.subr.bf16.mxu0 %v4214
    %5773 = vmatpush2.bf16.msra.mxu0 %v4213
    %5774 = vmatprep.subr.bf16.mxu0 %v4202
    %5775 = vmatpush2.bf16.msra.mxu0 %v4201
    %5776 = vmatprep.subr.bf16.mxu0 %v4190
    %5777 = vmatpush2.bf16.msra.mxu0 %v4189
    %5778 = vmatprep.subr.bf16.mxu0 %v4178
    %5779 = vmatpush2.bf16.msra.mxu0 %v4177
    %5780 = vmatprep.subr.bf16.mxu0 %v4166
    %5781 = vmatpush2.bf16.msra.mxu0 %v4165
    %5782 = vmatprep.subr.bf16.mxu0 %v4154
    %5783 = vmatpush2.bf16.msra.mxu0 %v4153
    %5784 = vmatprep.subr.bf16.mxu0 %v4142
    %5785 = vmatpush2.bf16.msra.mxu0 %v4141
    %5786 = vmatprep.mubr.bf16.mxu0 %v772
    %5787 = vmatmul.mubr.bf16.gmra.mxu0 %v771
    %v5788 = vpop.f32.mrf.mxu0
    %v5789 = vadd.f32 %v5748, %v5788
    %v5790 = vpop.f32.mrf.mxu0
    %v5791 = vadd.f32 %v5750, %v5790
    %v5792 = vpop.f32.mrf.mxu0
    %v5793 = vpop.f32.mrf.mxu0
    %5794 = vdwg.mxu0
    %5795 = vmatprep.subr.bf16.mxu0 %v4322
    %5796 = vmatpush1.bf16.msra.mxu0 %v4321
    %5797 = vmatprep.subr.bf16.mxu0 %v4310
    %5798 = vmatpush1.bf16.msra.mxu0 %v4309
    %5799 = vmatprep.subr.bf16.mxu0 %v4298
    %5800 = vmatpush1.bf16.msra.mxu0 %v4297
    %5801 = vmatprep.subr.bf16.mxu0 %v4286
    %5802 = vmatpush1.bf16.msra.mxu0 %v4285
    %5803 = vmatprep.subr.bf16.mxu0 %v4274
    %5804 = vmatpush1.bf16.msra.mxu0 %v4273
    %5805 = vmatprep.subr.bf16.mxu0 %v4262
    %5806 = vmatpush1.bf16.msra.mxu0 %v4261
    %5807 = vmatprep.subr.bf16.mxu0 %v4250
    %5808 = vmatpush1.bf16.msra.mxu0 %v4249
    %5809 = vmatprep.subr.bf16.mxu0 %v4238
    %5810 = vmatpush1.bf16.msra.mxu0 %v4237
    %5811 = vmatprep.subr.bf16.mxu0 %v4418
    %5812 = vmatpush2.bf16.msra.mxu0 %v4417
    %5813 = vmatprep.subr.bf16.mxu0 %v4406
    %5814 = vmatpush2.bf16.msra.mxu0 %v4405
    %5815 = vmatprep.subr.bf16.mxu0 %v4394
    %5816 = vmatpush2.bf16.msra.mxu0 %v4393
    %5817 = vmatprep.subr.bf16.mxu0 %v4382
    %5818 = vmatpush2.bf16.msra.mxu0 %v4381
    %5819 = vmatprep.subr.bf16.mxu0 %v4370
    %5820 = vmatpush2.bf16.msra.mxu0 %v4369
    %5821 = vmatprep.subr.bf16.mxu0 %v4358
    %5822 = vmatpush2.bf16.msra.mxu0 %v4357
    %5823 = vmatprep.subr.bf16.mxu0 %v4346
    %5824 = vmatpush2.bf16.msra.mxu0 %v4345
    %5825 = vmatprep.subr.bf16.mxu0 %v4334
    %5826 = vmatpush2.bf16.msra.mxu0 %v4333
    %5827 = vmatprep.mubr.bf16.mxu0 %v774
    %5828 = vmatmul.mubr.bf16.gmra.mxu0 %v773
    %v5829 = vpop.f32.mrf.mxu0
    %v5830 = vadd.f32 %v5789, %v5829
    %v5831 = vpop.f32.mrf.mxu0
    %v5832 = vadd.f32 %v5791, %v5831
    %v5833 = vpop.f32.mrf.mxu0
    %v5834 = vpop.f32.mrf.mxu0
    %5835 = vdwg.mxu0
    %5836 = vmatprep.subr.bf16.mxu0 %v4514
    %5837 = vmatpush1.bf16.msra.mxu0 %v4513
    %5838 = vmatprep.subr.bf16.mxu0 %v4502
    %5839 = vmatpush1.bf16.msra.mxu0 %v4501
    %5840 = vmatprep.subr.bf16.mxu0 %v4490
    %5841 = vmatpush1.bf16.msra.mxu0 %v4489
    %5842 = vmatprep.subr.bf16.mxu0 %v4478
    %5843 = vmatpush1.bf16.msra.mxu0 %v4477
    %5844 = vmatprep.subr.bf16.mxu0 %v4466
    %5845 = vmatpush1.bf16.msra.mxu0 %v4465
    %5846 = vmatprep.subr.bf16.mxu0 %v4454
    %5847 = vmatpush1.bf16.msra.mxu0 %v4453
    %5848 = vmatprep.subr.bf16.mxu0 %v4442
    %5849 = vmatpush1.bf16.msra.mxu0 %v4441
    %5850 = vmatprep.subr.bf16.mxu0 %v4430
    %5851 = vmatpush1.bf16.msra.mxu0 %v4429
    %5852 = vmatprep.subr.bf16.mxu0 %v4610
    %5853 = vmatpush2.bf16.msra.mxu0 %v4609
    %5854 = vmatprep.subr.bf16.mxu0 %v4598
    %5855 = vmatpush2.bf16.msra.mxu0 %v4597
    %5856 = vmatprep.subr.bf16.mxu0 %v4586
    %5857 = vmatpush2.bf16.msra.mxu0 %v4585
    %5858 = vmatprep.subr.bf16.mxu0 %v4574
    %5859 = vmatpush2.bf16.msra.mxu0 %v4573
    %5860 = vmatprep.subr.bf16.mxu0 %v4562
    %5861 = vmatpush2.bf16.msra.mxu0 %v4561
    %5862 = vmatprep.subr.bf16.mxu0 %v4550
    %5863 = vmatpush2.bf16.msra.mxu0 %v4549
    %5864 = vmatprep.subr.bf16.mxu0 %v4538
    %5865 = vmatpush2.bf16.msra.mxu0 %v4537
    %5866 = vmatprep.subr.bf16.mxu0 %v4526
    %5867 = vmatpush2.bf16.msra.mxu0 %v4525
    %5868 = vmatprep.mubr.bf16.mxu0 %v776
    %5869 = vmatmul.mubr.bf16.gmra.mxu0 %v775
    %v5870 = vpop.f32.mrf.mxu0
    %v5871 = vadd.f32 %v5830, %v5870
    %v5872 = vpop.f32.mrf.mxu0
    %v5873 = vadd.f32 %v5832, %v5872
    %v5874 = vpop.f32.mrf.mxu0
    %v5875 = vpop.f32.mrf.mxu0
    %5876 = vdwg.mxu0
    %5877 = vmatprep.subr.bf16.mxu0 %v3940
    %5878 = vmatpush1.bf16.msra.mxu0 %v3939
    %5879 = vmatprep.subr.bf16.mxu0 %v3928
    %5880 = vmatpush1.bf16.msra.mxu0 %v3927
    %5881 = vmatprep.subr.bf16.mxu0 %v3916
    %5882 = vmatpush1.bf16.msra.mxu0 %v3915
    %5883 = vmatprep.subr.bf16.mxu0 %v3904
    %5884 = vmatpush1.bf16.msra.mxu0 %v3903
    %5885 = vmatprep.subr.bf16.mxu0 %v3892
    %5886 = vmatpush1.bf16.msra.mxu0 %v3891
    %5887 = vmatprep.subr.bf16.mxu0 %v3880
    %5888 = vmatpush1.bf16.msra.mxu0 %v3879
    %5889 = vmatprep.subr.bf16.mxu0 %v3868
    %5890 = vmatpush1.bf16.msra.mxu0 %v3867
    %5891 = vmatprep.subr.bf16.mxu0 %v3856
    %5892 = vmatpush1.bf16.msra.mxu0 %v3855
    %5893 = vmatprep.subr.bf16.mxu0 %v4036
    %5894 = vmatpush2.bf16.msra.mxu0 %v4035
    %5895 = vmatprep.subr.bf16.mxu0 %v4024
    %5896 = vmatpush2.bf16.msra.mxu0 %v4023
    %5897 = vmatprep.subr.bf16.mxu0 %v4012
    %5898 = vmatpush2.bf16.msra.mxu0 %v4011
    %5899 = vmatprep.subr.bf16.mxu0 %v4000
    %5900 = vmatpush2.bf16.msra.mxu0 %v3999
    %5901 = vmatprep.subr.bf16.mxu0 %v3988
    %5902 = vmatpush2.bf16.msra.mxu0 %v3987
    %5903 = vmatprep.subr.bf16.mxu0 %v3976
    %5904 = vmatpush2.bf16.msra.mxu0 %v3975
    %5905 = vmatprep.subr.bf16.mxu0 %v3964
    %5906 = vmatpush2.bf16.msra.mxu0 %v3963
    %5907 = vmatprep.subr.bf16.mxu0 %v3952
    %5908 = vmatpush2.bf16.msra.mxu0 %v3951
    %5909 = vmatprep.mubr.bf16.mxu0 %v770
    %5910 = vmatmul.mubr.bf16.gmra.mxu0 %v769
    %v5911 = vpop.f32.mrf.mxu0
    %v5912 = vadd.f32 0.0, %v5911
    %v5913 = vpop.f32.mrf.mxu0
    %v5914 = vadd.f32 0.0, %v5913
    %v5915 = vpop.f32.mrf.mxu0
    %v5916 = vpop.f32.mrf.mxu0
    %5917 = vdwg.mxu0
    %5918 = vmatprep.subr.bf16.mxu0 %v4132
    %5919 = vmatpush1.bf16.msra.mxu0 %v4131
    %5920 = vmatprep.subr.bf16.mxu0 %v4120
    %5921 = vmatpush1.bf16.msra.mxu0 %v4119
    %5922 = vmatprep.subr.bf16.mxu0 %v4108
    %5923 = vmatpush1.bf16.msra.mxu0 %v4107
    %5924 = vmatprep.subr.bf16.mxu0 %v4096
    %5925 = vmatpush1.bf16.msra.mxu0 %v4095
    %5926 = vmatprep.subr.bf16.mxu0 %v4084
    %5927 = vmatpush1.bf16.msra.mxu0 %v4083
    %5928 = vmatprep.subr.bf16.mxu0 %v4072
    %5929 = vmatpush1.bf16.msra.mxu0 %v4071
    %5930 = vmatprep.subr.bf16.mxu0 %v4060
    %5931 = vmatpush1.bf16.msra.mxu0 %v4059
    %5932 = vmatprep.subr.bf16.mxu0 %v4048
    %5933 = vmatpush1.bf16.msra.mxu0 %v4047
    %5934 = vmatprep.subr.bf16.mxu0 %v4228
    %5935 = vmatpush2.bf16.msra.mxu0 %v4227
    %5936 = vmatprep.subr.bf16.mxu0 %v4216
    %5937 = vmatpush2.bf16.msra.mxu0 %v4215
    %5938 = vmatprep.subr.bf16.mxu0 %v4204
    %5939 = vmatpush2.bf16.msra.mxu0 %v4203
    %5940 = vmatprep.subr.bf16.mxu0 %v4192
    %5941 = vmatpush2.bf16.msra.mxu0 %v4191
    %5942 = vmatprep.subr.bf16.mxu0 %v4180
    %5943 = vmatpush2.bf16.msra.mxu0 %v4179
    %5944 = vmatprep.subr.bf16.mxu0 %v4168
    %5945 = vmatpush2.bf16.msra.mxu0 %v4167
    %5946 = vmatprep.subr.bf16.mxu0 %v4156
    %5947 = vmatpush2.bf16.msra.mxu0 %v4155
    %5948 = vmatprep.subr.bf16.mxu0 %v4144
    %5949 = vmatpush2.bf16.msra.mxu0 %v4143
    %5950 = vmatprep.mubr.bf16.mxu0 %v772
    %5951 = vmatmul.mubr.bf16.gmra.mxu0 %v771
    %v5952 = vpop.f32.mrf.mxu0
    %v5953 = vadd.f32 %v5912, %v5952
    %v5954 = vpop.f32.mrf.mxu0
    %v5955 = vadd.f32 %v5914, %v5954
    %v5956 = vpop.f32.mrf.mxu0
    %v5957 = vpop.f32.mrf.mxu0
    %5958 = vdwg.mxu0
    %5959 = vmatprep.subr.bf16.mxu0 %v4324
    %5960 = vmatpush1.bf16.msra.mxu0 %v4323
    %5961 = vmatprep.subr.bf16.mxu0 %v4312
    %5962 = vmatpush1.bf16.msra.mxu0 %v4311
    %5963 = vmatprep.subr.bf16.mxu0 %v4300
    %5964 = vmatpush1.bf16.msra.mxu0 %v4299
    %5965 = vmatprep.subr.bf16.mxu0 %v4288
    %5966 = vmatpush1.bf16.msra.mxu0 %v4287
    %5967 = vmatprep.subr.bf16.mxu0 %v4276
    %5968 = vmatpush1.bf16.msra.mxu0 %v4275
    %5969 = vmatprep.subr.bf16.mxu0 %v4264
    %5970 = vmatpush1.bf16.msra.mxu0 %v4263
    %5971 = vmatprep.subr.bf16.mxu0 %v4252
    %5972 = vmatpush1.bf16.msra.mxu0 %v4251
    %5973 = vmatprep.subr.bf16.mxu0 %v4240
    %5974 = vmatpush1.bf16.msra.mxu0 %v4239
    %5975 = vmatprep.subr.bf16.mxu0 %v4420
    %5976 = vmatpush2.bf16.msra.mxu0 %v4419
    %5977 = vmatprep.subr.bf16.mxu0 %v4408
    %5978 = vmatpush2.bf16.msra.mxu0 %v4407
    %5979 = vmatprep.subr.bf16.mxu0 %v4396
    %5980 = vmatpush2.bf16.msra.mxu0 %v4395
    %5981 = vmatprep.subr.bf16.mxu0 %v4384
    %5982 = vmatpush2.bf16.msra.mxu0 %v4383
    %5983 = vmatprep.subr.bf16.mxu0 %v4372
    %5984 = vmatpush2.bf16.msra.mxu0 %v4371
    %5985 = vmatprep.subr.bf16.mxu0 %v4360
    %5986 = vmatpush2.bf16.msra.mxu0 %v4359
    %5987 = vmatprep.subr.bf16.mxu0 %v4348
    %5988 = vmatpush2.bf16.msra.mxu0 %v4347
    %5989 = vmatprep.subr.bf16.mxu0 %v4336
    %5990 = vmatpush2.bf16.msra.mxu0 %v4335
    %5991 = vmatprep.mubr.bf16.mxu0 %v774
    %5992 = vmatmul.mubr.bf16.gmra.mxu0 %v773
    %v5993 = vpop.f32.mrf.mxu0
    %v5994 = vadd.f32 %v5953, %v5993
    %v5995 = vpop.f32.mrf.mxu0
    %v5996 = vadd.f32 %v5955, %v5995
    %v5997 = vpop.f32.mrf.mxu0
    %v5998 = vpop.f32.mrf.mxu0
    %5999 = vdwg.mxu0
    %6000 = vmatprep.subr.bf16.mxu0 %v4516
    %6001 = vmatpush1.bf16.msra.mxu0 %v4515
    %6002 = vmatprep.subr.bf16.mxu0 %v4504
    %6003 = vmatpush1.bf16.msra.mxu0 %v4503
    %6004 = vmatprep.subr.bf16.mxu0 %v4492
    %6005 = vmatpush1.bf16.msra.mxu0 %v4491
    %6006 = vmatprep.subr.bf16.mxu0 %v4480
    %6007 = vmatpush1.bf16.msra.mxu0 %v4479
    %6008 = vmatprep.subr.bf16.mxu0 %v4468
    %6009 = vmatpush1.bf16.msra.mxu0 %v4467
    %6010 = vmatprep.subr.bf16.mxu0 %v4456
    %6011 = vmatpush1.bf16.msra.mxu0 %v4455
    %6012 = vmatprep.subr.bf16.mxu0 %v4444
    %6013 = vmatpush1.bf16.msra.mxu0 %v4443
    %6014 = vmatprep.subr.bf16.mxu0 %v4432
    %6015 = vmatpush1.bf16.msra.mxu0 %v4431
    %6016 = vmatprep.subr.bf16.mxu0 %v4612
    %6017 = vmatpush2.bf16.msra.mxu0 %v4611
    %6018 = vmatprep.subr.bf16.mxu0 %v4600
    %6019 = vmatpush2.bf16.msra.mxu0 %v4599
    %6020 = vmatprep.subr.bf16.mxu0 %v4588
    %6021 = vmatpush2.bf16.msra.mxu0 %v4587
    %6022 = vmatprep.subr.bf16.mxu0 %v4576
    %6023 = vmatpush2.bf16.msra.mxu0 %v4575
    %6024 = vmatprep.subr.bf16.mxu0 %v4564
    %6025 = vmatpush2.bf16.msra.mxu0 %v4563
    %6026 = vmatprep.subr.bf16.mxu0 %v4552
    %6027 = vmatpush2.bf16.msra.mxu0 %v4551
    %6028 = vmatprep.subr.bf16.mxu0 %v4540
    %6029 = vmatpush2.bf16.msra.mxu0 %v4539
    %6030 = vmatprep.subr.bf16.mxu0 %v4528
    %6031 = vmatpush2.bf16.msra.mxu0 %v4527
    %6032 = vmatprep.mubr.bf16.mxu0 %v776
    %6033 = vmatmul.mubr.bf16.gmra.mxu0 %v775
    %v6034 = vpop.f32.mrf.mxu0
    %v6035 = vadd.f32 %v5994, %v6034
    %v6036 = vpop.f32.mrf.mxu0
    %v6037 = vadd.f32 %v5996, %v6036
    %v6038 = vpop.f32.mrf.mxu0
    %v6039 = vpop.f32.mrf.mxu0
    %6040 = vdwg.mxu0
    %6041 = vmatprep.subr.bf16.mxu0 %v3942
    %6042 = vmatpush1.bf16.msra.mxu0 %v3941
    %6043 = vmatprep.subr.bf16.mxu0 %v3930
    %6044 = vmatpush1.bf16.msra.mxu0 %v3929
    %6045 = vmatprep.subr.bf16.mxu0 %v3918
    %6046 = vmatpush1.bf16.msra.mxu0 %v3917
    %6047 = vmatprep.subr.bf16.mxu0 %v3906
    %6048 = vmatpush1.bf16.msra.mxu0 %v3905
    %6049 = vmatprep.subr.bf16.mxu0 %v3894
    %6050 = vmatpush1.bf16.msra.mxu0 %v3893
    %6051 = vmatprep.subr.bf16.mxu0 %v3882
    %6052 = vmatpush1.bf16.msra.mxu0 %v3881
    %6053 = vmatprep.subr.bf16.mxu0 %v3870
    %6054 = vmatpush1.bf16.msra.mxu0 %v3869
    %6055 = vmatprep.subr.bf16.mxu0 %v3858
    %6056 = vmatpush1.bf16.msra.mxu0 %v3857
    %6057 = vmatprep.subr.bf16.mxu0 %v4038
    %6058 = vmatpush2.bf16.msra.mxu0 %v4037
    %6059 = vmatprep.subr.bf16.mxu0 %v4026
    %6060 = vmatpush2.bf16.msra.mxu0 %v4025
    %6061 = vmatprep.subr.bf16.mxu0 %v4014
    %6062 = vmatpush2.bf16.msra.mxu0 %v4013
    %6063 = vmatprep.subr.bf16.mxu0 %v4002
    %6064 = vmatpush2.bf16.msra.mxu0 %v4001
    %6065 = vmatprep.subr.bf16.mxu0 %v3990
    %6066 = vmatpush2.bf16.msra.mxu0 %v3989
    %6067 = vmatprep.subr.bf16.mxu0 %v3978
    %6068 = vmatpush2.bf16.msra.mxu0 %v3977
    %6069 = vmatprep.subr.bf16.mxu0 %v3966
    %6070 = vmatpush2.bf16.msra.mxu0 %v3965
    %6071 = vmatprep.subr.bf16.mxu0 %v3954
    %6072 = vmatpush2.bf16.msra.mxu0 %v3953
    %6073 = vmatprep.mubr.bf16.mxu0 %v770
    %6074 = vmatmul.mubr.bf16.gmra.mxu0 %v769
    %v6075 = vpop.f32.mrf.mxu0
    %v6076 = vadd.f32 0.0, %v6075
    %v6077 = vpop.f32.mrf.mxu0
    %v6078 = vadd.f32 0.0, %v6077
    %v6079 = vpop.f32.mrf.mxu0
    %v6080 = vpop.f32.mrf.mxu0
    %6081 = vdwg.mxu0
    %6082 = vmatprep.subr.bf16.mxu0 %v4134
    %6083 = vmatpush1.bf16.msra.mxu0 %v4133
    %6084 = vmatprep.subr.bf16.mxu0 %v4122
    %6085 = vmatpush1.bf16.msra.mxu0 %v4121
    %6086 = vmatprep.subr.bf16.mxu0 %v4110
    %6087 = vmatpush1.bf16.msra.mxu0 %v4109
    %6088 = vmatprep.subr.bf16.mxu0 %v4098
    %6089 = vmatpush1.bf16.msra.mxu0 %v4097
    %6090 = vmatprep.subr.bf16.mxu0 %v4086
    %6091 = vmatpush1.bf16.msra.mxu0 %v4085
    %6092 = vmatprep.subr.bf16.mxu0 %v4074
    %6093 = vmatpush1.bf16.msra.mxu0 %v4073
    %6094 = vmatprep.subr.bf16.mxu0 %v4062
    %6095 = vmatpush1.bf16.msra.mxu0 %v4061
    %6096 = vmatprep.subr.bf16.mxu0 %v4050
    %6097 = vmatpush1.bf16.msra.mxu0 %v4049
    %6098 = vmatprep.subr.bf16.mxu0 %v4230
    %6099 = vmatpush2.bf16.msra.mxu0 %v4229
    %6100 = vmatprep.subr.bf16.mxu0 %v4218
    %6101 = vmatpush2.bf16.msra.mxu0 %v4217
    %6102 = vmatprep.subr.bf16.mxu0 %v4206
    %6103 = vmatpush2.bf16.msra.mxu0 %v4205
    %6104 = vmatprep.subr.bf16.mxu0 %v4194
    %6105 = vmatpush2.bf16.msra.mxu0 %v4193
    %6106 = vmatprep.subr.bf16.mxu0 %v4182
    %6107 = vmatpush2.bf16.msra.mxu0 %v4181
    %6108 = vmatprep.subr.bf16.mxu0 %v4170
    %6109 = vmatpush2.bf16.msra.mxu0 %v4169
    %6110 = vmatprep.subr.bf16.mxu0 %v4158
    %6111 = vmatpush2.bf16.msra.mxu0 %v4157
    %6112 = vmatprep.subr.bf16.mxu0 %v4146
    %6113 = vmatpush2.bf16.msra.mxu0 %v4145
    %6114 = vmatprep.mubr.bf16.mxu0 %v772
    %6115 = vmatmul.mubr.bf16.gmra.mxu0 %v771
    %v6116 = vpop.f32.mrf.mxu0
    %v6117 = vadd.f32 %v6076, %v6116
    %v6118 = vpop.f32.mrf.mxu0
    %v6119 = vadd.f32 %v6078, %v6118
    %v6120 = vpop.f32.mrf.mxu0
    %v6121 = vpop.f32.mrf.mxu0
    %6122 = vdwg.mxu0
    %6123 = vmatprep.subr.bf16.mxu0 %v4326
    %6124 = vmatpush1.bf16.msra.mxu0 %v4325
    %6125 = vmatprep.subr.bf16.mxu0 %v4314
    %6126 = vmatpush1.bf16.msra.mxu0 %v4313
    %6127 = vmatprep.subr.bf16.mxu0 %v4302
    %6128 = vmatpush1.bf16.msra.mxu0 %v4301
    %6129 = vmatprep.subr.bf16.mxu0 %v4290
    %6130 = vmatpush1.bf16.msra.mxu0 %v4289
    %6131 = vmatprep.subr.bf16.mxu0 %v4278
    %6132 = vmatpush1.bf16.msra.mxu0 %v4277
    %6133 = vmatprep.subr.bf16.mxu0 %v4266
    %6134 = vmatpush1.bf16.msra.mxu0 %v4265
    %6135 = vmatprep.subr.bf16.mxu0 %v4254
    %6136 = vmatpush1.bf16.msra.mxu0 %v4253
    %6137 = vmatprep.subr.bf16.mxu0 %v4242
    %6138 = vmatpush1.bf16.msra.mxu0 %v4241
    %6139 = vmatprep.subr.bf16.mxu0 %v4422
    %6140 = vmatpush2.bf16.msra.mxu0 %v4421
    %6141 = vmatprep.subr.bf16.mxu0 %v4410
    %6142 = vmatpush2.bf16.msra.mxu0 %v4409
    %6143 = vmatprep.subr.bf16.mxu0 %v4398
    %6144 = vmatpush2.bf16.msra.mxu0 %v4397
    %6145 = vmatprep.subr.bf16.mxu0 %v4386
    %6146 = vmatpush2.bf16.msra.mxu0 %v4385
    %6147 = vmatprep.subr.bf16.mxu0 %v4374
    %6148 = vmatpush2.bf16.msra.mxu0 %v4373
    %6149 = vmatprep.subr.bf16.mxu0 %v4362
    %6150 = vmatpush2.bf16.msra.mxu0 %v4361
    %6151 = vmatprep.subr.bf16.mxu0 %v4350
    %6152 = vmatpush2.bf16.msra.mxu0 %v4349
    %6153 = vmatprep.subr.bf16.mxu0 %v4338
    %6154 = vmatpush2.bf16.msra.mxu0 %v4337
    %6155 = vmatprep.mubr.bf16.mxu0 %v774
    %6156 = vmatmul.mubr.bf16.gmra.mxu0 %v773
    %v6157 = vpop.f32.mrf.mxu0
    %v6158 = vadd.f32 %v6117, %v6157
    %v6159 = vpop.f32.mrf.mxu0
    %v6160 = vadd.f32 %v6119, %v6159
    %v6161 = vpop.f32.mrf.mxu0
    %v6162 = vpop.f32.mrf.mxu0
    %6163 = vdwg.mxu0
    %6164 = vmatprep.subr.bf16.mxu0 %v4518
    %6165 = vmatpush1.bf16.msra.mxu0 %v4517
    %6166 = vmatprep.subr.bf16.mxu0 %v4506
    %6167 = vmatpush1.bf16.msra.mxu0 %v4505
    %6168 = vmatprep.subr.bf16.mxu0 %v4494
    %6169 = vmatpush1.bf16.msra.mxu0 %v4493
    %6170 = vmatprep.subr.bf16.mxu0 %v4482
    %6171 = vmatpush1.bf16.msra.mxu0 %v4481
    %6172 = vmatprep.subr.bf16.mxu0 %v4470
    %6173 = vmatpush1.bf16.msra.mxu0 %v4469
    %6174 = vmatprep.subr.bf16.mxu0 %v4458
    %6175 = vmatpush1.bf16.msra.mxu0 %v4457
    %6176 = vmatprep.subr.bf16.mxu0 %v4446
    %6177 = vmatpush1.bf16.msra.mxu0 %v4445
    %6178 = vmatprep.subr.bf16.mxu0 %v4434
    %6179 = vmatpush1.bf16.msra.mxu0 %v4433
    %6180 = vmatprep.subr.bf16.mxu0 %v4614
    %6181 = vmatpush2.bf16.msra.mxu0 %v4613
    %6182 = vmatprep.subr.bf16.mxu0 %v4602
    %6183 = vmatpush2.bf16.msra.mxu0 %v4601
    %6184 = vmatprep.subr.bf16.mxu0 %v4590
    %6185 = vmatpush2.bf16.msra.mxu0 %v4589
    %6186 = vmatprep.subr.bf16.mxu0 %v4578
    %6187 = vmatpush2.bf16.msra.mxu0 %v4577
    %6188 = vmatprep.subr.bf16.mxu0 %v4566
    %6189 = vmatpush2.bf16.msra.mxu0 %v4565
    %6190 = vmatprep.subr.bf16.mxu0 %v4554
    %6191 = vmatpush2.bf16.msra.mxu0 %v4553
    %6192 = vmatprep.subr.bf16.mxu0 %v4542
    %6193 = vmatpush2.bf16.msra.mxu0 %v4541
    %6194 = vmatprep.subr.bf16.mxu0 %v4530
    %6195 = vmatpush2.bf16.msra.mxu0 %v4529
    %6196 = vmatprep.mubr.bf16.mxu0 %v776
    %6197 = vmatmul.mubr.bf16.gmra.mxu0 %v775
    %v6198 = vpop.f32.mrf.mxu0
    %v6199 = vadd.f32 %v6158, %v6198
    %v6200 = vpop.f32.mrf.mxu0
    %v6201 = vadd.f32 %v6160, %v6200
    %v6202 = vpop.f32.mrf.mxu0
    %v6203 = vpop.f32.mrf.mxu0
    %6204 = vdwg.mxu0
    %6205 = vmatprep.subr.bf16.mxu0 %v3944
    %6206 = vmatpush1.bf16.msra.mxu0 %v3943
    %6207 = vmatprep.subr.bf16.mxu0 %v3932
    %6208 = vmatpush1.bf16.msra.mxu0 %v3931
    %6209 = vmatprep.subr.bf16.mxu0 %v3920
    %6210 = vmatpush1.bf16.msra.mxu0 %v3919
    %6211 = vmatprep.subr.bf16.mxu0 %v3908
    %6212 = vmatpush1.bf16.msra.mxu0 %v3907
    %6213 = vmatprep.subr.bf16.mxu0 %v3896
    %6214 = vmatpush1.bf16.msra.mxu0 %v3895
    %6215 = vmatprep.subr.bf16.mxu0 %v3884
    %6216 = vmatpush1.bf16.msra.mxu0 %v3883
    %6217 = vmatprep.subr.bf16.mxu0 %v3872
    %6218 = vmatpush1.bf16.msra.mxu0 %v3871
    %6219 = vmatprep.subr.bf16.mxu0 %v3860
    %6220 = vmatpush1.bf16.msra.mxu0 %v3859
    %6221 = vmatprep.subr.bf16.mxu0 %v4040
    %6222 = vmatpush2.bf16.msra.mxu0 %v4039
    %6223 = vmatprep.subr.bf16.mxu0 %v4028
    %6224 = vmatpush2.bf16.msra.mxu0 %v4027
    %6225 = vmatprep.subr.bf16.mxu0 %v4016
    %6226 = vmatpush2.bf16.msra.mxu0 %v4015
    %6227 = vmatprep.subr.bf16.mxu0 %v4004
    %6228 = vmatpush2.bf16.msra.mxu0 %v4003
    %6229 = vmatprep.subr.bf16.mxu0 %v3992
    %6230 = vmatpush2.bf16.msra.mxu0 %v3991
    %6231 = vmatprep.subr.bf16.mxu0 %v3980
    %6232 = vmatpush2.bf16.msra.mxu0 %v3979
    %6233 = vmatprep.subr.bf16.mxu0 %v3968
    %6234 = vmatpush2.bf16.msra.mxu0 %v3967
    %6235 = vmatprep.subr.bf16.mxu0 %v3956
    %6236 = vmatpush2.bf16.msra.mxu0 %v3955
    %6237 = vmatprep.mubr.bf16.mxu0 %v770
    %6238 = vmatmul.mubr.bf16.gmra.mxu0 %v769
    %v6239 = vpop.f32.mrf.mxu0
    %v6240 = vadd.f32 0.0, %v6239
    %v6241 = vpop.f32.mrf.mxu0
    %v6242 = vadd.f32 0.0, %v6241
    %v6243 = vpop.f32.mrf.mxu0
    %v6244 = vpop.f32.mrf.mxu0
    %6245 = vdwg.mxu0
    %6246 = vmatprep.subr.bf16.mxu0 %v4136
    %6247 = vmatpush1.bf16.msra.mxu0 %v4135
    %6248 = vmatprep.subr.bf16.mxu0 %v4124
    %6249 = vmatpush1.bf16.msra.mxu0 %v4123
    %6250 = vmatprep.subr.bf16.mxu0 %v4112
    %6251 = vmatpush1.bf16.msra.mxu0 %v4111
    %6252 = vmatprep.subr.bf16.mxu0 %v4100
    %6253 = vmatpush1.bf16.msra.mxu0 %v4099
    %6254 = vmatprep.subr.bf16.mxu0 %v4088
    %6255 = vmatpush1.bf16.msra.mxu0 %v4087
    %6256 = vmatprep.subr.bf16.mxu0 %v4076
    %6257 = vmatpush1.bf16.msra.mxu0 %v4075
    %6258 = vmatprep.subr.bf16.mxu0 %v4064
    %6259 = vmatpush1.bf16.msra.mxu0 %v4063
    %6260 = vmatprep.subr.bf16.mxu0 %v4052
    %6261 = vmatpush1.bf16.msra.mxu0 %v4051
    %6262 = vmatprep.subr.bf16.mxu0 %v4232
    %6263 = vmatpush2.bf16.msra.mxu0 %v4231
    %6264 = vmatprep.subr.bf16.mxu0 %v4220
    %6265 = vmatpush2.bf16.msra.mxu0 %v4219
    %6266 = vmatprep.subr.bf16.mxu0 %v4208
    %6267 = vmatpush2.bf16.msra.mxu0 %v4207
    %6268 = vmatprep.subr.bf16.mxu0 %v4196
    %6269 = vmatpush2.bf16.msra.mxu0 %v4195
    %6270 = vmatprep.subr.bf16.mxu0 %v4184
    %6271 = vmatpush2.bf16.msra.mxu0 %v4183
    %6272 = vmatprep.subr.bf16.mxu0 %v4172
    %6273 = vmatpush2.bf16.msra.mxu0 %v4171
    %6274 = vmatprep.subr.bf16.mxu0 %v4160
    %6275 = vmatpush2.bf16.msra.mxu0 %v4159
    %6276 = vmatprep.subr.bf16.mxu0 %v4148
    %6277 = vmatpush2.bf16.msra.mxu0 %v4147
    %6278 = vmatprep.mubr.bf16.mxu0 %v772
    %6279 = vmatmul.mubr.bf16.gmra.mxu0 %v771
    %v6280 = vpop.f32.mrf.mxu0
    %v6281 = vadd.f32 %v6240, %v6280
    %v6282 = vpop.f32.mrf.mxu0
    %v6283 = vadd.f32 %v6242, %v6282
    %v6284 = vpop.f32.mrf.mxu0
    %v6285 = vpop.f32.mrf.mxu0
    %6286 = vdwg.mxu0
    %6287 = vmatprep.subr.bf16.mxu0 %v4328
    %6288 = vmatpush1.bf16.msra.mxu0 %v4327
    %6289 = vmatprep.subr.bf16.mxu0 %v4316
    %6290 = vmatpush1.bf16.msra.mxu0 %v4315
    %6291 = vmatprep.subr.bf16.mxu0 %v4304
    %6292 = vmatpush1.bf16.msra.mxu0 %v4303
    %6293 = vmatprep.subr.bf16.mxu0 %v4292
    %6294 = vmatpush1.bf16.msra.mxu0 %v4291
    %6295 = vmatprep.subr.bf16.mxu0 %v4280
    %6296 = vmatpush1.bf16.msra.mxu0 %v4279
    %6297 = vmatprep.subr.bf16.mxu0 %v4268
    %6298 = vmatpush1.bf16.msra.mxu0 %v4267
    %6299 = vmatprep.subr.bf16.mxu0 %v4256
    %6300 = vmatpush1.bf16.msra.mxu0 %v4255
    %6301 = vmatprep.subr.bf16.mxu0 %v4244
    %6302 = vmatpush1.bf16.msra.mxu0 %v4243
    %6303 = vmatprep.subr.bf16.mxu0 %v4424
    %6304 = vmatpush2.bf16.msra.mxu0 %v4423
    %6305 = vmatprep.subr.bf16.mxu0 %v4412
    %6306 = vmatpush2.bf16.msra.mxu0 %v4411
    %6307 = vmatprep.subr.bf16.mxu0 %v4400
    %6308 = vmatpush2.bf16.msra.mxu0 %v4399
    %6309 = vmatprep.subr.bf16.mxu0 %v4388
    %6310 = vmatpush2.bf16.msra.mxu0 %v4387
    %6311 = vmatprep.subr.bf16.mxu0 %v4376
    %6312 = vmatpush2.bf16.msra.mxu0 %v4375
    %6313 = vmatprep.subr.bf16.mxu0 %v4364
    %6314 = vmatpush2.bf16.msra.mxu0 %v4363
    %6315 = vmatprep.subr.bf16.mxu0 %v4352
    %6316 = vmatpush2.bf16.msra.mxu0 %v4351
    %6317 = vmatprep.subr.bf16.mxu0 %v4340
    %6318 = vmatpush2.bf16.msra.mxu0 %v4339
    %6319 = vmatprep.mubr.bf16.mxu0 %v774
    %6320 = vmatmul.mubr.bf16.gmra.mxu0 %v773
    %v6321 = vpop.f32.mrf.mxu0
    %v6322 = vadd.f32 %v6281, %v6321
    %v6323 = vpop.f32.mrf.mxu0
    %v6324 = vadd.f32 %v6283, %v6323
    %v6325 = vpop.f32.mrf.mxu0
    %v6326 = vpop.f32.mrf.mxu0
    %6327 = vdwg.mxu0
    %6328 = vmatprep.subr.bf16.mxu0 %v4520
    %6329 = vmatpush1.bf16.msra.mxu0 %v4519
    %6330 = vmatprep.subr.bf16.mxu0 %v4508
    %6331 = vmatpush1.bf16.msra.mxu0 %v4507
    %6332 = vmatprep.subr.bf16.mxu0 %v4496
    %6333 = vmatpush1.bf16.msra.mxu0 %v4495
    %6334 = vmatprep.subr.bf16.mxu0 %v4484
    %6335 = vmatpush1.bf16.msra.mxu0 %v4483
    %6336 = vmatprep.subr.bf16.mxu0 %v4472
    %6337 = vmatpush1.bf16.msra.mxu0 %v4471
    %6338 = vmatprep.subr.bf16.mxu0 %v4460
    %6339 = vmatpush1.bf16.msra.mxu0 %v4459
    %6340 = vmatprep.subr.bf16.mxu0 %v4448
    %6341 = vmatpush1.bf16.msra.mxu0 %v4447
    %6342 = vmatprep.subr.bf16.mxu0 %v4436
    %6343 = vmatpush1.bf16.msra.mxu0 %v4435
    %6344 = vmatprep.subr.bf16.mxu0 %v4616
    %6345 = vmatpush2.bf16.msra.mxu0 %v4615
    %6346 = vmatprep.subr.bf16.mxu0 %v4604
    %6347 = vmatpush2.bf16.msra.mxu0 %v4603
    %6348 = vmatprep.subr.bf16.mxu0 %v4592
    %6349 = vmatpush2.bf16.msra.mxu0 %v4591
    %6350 = vmatprep.subr.bf16.mxu0 %v4580
    %6351 = vmatpush2.bf16.msra.mxu0 %v4579
    %6352 = vmatprep.subr.bf16.mxu0 %v4568
    %6353 = vmatpush2.bf16.msra.mxu0 %v4567
    %6354 = vmatprep.subr.bf16.mxu0 %v4556
    %6355 = vmatpush2.bf16.msra.mxu0 %v4555
    %6356 = vmatprep.subr.bf16.mxu0 %v4544
    %6357 = vmatpush2.bf16.msra.mxu0 %v4543
    %6358 = vmatprep.subr.bf16.mxu0 %v4532
    %6359 = vmatpush2.bf16.msra.mxu0 %v4531
    %6360 = vmatprep.mubr.bf16.mxu0 %v776
    %6361 = vmatmul.mubr.bf16.gmra.mxu0 %v775
    %v6362 = vpop.f32.mrf.mxu0
    %v6363 = vadd.f32 %v6322, %v6362
    %v6364 = vpop.f32.mrf.mxu0
    %v6365 = vadd.f32 %v6324, %v6364
    %v6366 = vpop.f32.mrf.mxu0
    %v6367 = vpop.f32.mrf.mxu0
    %6368 = vdwg.mxu0
    %v6369 = vrot.slane %v5543, 4
    %v6370 = vadd.f32 %v5543, %v6369
    %v6371 = vrot.slane %v6370, 2
    %v6372 = vadd.f32 %v6370, %v6371
    %v6373 = vrot.slane %v6372, 1
    %v6374 = vadd.f32 %v6372, %v6373
    %v6375 = vrot.slane %v5545, 4
    %v6376 = vadd.f32 %v5545, %v6375
    %v6377 = vrot.slane %v6376, 2
    %v6378 = vadd.f32 %v6376, %v6377
    %v6379 = vrot.slane %v6378, 1
    %v6380 = vadd.f32 %v6378, %v6379
    %v6381 = vrot.slane %v5707, 4
    %v6382 = vadd.f32 %v5707, %v6381
    %v6383 = vrot.slane %v6382, 2
    %v6384 = vadd.f32 %v6382, %v6383
    %v6385 = vrot.slane %v6384, 1
    %v6386 = vadd.f32 %v6384, %v6385
    %v6387 = vrot.slane %v5709, 4
    %v6388 = vadd.f32 %v5709, %v6387
    %v6389 = vrot.slane %v6388, 2
    %v6390 = vadd.f32 %v6388, %v6389
    %v6391 = vrot.slane %v6390, 1
    %v6392 = vadd.f32 %v6390, %v6391
    %v6393 = vrot.slane %v5871, 4
    %v6394 = vadd.f32 %v5871, %v6393
    %v6395 = vrot.slane %v6394, 2
    %v6396 = vadd.f32 %v6394, %v6395
    %v6397 = vrot.slane %v6396, 1
    %v6398 = vadd.f32 %v6396, %v6397
    %v6399 = vrot.slane %v5873, 4
    %v6400 = vadd.f32 %v5873, %v6399
    %v6401 = vrot.slane %v6400, 2
    %v6402 = vadd.f32 %v6400, %v6401
    %v6403 = vrot.slane %v6402, 1
    %v6404 = vadd.f32 %v6402, %v6403
    %v6405 = vrot.slane %v6035, 4
    %v6406 = vadd.f32 %v6035, %v6405
    %v6407 = vrot.slane %v6406, 2
    %v6408 = vadd.f32 %v6406, %v6407
    %v6409 = vrot.slane %v6408, 1
    %v6410 = vadd.f32 %v6408, %v6409
    %v6411 = vrot.slane %v6037, 4
    %v6412 = vadd.f32 %v6037, %v6411
    %v6413 = vrot.slane %v6412, 2
    %v6414 = vadd.f32 %v6412, %v6413
    %v6415 = vrot.slane %v6414, 1
    %v6416 = vadd.f32 %v6414, %v6415
    %v6417 = vrot.slane %v6199, 4
    %v6418 = vadd.f32 %v6199, %v6417
    %v6419 = vrot.slane %v6418, 2
    %v6420 = vadd.f32 %v6418, %v6419
    %v6421 = vrot.slane %v6420, 1
    %v6422 = vadd.f32 %v6420, %v6421
    %v6423 = vrot.slane %v6201, 4
    %v6424 = vadd.f32 %v6201, %v6423
    %v6425 = vrot.slane %v6424, 2
    %v6426 = vadd.f32 %v6424, %v6425
    %v6427 = vrot.slane %v6426, 1
    %v6428 = vadd.f32 %v6426, %v6427
    %v6429 = vrot.slane %v6363, 4
    %v6430 = vadd.f32 %v6363, %v6429
    %v6431 = vrot.slane %v6430, 2
    %v6432 = vadd.f32 %v6430, %v6431
    %v6433 = vrot.slane %v6432, 1
    %v6434 = vadd.f32 %v6432, %v6433
    %v6435 = vrot.slane %v6365, 4
    %v6436 = vadd.f32 %v6365, %v6435
    %v6437 = vrot.slane %v6436, 2
    %v6438 = vadd.f32 %v6436, %v6437
    %v6439 = vrot.slane %v6438, 1
    %v6440 = vadd.f32 %v6438, %v6439
    %v6441 = vmul.f32 %v6374, %v656
    %v6442 = vmul.f32 %v6380, %v656
    %v6443 = vmul.f32 %v6386, %v656
    %v6444 = vmul.f32 %v6392, %v656
    %v6445 = vmul.f32 %v6398, %v656
    %v6446 = vmul.f32 %v6404, %v656
    %v6447 = vmul.f32 %v6410, %v656
    %v6448 = vmul.f32 %v6416, %v656
    %v6449 = vmul.f32 %v6422, %v656
    %v6450 = vmul.f32 %v6428, %v656
    %v6451 = vmul.f32 %v6434, %v656
    %v6452 = vmul.f32 %v6440, %v656
    %v6453 = vsub.f32 %v5543, %v6441
    %v6454 = vsub.f32 %v5545, %v6442
    %v6455 = vsub.f32 %v5707, %v6443
    %v6456 = vsub.f32 %v5709, %v6444
    %v6457 = vsub.f32 %v5871, %v6445
    %v6458 = vsub.f32 %v5873, %v6446
    %v6459 = vsub.f32 %v6035, %v6447
    %v6460 = vsub.f32 %v6037, %v6448
    %v6461 = vsub.f32 %v6199, %v6449
    %v6462 = vsub.f32 %v6201, %v6450
    %v6463 = vsub.f32 %v6363, %v6451
    %v6464 = vsub.f32 %v6365, %v6452
    %v6465 = vmul.f32 %v6453, %v6453
    %v6466 = vmul.f32 %v6454, %v6454
    %v6467 = vmul.f32 %v6455, %v6455
    %v6468 = vmul.f32 %v6456, %v6456
    %v6469 = vmul.f32 %v6457, %v6457
    %v6470 = vmul.f32 %v6458, %v6458
    %v6471 = vmul.f32 %v6459, %v6459
    %v6472 = vmul.f32 %v6460, %v6460
    %v6473 = vmul.f32 %v6461, %v6461
    %v6474 = vmul.f32 %v6462, %v6462
    %v6475 = vmul.f32 %v6463, %v6463
    %v6476 = vmul.f32 %v6464, %v6464
    %v6477 = vrot.slane %v6465, 4
    %v6478 = vadd.f32 %v6465, %v6477
    %v6479 = vrot.slane %v6478, 2
    %v6480 = vadd.f32 %v6478, %v6479
    %v6481 = vrot.slane %v6480, 1
    %v6482 = vadd.f32 %v6480, %v6481
    %v6483 = vrot.slane %v6466, 4
    %v6484 = vadd.f32 %v6466, %v6483
    %v6485 = vrot.slane %v6484, 2
    %v6486 = vadd.f32 %v6484, %v6485
    %v6487 = vrot.slane %v6486, 1
    %v6488 = vadd.f32 %v6486, %v6487
    %v6489 = vrot.slane %v6467, 4
    %v6490 = vadd.f32 %v6467, %v6489
    %v6491 = vrot.slane %v6490, 2
    %v6492 = vadd.f32 %v6490, %v6491
    %v6493 = vrot.slane %v6492, 1
    %v6494 = vadd.f32 %v6492, %v6493
    %v6495 = vrot.slane %v6468, 4
    %v6496 = vadd.f32 %v6468, %v6495
    %v6497 = vrot.slane %v6496, 2
    %v6498 = vadd.f32 %v6496, %v6497
    %v6499 = vrot.slane %v6498, 1
    %v6500 = vadd.f32 %v6498, %v6499
    %v6501 = vrot.slane %v6469, 4
    %v6502 = vadd.f32 %v6469, %v6501
    %v6503 = vrot.slane %v6502, 2
    %v6504 = vadd.f32 %v6502, %v6503
    %v6505 = vrot.slane %v6504, 1
    %v6506 = vadd.f32 %v6504, %v6505
    %v6507 = vrot.slane %v6470, 4
    %v6508 = vadd.f32 %v6470, %v6507
    %v6509 = vrot.slane %v6508, 2
    %v6510 = vadd.f32 %v6508, %v6509
    %v6511 = vrot.slane %v6510, 1
    %v6512 = vadd.f32 %v6510, %v6511
    %v6513 = vrot.slane %v6471, 4
    %v6514 = vadd.f32 %v6471, %v6513
    %v6515 = vrot.slane %v6514, 2
    %v6516 = vadd.f32 %v6514, %v6515
    %v6517 = vrot.slane %v6516, 1
    %v6518 = vadd.f32 %v6516, %v6517
    %v6519 = vrot.slane %v6472, 4
    %v6520 = vadd.f32 %v6472, %v6519
    %v6521 = vrot.slane %v6520, 2
    %v6522 = vadd.f32 %v6520, %v6521
    %v6523 = vrot.slane %v6522, 1
    %v6524 = vadd.f32 %v6522, %v6523
    %v6525 = vrot.slane %v6473, 4
    %v6526 = vadd.f32 %v6473, %v6525
    %v6527 = vrot.slane %v6526, 2
    %v6528 = vadd.f32 %v6526, %v6527
    %v6529 = vrot.slane %v6528, 1
    %v6530 = vadd.f32 %v6528, %v6529
    %v6531 = vrot.slane %v6474, 4
    %v6532 = vadd.f32 %v6474, %v6531
    %v6533 = vrot.slane %v6532, 2
    %v6534 = vadd.f32 %v6532, %v6533
    %v6535 = vrot.slane %v6534, 1
    %v6536 = vadd.f32 %v6534, %v6535
    %v6537 = vrot.slane %v6475, 4
    %v6538 = vadd.f32 %v6475, %v6537
    %v6539 = vrot.slane %v6538, 2
    %v6540 = vadd.f32 %v6538, %v6539
    %v6541 = vrot.slane %v6540, 1
    %v6542 = vadd.f32 %v6540, %v6541
    %v6543 = vrot.slane %v6476, 4
    %v6544 = vadd.f32 %v6476, %v6543
    %v6545 = vrot.slane %v6544, 2
    %v6546 = vadd.f32 %v6544, %v6545
    %v6547 = vrot.slane %v6546, 1
    %v6548 = vadd.f32 %v6546, %v6547
    %v6549 = vmul.f32 %v6482, %v656
    %v6550 = vmul.f32 %v6488, %v656
    %v6551 = vmul.f32 %v6494, %v656
    %v6552 = vmul.f32 %v6500, %v656
    %v6553 = vmul.f32 %v6506, %v656
    %v6554 = vmul.f32 %v6512, %v656
    %v6555 = vmul.f32 %v6518, %v656
    %v6556 = vmul.f32 %v6524, %v656
    %v6557 = vmul.f32 %v6530, %v656
    %v6558 = vmul.f32 %v6536, %v656
    %v6559 = vmul.f32 %v6542, %v656
    %v6560 = vmul.f32 %v6548, %v656
    %v6561 = vadd.f32 %v6549, 0.99
    %v6562 = vadd.f32 %v6550, 0.99
    %v6563 = vadd.f32 %v6551, 0.99
    %v6564 = vadd.f32 %v6552, 0.99
    %v6565 = vadd.f32 %v6553, 0.99
    %v6566 = vadd.f32 %v6554, 0.99
    %v6567 = vadd.f32 %v6555, 0.99
    %v6568 = vadd.f32 %v6556, 0.99
    %v6569 = vadd.f32 %v6557, 0.99
    %v6570 = vadd.f32 %v6558, 0.99
    %v6571 = vadd.f32 %v6559, 0.99
    %v6572 = vadd.f32 %v6560, 0.99
    %v6573 = vrsqrt.pop %v6561
    %v6574 = vrsqrt.pop %v6562
    %v6575 = vrsqrt.pop %v6563
    %v6576 = vrsqrt.pop %v6564
    %v6577 = vrsqrt.pop %v6565
    %v6578 = vrsqrt.pop %v6566
    %v6579 = vrsqrt.pop %v6567
    %v6580 = vrsqrt.pop %v6568
    %v6581 = vrsqrt.pop %v6569
    %v6582 = vrsqrt.pop %v6570
    %v6583 = vrsqrt.pop %v6571
    %v6584 = vrsqrt.pop %v6572
    %v6585 = vmul.f32 %v6453, %v6573
    %v6586 = vmul.f32 %v6454, %v6574
    %v6587 = vmul.f32 %v6455, %v6575
    %v6588 = vmul.f32 %v6456, %v6576
    %v6589 = vmul.f32 %v6457, %v6577
    %v6590 = vmul.f32 %v6458, %v6578
    %v6591 = vmul.f32 %v6459, %v6579
    %v6592 = vmul.f32 %v6460, %v6580
    %v6593 = vmul.f32 %v6461, %v6581
    %v6594 = vmul.f32 %v6462, %v6582
    %v6595 = vmul.f32 %v6463, %v6583
    %v6596 = vmul.f32 %v6464, %v6584
    %v6597 = vxor.u32 %v6585, 2147483648
    %v6598 = vxor.u32 %v6586, 2147483648
    %v6599 = vxor.u32 %v6587, 2147483648
    %v6600 = vxor.u32 %v6588, 2147483648
    %v6601 = vxor.u32 %v6589, 2147483648
    %v6602 = vxor.u32 %v6590, 2147483648
    %v6603 = vxor.u32 %v6591, 2147483648
    %v6604 = vxor.u32 %v6592, 2147483648
    %v6605 = vxor.u32 %v6593, 2147483648
    %v6606 = vxor.u32 %v6594, 2147483648
    %v6607 = vxor.u32 %v6595, 2147483648
    %v6608 = vxor.u32 %v6596, 2147483648
    %v6609 = vmul.f32 %v6597, 1.442695
    %v6610 = vpow.pop %v6609
    %v6611 = vmul.f32 %v6598, 1.442695
    %v6612 = vpow.pop %v6611
    %v6613 = vmul.f32 %v6599, 1.442695
    %v6614 = vpow.pop %v6613
    %v6615 = vmul.f32 %v6600, 1.442695
    %v6616 = vpow.pop %v6615
    %v6617 = vmul.f32 %v6601, 1.442695
    %v6618 = vpow.pop %v6617
    %v6619 = vmul.f32 %v6602, 1.442695
    %v6620 = vpow.pop %v6619
    %v6621 = vmul.f32 %v6603, 1.442695
    %v6622 = vpow.pop %v6621
    %v6623 = vmul.f32 %v6604, 1.442695
    %v6624 = vpow.pop %v6623
    %v6625 = vmul.f32 %v6605, 1.442695
    %v6626 = vpow.pop %v6625
    %v6627 = vmul.f32 %v6606, 1.442695
    %v6628 = vpow.pop %v6627
    %v6629 = vmul.f32 %v6607, 1.442695
    %v6630 = vpow.pop %v6629
    %v6631 = vmul.f32 %v6608, 1.442695
    %v6632 = vpow.pop %v6631
    %v6633 = vadd.f32 %v6610, 1.0
    %v6634 = vadd.f32 %v6612, 1.0
    %v6635 = vadd.f32 %v6614, 1.0
    %v6636 = vadd.f32 %v6616, 1.0
    %v6637 = vadd.f32 %v6618, 1.0
    %v6638 = vadd.f32 %v6620, 1.0
    %v6639 = vadd.f32 %v6622, 1.0
    %v6640 = vadd.f32 %v6624, 1.0
    %v6641 = vadd.f32 %v6626, 1.0
    %v6642 = vadd.f32 %v6628, 1.0
    %v6643 = vadd.f32 %v6630, 1.0
    %v6644 = vadd.f32 %v6632, 1.0
    %v6645 = vrcp.pop %v6633
    %v6646 = vmul.f32 1.0, %v6645
    %v6647 = vrcp.pop %v6634
    %v6648 = vmul.f32 1.0, %v6647
    %v6649 = vrcp.pop %v6635
    %v6650 = vmul.f32 1.0, %v6649
    %v6651 = vrcp.pop %v6636
    %v6652 = vmul.f32 1.0, %v6651
    %v6653 = vrcp.pop %v6637
    %v6654 = vmul.f32 1.0, %v6653
    %v6655 = vrcp.pop %v6638
    %v6656 = vmul.f32 1.0, %v6655
    %v6657 = vrcp.pop %v6639
    %v6658 = vmul.f32 1.0, %v6657
    %v6659 = vrcp.pop %v6640
    %v6660 = vmul.f32 1.0, %v6659
    %v6661 = vrcp.pop %v6641
    %v6662 = vmul.f32 1.0, %v6661
    %v6663 = vrcp.pop %v6642
    %v6664 = vmul.f32 1.0, %v6663
    %v6665 = vrcp.pop %v6643
    %v6666 = vmul.f32 1.0, %v6665
    %v6667 = vrcp.pop %v6644
    %v6668 = vmul.f32 1.0, %v6667
    %v6669 = vld [vmem:[%s3] sm:$0xff]
    %v6670 = vld [vmem:[%s3 + $0x8] sm:$0xff]
    %v6671 = vld [vmem:[%s3 + $0x10] sm:$0xff]
    %v6672 = vld [vmem:[%s3 + $0x18] sm:$0xff]
    %v6673 = vld [vmem:[%s3 + $0x20] sm:$0xff]
    %v6674 = vld [vmem:[%s3 + $0x28] sm:$0xff]
    %v6675 = vld [vmem:[%s3 + $0x30] sm:$0xff]
    %v6676 = vld [vmem:[%s3 + $0x38] sm:$0xff]
    %v6677 = vld [vmem:[%s3 + $0x40] sm:$0xff]
    %v6678 = vld [vmem:[%s3 + $0x48] sm:$0xff]
    %v6679 = vld [vmem:[%s3 + $0x50] sm:$0xff]
    %v6680 = vld [vmem:[%s3 + $0x58] sm:$0xff]
    %vm6681 = vcmp.gt.f32.partialorder %v6646, %v6669
    %vm6682 = vcmp.gt.f32.partialorder %v6648, %v6670
    %vm6683 = vcmp.gt.f32.partialorder %v6650, %v6671
    %vm6684 = vcmp.gt.f32.partialorder %v6652, %v6672
    %vm6685 = vcmp.gt.f32.partialorder %v6654, %v6673
    %vm6686 = vcmp.gt.f32.partialorder %v6656, %v6674
    %vm6687 = vcmp.gt.f32.partialorder %v6658, %v6675
    %vm6688 = vcmp.gt.f32.partialorder %v6660, %v6676
    %vm6689 = vcmp.gt.f32.partialorder %v6662, %v6677
    %vm6690 = vcmp.gt.f32.partialorder %v6664, %v6678
    %vm6691 = vcmp.gt.f32.partialorder %v6666, %v6679
    %vm6692 = vcmp.gt.f32.partialorder %v6668, %v6680
    %v6693 = vsel %vm6681, 1.0, 0.0
    %v6694 = vsel %vm6682, 1.0, 0.0
    %v6695 = vsel %vm6683, 1.0, 0.0
    %v6696 = vsel %vm6684, 1.0, 0.0
    %v6697 = vsel %vm6685, 1.0, 0.0
    %v6698 = vsel %vm6686, 1.0, 0.0
    %v6699 = vsel %vm6687, 1.0, 0.0
    %v6700 = vsel %vm6688, 1.0, 0.0
    %v6701 = vsel %vm6689, 1.0, 0.0
    %v6702 = vsel %vm6690, 1.0, 0.0
    %v6703 = vsel %vm6691, 1.0, 0.0
    %v6704 = vsel %vm6692, 1.0, 0.0
    %6705 = vst [vmem:[#allocation8] sm:$0xff] %v6693
    %6706 = vst [vmem:[#allocation8 + $0x8] sm:$0xff] %v6694
    %6707 = vst [vmem:[#allocation8 + $0x10] sm:$0xff] %v6695
    %6708 = vst [vmem:[#allocation8 + $0x18] sm:$0xff] %v6696
    %6709 = vst [vmem:[#allocation8 + $0x20] sm:$0xff] %v6697
    %6710 = vst [vmem:[#allocation8 + $0x28] sm:$0xff] %v6698
    %6711 = vst [vmem:[#allocation8 + $0x30] sm:$0xff] %v6699
    %6712 = vst [vmem:[#allocation8 + $0x38] sm:$0xff] %v6700
    %6713 = vst [vmem:[#allocation8 + $0x40] sm:$0xff] %v6701
    %6714 = vst [vmem:[#allocation8 + $0x48] sm:$0xff] %v6702
    %6715 = vst [vmem:[#allocation8 + $0x50] sm:$0xff] %v6703
    %6716 = vst [vmem:[#allocation8 + $0x58] sm:$0xff] %v6704
    // Predicated region
    $region30: #{generator_forward.1} parent=1 // pred_check
      _
    $region31: #{generator_forward.1} parent=1 // pred_check_branch
      %6718 = sbr.rel (0) target = $region33
    $region32: #{generator_forward.1} parent=1 // pred_region
      %s6720 = ssub.s32 1536, 1536
      %6721 = vsyncadd [#allocation4], %s6720
      %s6723 = sshll.u32 [#allocation8], 4
      %s6724 = int_to_ptr.vmem [resolvable:$true] %s6723
      %6726 = dma.vmem_to_hbm [thread:$0]  %s6724, 1536, %s4, [#allocation4]
    $region33: #{generator_forward.1} parent=1 // pred_fallthru
      _
    // Predicated region
    $region34: #{generator_forward.1} parent=1 // pred_check
      _
    $region35: #{generator_forward.1} parent=1 // pred_check_branch
      %6728 = sbr.rel (0) target = $region37
    $region36: #{generator_forward.1} parent=1 // pred_region
      %6729 = dma.done [#allocation4], 1536
    $region37: #{generator_forward.1} parent=1 // pred_fallthru
      _
    %6730 = vsyncpa [#allocation3], 1
    %6731 = vsyncpa [#allocation6], 1
    %6732 = vsyncpa [#allocation4], 1

</llo_original>
